<compile_context>
chip_gen: v6e
topology: v6e:2x2x1
jax: 0.10.0
libtpu: 0.0.40
codegen_flags: <defaults>
</compile_context>

<pallas_src>
import jax
import jax.numpy as jnp
from jax.experimental import pallas as pl
from jax.experimental.pallas import tpu as pltpu

N, C, H, W = 1, 122, 28, 28      # shapes implied by the module's forward
CP = 128                          # channel dim padded to the 128-lane width
WO = 32                           # W rounded up to a multiple of 8 (sublane tile)
KH = KW = 3
EPS = 1e-5


def fused_kernel(xp_ref, wdw_ref, gamma_ref, beta_ref, w1_ref, o_ref):
    """ReLU + depthwise 3x3 conv + BN (batch stats) + 1x1 conv, one grid point."""
    # ReLU on the zero-padded input (ReLU(0) == 0, so the padding stays zero).
    xp = jnp.maximum(xp_ref[...], 0.0)               # (H+2, WO+2, CP)
    wdw = wdw_ref[...]                               # (KH, KW, CP)

    # Depthwise 3x3 conv as 9 shifted multiply-adds.  Hoist the sublane-axis
    # (W) shifts: only 3 misaligned slices, reused for every kh offset
    # (kh slices are major-dim address offsets, i.e. free).
    xs = [xp[:, kw:kw + WO, :] for kw in range(KW)]  # 3 x (H+2, WO, CP)
    acc = jnp.zeros((H, WO, CP), jnp.float32)
    for kh in range(KH):
        for kw in range(KW):
            acc = acc + xs[kw][kh:kh + H, :, :] * wdw[kh, kw, :]

    # Batch-norm statistics over valid spatial positions only (columns >= W
    # are padding / out-of-window values -> masked out of the reductions).
    col = jax.lax.broadcasted_iota(jnp.int32, (1, WO, 1), 1)
    wmask = jnp.where(col < W, 1.0, 0.0).astype(jnp.float32)
    accm = acc * wmask                                # (H, WO, CP)
    inv_cnt = 1.0 / float(N * H * W)
    s = jnp.sum(accm, axis=(0, 1))[None, :]           # (1, CP)
    ss = jnp.sum(accm * acc, axis=(0, 1))[None, :]    # (1, CP) == sum(acc^2 * mask)
    mean = s * inv_cnt
    var = ss * inv_cnt - mean * mean                  # biased var (training-mode BN)
    scale = gamma_ref[...] * jax.lax.rsqrt(var + EPS)  # (1, CP)  (EUP rsqrt)
    shift = beta_ref[...] - mean * scale               # (1, CP)

    # BN affine + 1x1 conv on the MXU.  WO is a multiple of 8, so the flatten
    # below is layout preserving (no sublane repack before the matmul).
    ymat = accm.reshape(H * WO, CP)
    ybn = ymat * scale + shift                        # lane-broadcast FMA
    o_ref[...] = jnp.dot(ybn, w1_ref[...], preferred_element_type=jnp.float32)


@jax.jit
def forward(x_nchw, w_dw, gamma, beta, w_pw):
    # x_nchw: (N, C, H, W); w_dw: (C, 1, 3, 3); w_pw: (C, C, 1, 1)
    cpad = CP - C
    x = jnp.transpose(x_nchw[0], (1, 2, 0))                        # (H, W, C)
    # Zero pad: 1-pixel conv halo on H/W, W rounded up to WO, channels to CP.
    xp = jnp.pad(x, ((1, 1), (1, WO + 1 - W), (0, cpad)))          # (H+2, WO+2, CP)
    wdw = jnp.pad(jnp.transpose(w_dw[:, 0, :, :], (1, 2, 0)),
                  ((0, 0), (0, 0), (0, cpad)))                     # (KH, KW, CP)
    g = jnp.pad(gamma, (0, cpad))[None, :]                         # (1, CP)
    b = jnp.pad(beta, (0, cpad))[None, :]                          # (1, CP)
    w1 = jnp.pad(jnp.transpose(w_pw[:, :, 0, 0]),
                 ((0, cpad), (0, cpad)))                           # (CP_in, CP_out)

    vmem = pl.BlockSpec(memory_space=pltpu.MemorySpace.VMEM)
    z = pl.pallas_call(
        fused_kernel,
        out_shape=jax.ShapeDtypeStruct((H * WO, CP), jnp.float32),
        in_specs=[vmem, vmem, vmem, vmem, vmem],
        out_specs=vmem,
    )(xp, wdw, g, b, w1)

    out = z.reshape(H, WO, CP)[:, :W, :C]                          # (H, W, C)
    return jnp.transpose(out, (2, 0, 1))[None]                     # (N, C, H, W)


def reference(x_nchw, w_dw, gamma, beta, w_pw):
    """Pure-JAX reference with the same (training-mode) semantics."""
    x = jnp.maximum(x_nchw, 0.0)
    y = jax.lax.conv_general_dilated(
        x, w_dw, window_strides=(1, 1), padding=((1, 1), (1, 1)),
        dimension_numbers=('NCHW', 'OIHW', 'NCHW'), feature_group_count=C)
    mean = jnp.mean(y, axis=(0, 2, 3))
    var = jnp.var(y, axis=(0, 2, 3))
    ybn = (y - mean[None, :, None, None]) * jax.lax.rsqrt(var + EPS)[None, :, None, None]
    ybn = ybn * gamma[None, :, None, None] + beta[None, :, None, None]
    return jax.lax.conv_general_dilated(
        ybn, w_pw, window_strides=(1, 1), padding='VALID',
        dimension_numbers=('NCHW', 'OIHW', 'NCHW'))


if __name__ == "__main__":
    key = jax.random.PRNGKey(0)
    k_x, k_dw, k_pw, k_g, k_b = jax.random.split(key, 5)

    x = jax.random.normal(k_x, (N, C, H, W), jnp.float32)
    w_dw = jax.random.normal(k_dw, (C, 1, KH, KW), jnp.float32) * 0.2   # depthwise weight
    w_pw = jax.random.normal(k_pw, (C, C, 1, 1), jnp.float32) * 0.1     # 1x1 conv weight
    gamma = 1.0 + 0.1 * jax.random.normal(k_g, (C,), jnp.float32)       # BN weight
    beta = 0.1 * jax.random.normal(k_b, (C,), jnp.float32)              # BN bias

    out = jax.block_until_ready(forward(x, w_dw, gamma, beta, w_pw))
    ref = jax.block_until_ready(reference(x, w_dw, gamma, beta, w_pw))

    assert out.shape == (N, C, H, W)
    assert jnp.allclose(out, ref, rtol=1e-4, atol=1e-4), float(jnp.max(jnp.abs(out - ref)))
    print("KERNEL_OK")
</pallas_src>

<mosaic_0001>
module attributes {stable_mosaic.version = 11 : i64} {
  func.func @fused_kernel(%arg0: memref<30x34x128xf32, #tpu.memory_space<vmem>>, %arg1: memref<3x3x128xf32, #tpu.memory_space<vmem>>, %arg2: memref<1x128xf32, #tpu.memory_space<vmem>>, %arg3: memref<1x128xf32, #tpu.memory_space<vmem>>, %arg4: memref<128x128xf32, #tpu.memory_space<vmem>>, %arg5: memref<896x128xf32, #tpu.memory_space<vmem>>) attributes {dimension_semantics = [], scalar_prefetch = 0 : i64, scratch_operands = 0 : i64, tpu.core_type = #tpu.core_type<tc>} {
    %c0 = arith.constant 0 : index
    %c0_0 = arith.constant 0 : index
    %c0_1 = arith.constant 0 : index
    %0 = vector.load %arg0[%c0, %c0_0, %c0_1] : memref<30x34x128xf32, #tpu.memory_space<vmem>>, vector<30x34x128xf32>
    %cst = arith.constant 0.000000e+00 : f32
    %1 = vector.broadcast %cst : f32 to vector<30x34x128xf32>
    %2 = arith.maximumf %0, %1 : vector<30x34x128xf32>
    %c0_2 = arith.constant 0 : index
    %c0_3 = arith.constant 0 : index
    %c0_4 = arith.constant 0 : index
    %3 = vector.load %arg1[%c0_2, %c0_3, %c0_4] : memref<3x3x128xf32, #tpu.memory_space<vmem>>, vector<3x3x128xf32>
    %4 = vector.extract_strided_slice %2 {offsets = [0, 0, 0], sizes = [30, 32, 128], strides = [1, 1, 1]} : vector<30x34x128xf32> to vector<30x32x128xf32>
    %5 = vector.extract_strided_slice %2 {offsets = [0, 1, 0], sizes = [30, 32, 128], strides = [1, 1, 1]} : vector<30x34x128xf32> to vector<30x32x128xf32>
    %6 = vector.extract_strided_slice %2 {offsets = [0, 2, 0], sizes = [30, 32, 128], strides = [1, 1, 1]} : vector<30x34x128xf32> to vector<30x32x128xf32>
    %cst_5 = arith.constant 0.000000e+00 : f32
    %7 = vector.broadcast %cst_5 : f32 to vector<28x32x128xf32>
    %8 = vector.extract_strided_slice %4 {offsets = [0, 0, 0], sizes = [28, 32, 128], strides = [1, 1, 1]} : vector<30x32x128xf32> to vector<28x32x128xf32>
    %9 = vector.extract_strided_slice %3 {offsets = [0, 0, 0], sizes = [1, 1, 128], strides = [1, 1, 1]} : vector<3x3x128xf32> to vector<1x1x128xf32>
    %10 = vector.shape_cast %9 : vector<1x1x128xf32> to vector<128xf32>
    %11 = vector.shape_cast %10 : vector<128xf32> to vector<1x1x128xf32>
    %12 = vector.broadcast %11 : vector<1x1x128xf32> to vector<28x32x128xf32>
    %13 = arith.mulf %8, %12 : vector<28x32x128xf32>
    %14 = arith.addf %7, %13 : vector<28x32x128xf32>
    %15 = vector.extract_strided_slice %5 {offsets = [0, 0, 0], sizes = [28, 32, 128], strides = [1, 1, 1]} : vector<30x32x128xf32> to vector<28x32x128xf32>
    %16 = vector.extract_strided_slice %3 {offsets = [0, 1, 0], sizes = [1, 1, 128], strides = [1, 1, 1]} : vector<3x3x128xf32> to vector<1x1x128xf32>
    %17 = vector.shape_cast %16 : vector<1x1x128xf32> to vector<128xf32>
    %18 = vector.shape_cast %17 : vector<128xf32> to vector<1x1x128xf32>
    %19 = vector.broadcast %18 : vector<1x1x128xf32> to vector<28x32x128xf32>
    %20 = arith.mulf %15, %19 : vector<28x32x128xf32>
    %21 = arith.addf %14, %20 : vector<28x32x128xf32>
    %22 = vector.extract_strided_slice %6 {offsets = [0, 0, 0], sizes = [28, 32, 128], strides = [1, 1, 1]} : vector<30x32x128xf32> to vector<28x32x128xf32>
    %23 = vector.extract_strided_slice %3 {offsets = [0, 2, 0], sizes = [1, 1, 128], strides = [1, 1, 1]} : vector<3x3x128xf32> to vector<1x1x128xf32>
    %24 = vector.shape_cast %23 : vector<1x1x128xf32> to vector<128xf32>
    %25 = vector.shape_cast %24 : vector<128xf32> to vector<1x1x128xf32>
    %26 = vector.broadcast %25 : vector<1x1x128xf32> to vector<28x32x128xf32>
    %27 = arith.mulf %22, %26 : vector<28x32x128xf32>
    %28 = arith.addf %21, %27 : vector<28x32x128xf32>
    %29 = vector.extract_strided_slice %4 {offsets = [1, 0, 0], sizes = [28, 32, 128], strides = [1, 1, 1]} : vector<30x32x128xf32> to vector<28x32x128xf32>
    %30 = vector.extract_strided_slice %3 {offsets = [1, 0, 0], sizes = [1, 1, 128], strides = [1, 1, 1]} : vector<3x3x128xf32> to vector<1x1x128xf32>
    %31 = vector.shape_cast %30 : vector<1x1x128xf32> to vector<128xf32>
    %32 = vector.shape_cast %31 : vector<128xf32> to vector<1x1x128xf32>
    %33 = vector.broadcast %32 : vector<1x1x128xf32> to vector<28x32x128xf32>
    %34 = arith.mulf %29, %33 : vector<28x32x128xf32>
    %35 = arith.addf %28, %34 : vector<28x32x128xf32>
    %36 = vector.extract_strided_slice %5 {offsets = [1, 0, 0], sizes = [28, 32, 128], strides = [1, 1, 1]} : vector<30x32x128xf32> to vector<28x32x128xf32>
    %37 = vector.extract_strided_slice %3 {offsets = [1, 1, 0], sizes = [1, 1, 128], strides = [1, 1, 1]} : vector<3x3x128xf32> to vector<1x1x128xf32>
    %38 = vector.shape_cast %37 : vector<1x1x128xf32> to vector<128xf32>
    %39 = vector.shape_cast %38 : vector<128xf32> to vector<1x1x128xf32>
    %40 = vector.broadcast %39 : vector<1x1x128xf32> to vector<28x32x128xf32>
    %41 = arith.mulf %36, %40 : vector<28x32x128xf32>
    %42 = arith.addf %35, %41 : vector<28x32x128xf32>
    %43 = vector.extract_strided_slice %6 {offsets = [1, 0, 0], sizes = [28, 32, 128], strides = [1, 1, 1]} : vector<30x32x128xf32> to vector<28x32x128xf32>
    %44 = vector.extract_strided_slice %3 {offsets = [1, 2, 0], sizes = [1, 1, 128], strides = [1, 1, 1]} : vector<3x3x128xf32> to vector<1x1x128xf32>
    %45 = vector.shape_cast %44 : vector<1x1x128xf32> to vector<128xf32>
    %46 = vector.shape_cast %45 : vector<128xf32> to vector<1x1x128xf32>
    %47 = vector.broadcast %46 : vector<1x1x128xf32> to vector<28x32x128xf32>
    %48 = arith.mulf %43, %47 : vector<28x32x128xf32>
    %49 = arith.addf %42, %48 : vector<28x32x128xf32>
    %50 = vector.extract_strided_slice %4 {offsets = [2, 0, 0], sizes = [28, 32, 128], strides = [1, 1, 1]} : vector<30x32x128xf32> to vector<28x32x128xf32>
    %51 = vector.extract_strided_slice %3 {offsets = [2, 0, 0], sizes = [1, 1, 128], strides = [1, 1, 1]} : vector<3x3x128xf32> to vector<1x1x128xf32>
    %52 = vector.shape_cast %51 : vector<1x1x128xf32> to vector<128xf32>
    %53 = vector.shape_cast %52 : vector<128xf32> to vector<1x1x128xf32>
    %54 = vector.broadcast %53 : vector<1x1x128xf32> to vector<28x32x128xf32>
    %55 = arith.mulf %50, %54 : vector<28x32x128xf32>
    %56 = arith.addf %49, %55 : vector<28x32x128xf32>
    %57 = vector.extract_strided_slice %5 {offsets = [2, 0, 0], sizes = [28, 32, 128], strides = [1, 1, 1]} : vector<30x32x128xf32> to vector<28x32x128xf32>
    %58 = vector.extract_strided_slice %3 {offsets = [2, 1, 0], sizes = [1, 1, 128], strides = [1, 1, 1]} : vector<3x3x128xf32> to vector<1x1x128xf32>
    %59 = vector.shape_cast %58 : vector<1x1x128xf32> to vector<128xf32>
    %60 = vector.shape_cast %59 : vector<128xf32> to vector<1x1x128xf32>
    %61 = vector.broadcast %60 : vector<1x1x128xf32> to vector<28x32x128xf32>
    %62 = arith.mulf %57, %61 : vector<28x32x128xf32>
    %63 = arith.addf %56, %62 : vector<28x32x128xf32>
    %64 = vector.extract_strided_slice %6 {offsets = [2, 0, 0], sizes = [28, 32, 128], strides = [1, 1, 1]} : vector<30x32x128xf32> to vector<28x32x128xf32>
    %65 = vector.extract_strided_slice %3 {offsets = [2, 2, 0], sizes = [1, 1, 128], strides = [1, 1, 1]} : vector<3x3x128xf32> to vector<1x1x128xf32>
    %66 = vector.shape_cast %65 : vector<1x1x128xf32> to vector<128xf32>
    %67 = vector.shape_cast %66 : vector<128xf32> to vector<1x1x128xf32>
    %68 = vector.broadcast %67 : vector<1x1x128xf32> to vector<28x32x128xf32>
    %69 = arith.mulf %64, %68 : vector<28x32x128xf32>
    %70 = arith.addf %63, %69 : vector<28x32x128xf32>
    %71 = tpu.iota {dimensions = array<i32: 1>} : vector<1x32x1xi32>
    %c28_i32 = arith.constant 28 : i32
    %72 = vector.broadcast %c28_i32 : i32 to vector<1x32x1xi32>
    %73 = arith.cmpi slt, %71, %72 : vector<1x32x1xi32>
    %cst_6 = arith.constant 1.000000e+00 : f32
    %cst_7 = arith.constant 0.000000e+00 : f32
    %74 = vector.broadcast %cst_6 : f32 to vector<1x32x1xf32>
    %75 = vector.broadcast %cst_7 : f32 to vector<1x32x1xf32>
    %76 = arith.select %73, %74, %75 : vector<1x32x1xi1>, vector<1x32x1xf32>
    %77 = vector.broadcast %76 : vector<1x32x1xf32> to vector<28x32x128xf32>
    %78 = arith.mulf %70, %77 : vector<28x32x128xf32>
    %cst_8 = arith.constant dense<0.000000e+00> : vector<128xf32>
    %79 = vector.multi_reduction <add>, %78, %cst_8 [0, 1] : vector<28x32x128xf32> to vector<128xf32>
    %80 = vector.shape_cast %79 : vector<128xf32> to vector<1x128xf32>
    %81 = arith.mulf %78, %70 : vector<28x32x128xf32>
    %cst_9 = arith.constant dense<0.000000e+00> : vector<128xf32>
    %82 = vector.multi_reduction <add>, %81, %cst_9 [0, 1] : vector<28x32x128xf32> to vector<128xf32>
    %83 = vector.shape_cast %82 : vector<128xf32> to vector<1x128xf32>
    %cst_10 = arith.constant 0.00127551018 : f32
    %84 = vector.broadcast %cst_10 : f32 to vector<1x128xf32>
    %85 = arith.mulf %80, %84 : vector<1x128xf32>
    %cst_11 = arith.constant 0.00127551018 : f32
    %86 = vector.broadcast %cst_11 : f32 to vector<1x128xf32>
    %87 = arith.mulf %83, %86 : vector<1x128xf32>
    %88 = arith.mulf %85, %85 : vector<1x128xf32>
    %89 = arith.subf %87, %88 : vector<1x128xf32>
    %c0_12 = arith.constant 0 : index
    %c0_13 = arith.constant 0 : index
    %90 = vector.load %arg2[%c0_12, %c0_13] : memref<1x128xf32, #tpu.memory_space<vmem>>, vector<1x128xf32>
    %cst_14 = arith.constant 9.99999974E-6 : f32
    %91 = vector.broadcast %cst_14 : f32 to vector<1x128xf32>
    %92 = arith.addf %89, %91 : vector<1x128xf32>
    %93 = math.rsqrt %92 : vector<1x128xf32>
    %94 = arith.mulf %90, %93 : vector<1x128xf32>
    %c0_15 = arith.constant 0 : index
    %c0_16 = arith.constant 0 : index
    %95 = vector.load %arg3[%c0_15, %c0_16] : memref<1x128xf32, #tpu.memory_space<vmem>>, vector<1x128xf32>
    %96 = arith.mulf %85, %94 : vector<1x128xf32>
    %97 = arith.subf %95, %96 : vector<1x128xf32>
    %98 = vector.shape_cast %78 : vector<28x32x128xf32> to vector<896x128xf32>
    %99 = vector.broadcast %94 : vector<1x128xf32> to vector<896x128xf32>
    %100 = arith.mulf %98, %99 : vector<896x128xf32>
    %101 = vector.broadcast %97 : vector<1x128xf32> to vector<896x128xf32>
    %102 = arith.addf %100, %101 : vector<896x128xf32>
    %c0_17 = arith.constant 0 : index
    %c0_18 = arith.constant 0 : index
    %103 = vector.load %arg4[%c0_17, %c0_18] : memref<128x128xf32, #tpu.memory_space<vmem>>, vector<128x128xf32>
    %cst_19 = arith.constant dense<0.000000e+00> : vector<896x128xf32>
    %104 = tpu.matmul %102, %103, %cst_19 {dimension_numbers = #tpu.dot_dimension_numbers<[1], [0], [0], [1], [0, 0, 1, 1], [], []>} : vector<896x128xf32>, vector<128x128xf32>, vector<896x128xf32> -> vector<896x128xf32>
    %c0_20 = arith.constant 0 : index
    %c0_21 = arith.constant 0 : index
    %105 = vector.load %arg5[%c0_20, %c0_21] : memref<896x128xf32, #tpu.memory_space<vmem>>, vector<896x128xf32>
    tpu.vector_store %arg5[%c0_20, %c0_21], %104 {strides = array<i32>} : memref<896x128xf32, #tpu.memory_space<vmem>>, vector<896x128xf32>,
    return
  }
}

</mosaic_0001>

<llo_original>
// kernel: forward.1
$region0: #{forward.1}
  #allocation0 [shape = 'u32[]', space=smem, size = 0x4, offset = 0x4, fixed_abs, tag = 'smem constant byte address 0x4 - core index']
  #allocation1 [shape = 'u32[144,128]{1,0:T(1,128)}', space=vmem, size = 0x12000, scoped, tag = 'internal scratch']
  %s0 = inlined_call_operand.vmem [shape: f32[30,34,128], index: 0, kind: input, shape index: {}]
  %s1 = inlined_call_operand.vmem [shape: f32[3,3,128], index: 1, kind: input, shape index: {}]
  %s2 = inlined_call_operand.vmem [shape: f32[1,128], index: 2, kind: input, shape index: {}]
  %s3 = inlined_call_operand.vmem [shape: f32[1,128], index: 3, kind: input, shape index: {}]
  %s4 = inlined_call_operand.vmem [shape: f32[128,128], index: 4, kind: input, shape index: {}]
  %s5 = inlined_call_operand.vmem [shape: f32[896,128], index: 5, kind: output, shape index: {}]
  %s6 = sld [smem:[#allocation0]]
  $region30: #{forward.1} parent=0
    _
  %s8 = ssub.s32 1, %s6
  %s9 = scalar_select 0, %s8, %s6
  // Predicated region
  $region2: #{forward.1} parent=0 // pred_check
    _
  $region3: #{forward.1} parent=0 // pred_check_branch
    %11 = sbr.rel (0) target = $region5
  $region4: #{forward.1} parent=0 // pred_region
    _
  $region5: #{forward.1} parent=0 // pred_fallthru
    _
  // Predicated region
  $region6: #{forward.1} parent=0 // pred_check
    _
  $region7: #{forward.1} parent=0 // pred_check_branch
    %13 = sbr.rel (0) target = $region9
  $region8: #{forward.1} parent=0 // pred_region
    _
  $region9: #{forward.1} parent=0 // pred_fallthru
    _
  // Predicated region
  $region10: #{forward.1} parent=0 // pred_check
    _
  $region11: #{forward.1} parent=0 // pred_check_branch
    %15 = sbr.rel (0) target = $region13
  $region12: #{forward.1} parent=0 // pred_region
    _
  $region13: #{forward.1} parent=0 // pred_fallthru
    _
  // Predicated region
  $region14: #{forward.1} parent=0 // pred_check
    _
  $region15: #{forward.1} parent=0 // pred_check_branch
    %17 = sbr.rel (0) target = $region17
  $region16: #{forward.1} parent=0 // pred_region
    _
  $region17: #{forward.1} parent=0 // pred_fallthru
    _
  // Predicated region
  $region18: #{forward.1} parent=0 // pred_check
    _
  $region19: #{forward.1} parent=0 // pred_check_branch
    %19 = sbr.rel (0) target = $region21
  $region20: #{forward.1} parent=0 // pred_region
    _
  $region21: #{forward.1} parent=0 // pred_fallthru
    _
  %v20 = vld [vmem:[%s0] sm:$0xff]
  %v21 = vld [vmem:[%s0 + $0x8] sm:$0xff]
  %v22 = vld [vmem:[%s0 + $0x10] sm:$0xff]
  %v23 = vld [vmem:[%s0 + $0x18] sm:$0xff]
  %v24 = vld [vmem:[%s0 + $0x20] sm:$0x3]
  %v25 = vld [vmem:[%s0 + $0x28] sm:$0xff]
  %v26 = vld [vmem:[%s0 + $0x30] sm:$0xff]
  %v27 = vld [vmem:[%s0 + $0x38] sm:$0xff]
  %v28 = vld [vmem:[%s0 + $0x40] sm:$0xff]
  %v29 = vld [vmem:[%s0 + $0x48] sm:$0x3]
  %v30 = vld [vmem:[%s0 + $0x50] sm:$0xff]
  %v31 = vld [vmem:[%s0 + $0x58] sm:$0xff]
  %v32 = vld [vmem:[%s0 + $0x60] sm:$0xff]
  %v33 = vld [vmem:[%s0 + $0x68] sm:$0xff]
  %v34 = vld [vmem:[%s0 + $0x70] sm:$0x3]
  %v35 = vld [vmem:[%s0 + $0x78] sm:$0xff]
  %v36 = vld [vmem:[%s0 + $0x80] sm:$0xff]
  %v37 = vld [vmem:[%s0 + $0x88] sm:$0xff]
  %v38 = vld [vmem:[%s0 + $0x90] sm:$0xff]
  %v39 = vld [vmem:[%s0 + $0x98] sm:$0x3]
  %v40 = vld [vmem:[%s0 + $0xa0] sm:$0xff]
  %v41 = vld [vmem:[%s0 + $0xa8] sm:$0xff]
  %v42 = vld [vmem:[%s0 + $0xb0] sm:$0xff]
  %v43 = vld [vmem:[%s0 + $0xb8] sm:$0xff]
  %v44 = vld [vmem:[%s0 + $0xc0] sm:$0x3]
  %v45 = vld [vmem:[%s0 + $0xc8] sm:$0xff]
  %v46 = vld [vmem:[%s0 + $0xd0] sm:$0xff]
  %v47 = vld [vmem:[%s0 + $0xd8] sm:$0xff]
  %v48 = vld [vmem:[%s0 + $0xe0] sm:$0xff]
  %v49 = vld [vmem:[%s0 + $0xe8] sm:$0x3]
  %v50 = vld [vmem:[%s0 + $0xf0] sm:$0xff]
  %v51 = vld [vmem:[%s0 + $0xf8] sm:$0xff]
  %v52 = vld [vmem:[%s0 + $0x100] sm:$0xff]
  %v53 = vld [vmem:[%s0 + $0x108] sm:$0xff]
  %v54 = vld [vmem:[%s0 + $0x110] sm:$0x3]
  %v55 = vld [vmem:[%s0 + $0x118] sm:$0xff]
  %v56 = vld [vmem:[%s0 + $0x120] sm:$0xff]
  %v57 = vld [vmem:[%s0 + $0x128] sm:$0xff]
  %v58 = vld [vmem:[%s0 + $0x130] sm:$0xff]
  %v59 = vld [vmem:[%s0 + $0x138] sm:$0x3]
  %v60 = vld [vmem:[%s0 + $0x140] sm:$0xff]
  %v61 = vld [vmem:[%s0 + $0x148] sm:$0xff]
  %v62 = vld [vmem:[%s0 + $0x150] sm:$0xff]
  %v63 = vld [vmem:[%s0 + $0x158] sm:$0xff]
  %v64 = vld [vmem:[%s0 + $0x160] sm:$0x3]
  %v65 = vld [vmem:[%s0 + $0x168] sm:$0xff]
  %v66 = vld [vmem:[%s0 + $0x170] sm:$0xff]
  %v67 = vld [vmem:[%s0 + $0x178] sm:$0xff]
  %v68 = vld [vmem:[%s0 + $0x180] sm:$0xff]
  %v69 = vld [vmem:[%s0 + $0x188] sm:$0x3]
  %v70 = vld [vmem:[%s0 + $0x190] sm:$0xff]
  %v71 = vld [vmem:[%s0 + $0x198] sm:$0xff]
  %v72 = vld [vmem:[%s0 + $0x1a0] sm:$0xff]
  %v73 = vld [vmem:[%s0 + $0x1a8] sm:$0xff]
  %v74 = vld [vmem:[%s0 + $0x1b0] sm:$0x3]
  %v75 = vld [vmem:[%s0 + $0x1b8] sm:$0xff]
  %v76 = vld [vmem:[%s0 + $0x1c0] sm:$0xff]
  %v77 = vld [vmem:[%s0 + $0x1c8] sm:$0xff]
  %v78 = vld [vmem:[%s0 + $0x1d0] sm:$0xff]
  %v79 = vld [vmem:[%s0 + $0x1d8] sm:$0x3]
  %v80 = vld [vmem:[%s0 + $0x1e0] sm:$0xff]
  %v81 = vld [vmem:[%s0 + $0x1e8] sm:$0xff]
  %v82 = vld [vmem:[%s0 + $0x1f0] sm:$0xff]
  %v83 = vld [vmem:[%s0 + $0x1f8] sm:$0xff]
  %v84 = vld [vmem:[%s0 + $0x200] sm:$0x3]
  %v85 = vld [vmem:[%s0 + $0x208] sm:$0xff]
  %v86 = vld [vmem:[%s0 + $0x210] sm:$0xff]
  %v87 = vld [vmem:[%s0 + $0x218] sm:$0xff]
  %v88 = vld [vmem:[%s0 + $0x220] sm:$0xff]
  %v89 = vld [vmem:[%s0 + $0x228] sm:$0x3]
  %v90 = vld [vmem:[%s0 + $0x230] sm:$0xff]
  %v91 = vld [vmem:[%s0 + $0x238] sm:$0xff]
  %v92 = vld [vmem:[%s0 + $0x240] sm:$0xff]
  %v93 = vld [vmem:[%s0 + $0x248] sm:$0xff]
  %v94 = vld [vmem:[%s0 + $0x250] sm:$0x3]
  %v95 = vld [vmem:[%s0 + $0x258] sm:$0xff]
  %v96 = vld [vmem:[%s0 + $0x260] sm:$0xff]
  %v97 = vld [vmem:[%s0 + $0x268] sm:$0xff]
  %v98 = vld [vmem:[%s0 + $0x270] sm:$0xff]
  %v99 = vld [vmem:[%s0 + $0x278] sm:$0x3]
  %v100 = vld [vmem:[%s0 + $0x280] sm:$0xff]
  %v101 = vld [vmem:[%s0 + $0x288] sm:$0xff]
  %v102 = vld [vmem:[%s0 + $0x290] sm:$0xff]
  %v103 = vld [vmem:[%s0 + $0x298] sm:$0xff]
  %v104 = vld [vmem:[%s0 + $0x2a0] sm:$0x3]
  %v105 = vld [vmem:[%s0 + $0x2a8] sm:$0xff]
  %v106 = vld [vmem:[%s0 + $0x2b0] sm:$0xff]
  %v107 = vld [vmem:[%s0 + $0x2b8] sm:$0xff]
  %v108 = vld [vmem:[%s0 + $0x2c0] sm:$0xff]
  %v109 = vld [vmem:[%s0 + $0x2c8] sm:$0x3]
  %v110 = vld [vmem:[%s0 + $0x2d0] sm:$0xff]
  %v111 = vld [vmem:[%s0 + $0x2d8] sm:$0xff]
  %v112 = vld [vmem:[%s0 + $0x2e0] sm:$0xff]
  %v113 = vld [vmem:[%s0 + $0x2e8] sm:$0xff]
  %v114 = vld [vmem:[%s0 + $0x2f0] sm:$0x3]
  %v115 = vld [vmem:[%s0 + $0x2f8] sm:$0xff]
  %v116 = vld [vmem:[%s0 + $0x300] sm:$0xff]
  %v117 = vld [vmem:[%s0 + $0x308] sm:$0xff]
  %v118 = vld [vmem:[%s0 + $0x310] sm:$0xff]
  %v119 = vld [vmem:[%s0 + $0x318] sm:$0x3]
  %v120 = vld [vmem:[%s0 + $0x320] sm:$0xff]
  %v121 = vld [vmem:[%s0 + $0x328] sm:$0xff]
  %v122 = vld [vmem:[%s0 + $0x330] sm:$0xff]
  %v123 = vld [vmem:[%s0 + $0x338] sm:$0xff]
  %v124 = vld [vmem:[%s0 + $0x340] sm:$0x3]
  %v125 = vld [vmem:[%s0 + $0x348] sm:$0xff]
  %v126 = vld [vmem:[%s0 + $0x350] sm:$0xff]
  %v127 = vld [vmem:[%s0 + $0x358] sm:$0xff]
  %v128 = vld [vmem:[%s0 + $0x360] sm:$0xff]
  %v129 = vld [vmem:[%s0 + $0x368] sm:$0x3]
  %v130 = vld [vmem:[%s0 + $0x370] sm:$0xff]
  %v131 = vld [vmem:[%s0 + $0x378] sm:$0xff]
  %v132 = vld [vmem:[%s0 + $0x380] sm:$0xff]
  %v133 = vld [vmem:[%s0 + $0x388] sm:$0xff]
  %v134 = vld [vmem:[%s0 + $0x390] sm:$0x3]
  %v135 = vld [vmem:[%s0 + $0x398] sm:$0xff]
  %v136 = vld [vmem:[%s0 + $0x3a0] sm:$0xff]
  %v137 = vld [vmem:[%s0 + $0x3a8] sm:$0xff]
  %v138 = vld [vmem:[%s0 + $0x3b0] sm:$0xff]
  %v139 = vld [vmem:[%s0 + $0x3b8] sm:$0x3]
  %v140 = vld [vmem:[%s0 + $0x3c0] sm:$0xff]
  %v141 = vld [vmem:[%s0 + $0x3c8] sm:$0xff]
  %v142 = vld [vmem:[%s0 + $0x3d0] sm:$0xff]
  %v143 = vld [vmem:[%s0 + $0x3d8] sm:$0xff]
  %v144 = vld [vmem:[%s0 + $0x3e0] sm:$0x3]
  %v145 = vld [vmem:[%s0 + $0x3e8] sm:$0xff]
  %v146 = vld [vmem:[%s0 + $0x3f0] sm:$0xff]
  %v147 = vld [vmem:[%s0 + $0x3f8] sm:$0xff]
  %v148 = vld [vmem:[%s0 + $0x400] sm:$0xff]
  %v149 = vld [vmem:[%s0 + $0x408] sm:$0x3]
  %v150 = vld [vmem:[%s0 + $0x410] sm:$0xff]
  %v151 = vld [vmem:[%s0 + $0x418] sm:$0xff]
  %v152 = vld [vmem:[%s0 + $0x420] sm:$0xff]
  %v153 = vld [vmem:[%s0 + $0x428] sm:$0xff]
  %v154 = vld [vmem:[%s0 + $0x430] sm:$0x3]
  %v155 = vld [vmem:[%s0 + $0x438] sm:$0xff]
  %v156 = vld [vmem:[%s0 + $0x440] sm:$0xff]
  %v157 = vld [vmem:[%s0 + $0x448] sm:$0xff]
  %v158 = vld [vmem:[%s0 + $0x450] sm:$0xff]
  %v159 = vld [vmem:[%s0 + $0x458] sm:$0x3]
  %v160 = vld [vmem:[%s0 + $0x460] sm:$0xff]
  %v161 = vld [vmem:[%s0 + $0x468] sm:$0xff]
  %v162 = vld [vmem:[%s0 + $0x470] sm:$0xff]
  %v163 = vld [vmem:[%s0 + $0x478] sm:$0xff]
  %v164 = vld [vmem:[%s0 + $0x480] sm:$0x3]
  %v165 = vld [vmem:[%s0 + $0x488] sm:$0xff]
  %v166 = vld [vmem:[%s0 + $0x490] sm:$0xff]
  %v167 = vld [vmem:[%s0 + $0x498] sm:$0xff]
  %v168 = vld [vmem:[%s0 + $0x4a0] sm:$0xff]
  %v169 = vld [vmem:[%s0 + $0x4a8] sm:$0x3]
  %v170 = vmax.f32 %v20, 0.0
  %v171 = vmax.f32 %v21, 0.0
  %v172 = vmax.f32 %v22, 0.0
  %v173 = vmax.f32 %v23, 0.0
  %v174 = vmax.f32 %v24, 0.0
  %v175 = vmax.f32 %v25, 0.0
  %v176 = vmax.f32 %v26, 0.0
  %v177 = vmax.f32 %v27, 0.0
  %v178 = vmax.f32 %v28, 0.0
  %v179 = vmax.f32 %v29, 0.0
  %v180 = vmax.f32 %v30, 0.0
  %v181 = vmax.f32 %v31, 0.0
  %v182 = vmax.f32 %v32, 0.0
  %v183 = vmax.f32 %v33, 0.0
  %v184 = vmax.f32 %v34, 0.0
  %v185 = vmax.f32 %v35, 0.0
  %v186 = vmax.f32 %v36, 0.0
  %v187 = vmax.f32 %v37, 0.0
  %v188 = vmax.f32 %v38, 0.0
  %v189 = vmax.f32 %v39, 0.0
  %v190 = vmax.f32 %v40, 0.0
  %v191 = vmax.f32 %v41, 0.0
  %v192 = vmax.f32 %v42, 0.0
  %v193 = vmax.f32 %v43, 0.0
  %v194 = vmax.f32 %v44, 0.0
  %v195 = vmax.f32 %v45, 0.0
  %v196 = vmax.f32 %v46, 0.0
  %v197 = vmax.f32 %v47, 0.0
  %v198 = vmax.f32 %v48, 0.0
  %v199 = vmax.f32 %v49, 0.0
  %v200 = vmax.f32 %v50, 0.0
  %v201 = vmax.f32 %v51, 0.0
  %v202 = vmax.f32 %v52, 0.0
  %v203 = vmax.f32 %v53, 0.0
  %v204 = vmax.f32 %v54, 0.0
  %v205 = vmax.f32 %v55, 0.0
  %v206 = vmax.f32 %v56, 0.0
  %v207 = vmax.f32 %v57, 0.0
  %v208 = vmax.f32 %v58, 0.0
  %v209 = vmax.f32 %v59, 0.0
  %v210 = vmax.f32 %v60, 0.0
  %v211 = vmax.f32 %v61, 0.0
  %v212 = vmax.f32 %v62, 0.0
  %v213 = vmax.f32 %v63, 0.0
  %v214 = vmax.f32 %v64, 0.0
  %v215 = vmax.f32 %v65, 0.0
  %v216 = vmax.f32 %v66, 0.0
  %v217 = vmax.f32 %v67, 0.0
  %v218 = vmax.f32 %v68, 0.0
  %v219 = vmax.f32 %v69, 0.0
  %v220 = vmax.f32 %v70, 0.0
  %v221 = vmax.f32 %v71, 0.0
  %v222 = vmax.f32 %v72, 0.0
  %v223 = vmax.f32 %v73, 0.0
  %v224 = vmax.f32 %v74, 0.0
  %v225 = vmax.f32 %v75, 0.0
  %v226 = vmax.f32 %v76, 0.0
  %v227 = vmax.f32 %v77, 0.0
  %v228 = vmax.f32 %v78, 0.0
  %v229 = vmax.f32 %v79, 0.0
  %v230 = vmax.f32 %v80, 0.0
  %v231 = vmax.f32 %v81, 0.0
  %v232 = vmax.f32 %v82, 0.0
  %v233 = vmax.f32 %v83, 0.0
  %v234 = vmax.f32 %v84, 0.0
  %v235 = vmax.f32 %v85, 0.0
  %v236 = vmax.f32 %v86, 0.0
  %v237 = vmax.f32 %v87, 0.0
  %v238 = vmax.f32 %v88, 0.0
  %v239 = vmax.f32 %v89, 0.0
  %v240 = vmax.f32 %v90, 0.0
  %v241 = vmax.f32 %v91, 0.0
  %v242 = vmax.f32 %v92, 0.0
  %v243 = vmax.f32 %v93, 0.0
  %v244 = vmax.f32 %v94, 0.0
  %v245 = vmax.f32 %v95, 0.0
  %v246 = vmax.f32 %v96, 0.0
  %v247 = vmax.f32 %v97, 0.0
  %v248 = vmax.f32 %v98, 0.0
  %v249 = vmax.f32 %v99, 0.0
  %v250 = vmax.f32 %v100, 0.0
  %v251 = vmax.f32 %v101, 0.0
  %v252 = vmax.f32 %v102, 0.0
  %v253 = vmax.f32 %v103, 0.0
  %v254 = vmax.f32 %v104, 0.0
  %v255 = vmax.f32 %v105, 0.0
  %v256 = vmax.f32 %v106, 0.0
  %v257 = vmax.f32 %v107, 0.0
  %v258 = vmax.f32 %v108, 0.0
  %v259 = vmax.f32 %v109, 0.0
  %v260 = vmax.f32 %v110, 0.0
  %v261 = vmax.f32 %v111, 0.0
  %v262 = vmax.f32 %v112, 0.0
  %v263 = vmax.f32 %v113, 0.0
  %v264 = vmax.f32 %v114, 0.0
  %v265 = vmax.f32 %v115, 0.0
  %v266 = vmax.f32 %v116, 0.0
  %v267 = vmax.f32 %v117, 0.0
  %v268 = vmax.f32 %v118, 0.0
  %v269 = vmax.f32 %v119, 0.0
  %v270 = vmax.f32 %v120, 0.0
  %v271 = vmax.f32 %v121, 0.0
  %v272 = vmax.f32 %v122, 0.0
  %v273 = vmax.f32 %v123, 0.0
  %v274 = vmax.f32 %v124, 0.0
  %v275 = vmax.f32 %v125, 0.0
  %v276 = vmax.f32 %v126, 0.0
  %v277 = vmax.f32 %v127, 0.0
  %v278 = vmax.f32 %v128, 0.0
  %v279 = vmax.f32 %v129, 0.0
  %v280 = vmax.f32 %v130, 0.0
  %v281 = vmax.f32 %v131, 0.0
  %v282 = vmax.f32 %v132, 0.0
  %v283 = vmax.f32 %v133, 0.0
  %v284 = vmax.f32 %v134, 0.0
  %v285 = vmax.f32 %v135, 0.0
  %v286 = vmax.f32 %v136, 0.0
  %v287 = vmax.f32 %v137, 0.0
  %v288 = vmax.f32 %v138, 0.0
  %v289 = vmax.f32 %v139, 0.0
  %v290 = vmax.f32 %v140, 0.0
  %v291 = vmax.f32 %v141, 0.0
  %v292 = vmax.f32 %v142, 0.0
  %v293 = vmax.f32 %v143, 0.0
  %v294 = vmax.f32 %v144, 0.0
  %v295 = vmax.f32 %v145, 0.0
  %v296 = vmax.f32 %v146, 0.0
  %v297 = vmax.f32 %v147, 0.0
  %v298 = vmax.f32 %v148, 0.0
  %v299 = vmax.f32 %v149, 0.0
  %v300 = vmax.f32 %v150, 0.0
  %v301 = vmax.f32 %v151, 0.0
  %v302 = vmax.f32 %v152, 0.0
  %v303 = vmax.f32 %v153, 0.0
  %v304 = vmax.f32 %v154, 0.0
  %v305 = vmax.f32 %v155, 0.0
  %v306 = vmax.f32 %v156, 0.0
  %v307 = vmax.f32 %v157, 0.0
  %v308 = vmax.f32 %v158, 0.0
  %v309 = vmax.f32 %v159, 0.0
  %v310 = vmax.f32 %v160, 0.0
  %v311 = vmax.f32 %v161, 0.0
  %v312 = vmax.f32 %v162, 0.0
  %v313 = vmax.f32 %v163, 0.0
  %v314 = vmax.f32 %v164, 0.0
  %v315 = vmax.f32 %v165, 0.0
  %v316 = vmax.f32 %v166, 0.0
  %v317 = vmax.f32 %v167, 0.0
  %v318 = vmax.f32 %v168, 0.0
  %v319 = vmax.f32 %v169, 0.0
  %v320 = vld [vmem:[%s1] sm:$0x7]
  %v321 = vld [vmem:[%s1 + $0x4] sm:$0x7]
  %v322 = vld [vmem:[%s1 + $0x8] sm:$0x7]
  %v323 = vlaneseq
  %v324 = vshrl.u32 %v323, 7
  %v325 = vsub.s32 0, %v324
  %v326 = vrot.slane %v320, %v325
  %v327 = vmul.f32 %v170, %v326
  %v328 = vmul.f32 %v171, %v326
  %v329 = vmul.f32 %v172, %v326
  %v330 = vmul.f32 %v173, %v326
  %v331 = vmul.f32 %v175, %v326
  %v332 = vmul.f32 %v176, %v326
  %v333 = vmul.f32 %v177, %v326
  %v334 = vmul.f32 %v178, %v326
  %v335 = vmul.f32 %v180, %v326
  %v336 = vmul.f32 %v181, %v326
  %v337 = vmul.f32 %v182, %v326
  %v338 = vmul.f32 %v183, %v326
  %v339 = vmul.f32 %v185, %v326
  %v340 = vmul.f32 %v186, %v326
  %v341 = vmul.f32 %v187, %v326
  %v342 = vmul.f32 %v188, %v326
  %v343 = vmul.f32 %v190, %v326
  %v344 = vmul.f32 %v191, %v326
  %v345 = vmul.f32 %v192, %v326
  %v346 = vmul.f32 %v193, %v326
  %v347 = vmul.f32 %v195, %v326
  %v348 = vmul.f32 %v196, %v326
  %v349 = vmul.f32 %v197, %v326
  %v350 = vmul.f32 %v198, %v326
  %v351 = vmul.f32 %v200, %v326
  %v352 = vmul.f32 %v201, %v326
  %v353 = vmul.f32 %v202, %v326
  %v354 = vmul.f32 %v203, %v326
  %v355 = vmul.f32 %v205, %v326
  %v356 = vmul.f32 %v206, %v326
  %v357 = vmul.f32 %v207, %v326
  %v358 = vmul.f32 %v208, %v326
  %v359 = vmul.f32 %v210, %v326
  %v360 = vmul.f32 %v211, %v326
  %v361 = vmul.f32 %v212, %v326
  %v362 = vmul.f32 %v213, %v326
  %v363 = vmul.f32 %v215, %v326
  %v364 = vmul.f32 %v216, %v326
  %v365 = vmul.f32 %v217, %v326
  %v366 = vmul.f32 %v218, %v326
  %v367 = vmul.f32 %v220, %v326
  %v368 = vmul.f32 %v221, %v326
  %v369 = vmul.f32 %v222, %v326
  %v370 = vmul.f32 %v223, %v326
  %v371 = vmul.f32 %v225, %v326
  %v372 = vmul.f32 %v226, %v326
  %v373 = vmul.f32 %v227, %v326
  %v374 = vmul.f32 %v228, %v326
  %v375 = vmul.f32 %v230, %v326
  %v376 = vmul.f32 %v231, %v326
  %v377 = vmul.f32 %v232, %v326
  %v378 = vmul.f32 %v233, %v326
  %v379 = vmul.f32 %v235, %v326
  %v380 = vmul.f32 %v236, %v326
  %v381 = vmul.f32 %v237, %v326
  %v382 = vmul.f32 %v238, %v326
  %v383 = vmul.f32 %v240, %v326
  %v384 = vmul.f32 %v241, %v326
  %v385 = vmul.f32 %v242, %v326
  %v386 = vmul.f32 %v243, %v326
  %v387 = vmul.f32 %v245, %v326
  %v388 = vmul.f32 %v246, %v326
  %v389 = vmul.f32 %v247, %v326
  %v390 = vmul.f32 %v248, %v326
  %v391 = vmul.f32 %v250, %v326
  %v392 = vmul.f32 %v251, %v326
  %v393 = vmul.f32 %v252, %v326
  %v394 = vmul.f32 %v253, %v326
  %v395 = vmul.f32 %v255, %v326
  %v396 = vmul.f32 %v256, %v326
  %v397 = vmul.f32 %v257, %v326
  %v398 = vmul.f32 %v258, %v326
  %v399 = vmul.f32 %v260, %v326
  %v400 = vmul.f32 %v261, %v326
  %v401 = vmul.f32 %v262, %v326
  %v402 = vmul.f32 %v263, %v326
  %v403 = vmul.f32 %v265, %v326
  %v404 = vmul.f32 %v266, %v326
  %v405 = vmul.f32 %v267, %v326
  %v406 = vmul.f32 %v268, %v326
  %v407 = vmul.f32 %v270, %v326
  %v408 = vmul.f32 %v271, %v326
  %v409 = vmul.f32 %v272, %v326
  %v410 = vmul.f32 %v273, %v326
  %v411 = vmul.f32 %v275, %v326
  %v412 = vmul.f32 %v276, %v326
  %v413 = vmul.f32 %v277, %v326
  %v414 = vmul.f32 %v278, %v326
  %v415 = vmul.f32 %v280, %v326
  %v416 = vmul.f32 %v281, %v326
  %v417 = vmul.f32 %v282, %v326
  %v418 = vmul.f32 %v283, %v326
  %v419 = vmul.f32 %v285, %v326
  %v420 = vmul.f32 %v286, %v326
  %v421 = vmul.f32 %v287, %v326
  %v422 = vmul.f32 %v288, %v326
  %v423 = vmul.f32 %v290, %v326
  %v424 = vmul.f32 %v291, %v326
  %v425 = vmul.f32 %v292, %v326
  %v426 = vmul.f32 %v293, %v326
  %v427 = vmul.f32 %v295, %v326
  %v428 = vmul.f32 %v296, %v326
  %v429 = vmul.f32 %v297, %v326
  %v430 = vmul.f32 %v298, %v326
  %v431 = vmul.f32 %v300, %v326
  %v432 = vmul.f32 %v301, %v326
  %v433 = vmul.f32 %v302, %v326
  %v434 = vmul.f32 %v303, %v326
  %v435 = vmul.f32 %v305, %v326
  %v436 = vmul.f32 %v306, %v326
  %v437 = vmul.f32 %v307, %v326
  %v438 = vmul.f32 %v308, %v326
  %v439 = vadd.f32 %v327, 0.0
  %v440 = vadd.f32 %v328, 0.0
  %v441 = vadd.f32 %v329, 0.0
  %v442 = vadd.f32 %v330, 0.0
  %v443 = vadd.f32 %v331, 0.0
  %v444 = vadd.f32 %v332, 0.0
  %v445 = vadd.f32 %v333, 0.0
  %v446 = vadd.f32 %v334, 0.0
  %v447 = vadd.f32 %v335, 0.0
  %v448 = vadd.f32 %v336, 0.0
  %v449 = vadd.f32 %v337, 0.0
  %v450 = vadd.f32 %v338, 0.0
  %v451 = vadd.f32 %v339, 0.0
  %v452 = vadd.f32 %v340, 0.0
  %v453 = vadd.f32 %v341, 0.0
  %v454 = vadd.f32 %v342, 0.0
  %v455 = vadd.f32 %v343, 0.0
  %v456 = vadd.f32 %v344, 0.0
  %v457 = vadd.f32 %v345, 0.0
  %v458 = vadd.f32 %v346, 0.0
  %v459 = vadd.f32 %v347, 0.0
  %v460 = vadd.f32 %v348, 0.0
  %v461 = vadd.f32 %v349, 0.0
  %v462 = vadd.f32 %v350, 0.0
  %v463 = vadd.f32 %v351, 0.0
  %v464 = vadd.f32 %v352, 0.0
  %v465 = vadd.f32 %v353, 0.0
  %v466 = vadd.f32 %v354, 0.0
  %v467 = vadd.f32 %v355, 0.0
  %v468 = vadd.f32 %v356, 0.0
  %v469 = vadd.f32 %v357, 0.0
  %v470 = vadd.f32 %v358, 0.0
  %v471 = vadd.f32 %v359, 0.0
  %v472 = vadd.f32 %v360, 0.0
  %v473 = vadd.f32 %v361, 0.0
  %v474 = vadd.f32 %v362, 0.0
  %v475 = vadd.f32 %v363, 0.0
  %v476 = vadd.f32 %v364, 0.0
  %v477 = vadd.f32 %v365, 0.0
  %v478 = vadd.f32 %v366, 0.0
  %v479 = vadd.f32 %v367, 0.0
  %v480 = vadd.f32 %v368, 0.0
  %v481 = vadd.f32 %v369, 0.0
  %v482 = vadd.f32 %v370, 0.0
  %v483 = vadd.f32 %v371, 0.0
  %v484 = vadd.f32 %v372, 0.0
  %v485 = vadd.f32 %v373, 0.0
  %v486 = vadd.f32 %v374, 0.0
  %v487 = vadd.f32 %v375, 0.0
  %v488 = vadd.f32 %v376, 0.0
  %v489 = vadd.f32 %v377, 0.0
  %v490 = vadd.f32 %v378, 0.0
  %v491 = vadd.f32 %v379, 0.0
  %v492 = vadd.f32 %v380, 0.0
  %v493 = vadd.f32 %v381, 0.0
  %v494 = vadd.f32 %v382, 0.0
  %v495 = vadd.f32 %v383, 0.0
  %v496 = vadd.f32 %v384, 0.0
  %v497 = vadd.f32 %v385, 0.0
  %v498 = vadd.f32 %v386, 0.0
  %v499 = vadd.f32 %v387, 0.0
  %v500 = vadd.f32 %v388, 0.0
  %v501 = vadd.f32 %v389, 0.0
  %v502 = vadd.f32 %v390, 0.0
  %v503 = vadd.f32 %v391, 0.0
  %v504 = vadd.f32 %v392, 0.0
  %v505 = vadd.f32 %v393, 0.0
  %v506 = vadd.f32 %v394, 0.0
  %v507 = vadd.f32 %v395, 0.0
  %v508 = vadd.f32 %v396, 0.0
  %v509 = vadd.f32 %v397, 0.0
  %v510 = vadd.f32 %v398, 0.0
  %v511 = vadd.f32 %v399, 0.0
  %v512 = vadd.f32 %v400, 0.0
  %v513 = vadd.f32 %v401, 0.0
  %v514 = vadd.f32 %v402, 0.0
  %v515 = vadd.f32 %v403, 0.0
  %v516 = vadd.f32 %v404, 0.0
  %v517 = vadd.f32 %v405, 0.0
  %v518 = vadd.f32 %v406, 0.0
  %v519 = vadd.f32 %v407, 0.0
  %v520 = vadd.f32 %v408, 0.0
  %v521 = vadd.f32 %v409, 0.0
  %v522 = vadd.f32 %v410, 0.0
  %v523 = vadd.f32 %v411, 0.0
  %v524 = vadd.f32 %v412, 0.0
  %v525 = vadd.f32 %v413, 0.0
  %v526 = vadd.f32 %v414, 0.0
  %v527 = vadd.f32 %v415, 0.0
  %v528 = vadd.f32 %v416, 0.0
  %v529 = vadd.f32 %v417, 0.0
  %v530 = vadd.f32 %v418, 0.0
  %v531 = vadd.f32 %v419, 0.0
  %v532 = vadd.f32 %v420, 0.0
  %v533 = vadd.f32 %v421, 0.0
  %v534 = vadd.f32 %v422, 0.0
  %v535 = vadd.f32 %v423, 0.0
  %v536 = vadd.f32 %v424, 0.0
  %v537 = vadd.f32 %v425, 0.0
  %v538 = vadd.f32 %v426, 0.0
  %v539 = vadd.f32 %v427, 0.0
  %v540 = vadd.f32 %v428, 0.0
  %v541 = vadd.f32 %v429, 0.0
  %v542 = vadd.f32 %v430, 0.0
  %v543 = vadd.f32 %v431, 0.0
  %v544 = vadd.f32 %v432, 0.0
  %v545 = vadd.f32 %v433, 0.0
  %v546 = vadd.f32 %v434, 0.0
  %v547 = vadd.f32 %v435, 0.0
  %v548 = vadd.f32 %v436, 0.0
  %v549 = vadd.f32 %v437, 0.0
  %v550 = vadd.f32 %v438, 0.0
  %v551 = vlaneseq
  %v552 = vshrl.u32 %v551, 7
  %v553 = vsub.s32 1, %v552
  %v554 = vrot.slane %v320, %v553
  %v555 = vmul.f32 %v170, %v554
  %v556 = vmul.f32 %v171, %v554
  %v557 = vmul.f32 %v172, %v554
  %v558 = vmul.f32 %v173, %v554
  %v559 = vmul.f32 %v174, %v554
  %v560 = vmul.f32 %v175, %v554
  %v561 = vmul.f32 %v176, %v554
  %v562 = vmul.f32 %v177, %v554
  %v563 = vmul.f32 %v178, %v554
  %v564 = vmul.f32 %v179, %v554
  %v565 = vmul.f32 %v180, %v554
  %v566 = vmul.f32 %v181, %v554
  %v567 = vmul.f32 %v182, %v554
  %v568 = vmul.f32 %v183, %v554
  %v569 = vmul.f32 %v184, %v554
  %v570 = vmul.f32 %v185, %v554
  %v571 = vmul.f32 %v186, %v554
  %v572 = vmul.f32 %v187, %v554
  %v573 = vmul.f32 %v188, %v554
  %v574 = vmul.f32 %v189, %v554
  %v575 = vmul.f32 %v190, %v554
  %v576 = vmul.f32 %v191, %v554
  %v577 = vmul.f32 %v192, %v554
  %v578 = vmul.f32 %v193, %v554
  %v579 = vmul.f32 %v194, %v554
  %v580 = vmul.f32 %v195, %v554
  %v581 = vmul.f32 %v196, %v554
  %v582 = vmul.f32 %v197, %v554
  %v583 = vmul.f32 %v198, %v554
  %v584 = vmul.f32 %v199, %v554
  %v585 = vmul.f32 %v200, %v554
  %v586 = vmul.f32 %v201, %v554
  %v587 = vmul.f32 %v202, %v554
  %v588 = vmul.f32 %v203, %v554
  %v589 = vmul.f32 %v204, %v554
  %v590 = vmul.f32 %v205, %v554
  %v591 = vmul.f32 %v206, %v554
  %v592 = vmul.f32 %v207, %v554
  %v593 = vmul.f32 %v208, %v554
  %v594 = vmul.f32 %v209, %v554
  %v595 = vmul.f32 %v210, %v554
  %v596 = vmul.f32 %v211, %v554
  %v597 = vmul.f32 %v212, %v554
  %v598 = vmul.f32 %v213, %v554
  %v599 = vmul.f32 %v214, %v554
  %v600 = vmul.f32 %v215, %v554
  %v601 = vmul.f32 %v216, %v554
  %v602 = vmul.f32 %v217, %v554
  %v603 = vmul.f32 %v218, %v554
  %v604 = vmul.f32 %v219, %v554
  %v605 = vmul.f32 %v220, %v554
  %v606 = vmul.f32 %v221, %v554
  %v607 = vmul.f32 %v222, %v554
  %v608 = vmul.f32 %v223, %v554
  %v609 = vmul.f32 %v224, %v554
  %v610 = vmul.f32 %v225, %v554
  %v611 = vmul.f32 %v226, %v554
  %v612 = vmul.f32 %v227, %v554
  %v613 = vmul.f32 %v228, %v554
  %v614 = vmul.f32 %v229, %v554
  %v615 = vmul.f32 %v230, %v554
  %v616 = vmul.f32 %v231, %v554
  %v617 = vmul.f32 %v232, %v554
  %v618 = vmul.f32 %v233, %v554
  %v619 = vmul.f32 %v234, %v554
  %v620 = vmul.f32 %v235, %v554
  %v621 = vmul.f32 %v236, %v554
  %v622 = vmul.f32 %v237, %v554
  %v623 = vmul.f32 %v238, %v554
  %v624 = vmul.f32 %v239, %v554
  %v625 = vmul.f32 %v240, %v554
  %v626 = vmul.f32 %v241, %v554
  %v627 = vmul.f32 %v242, %v554
  %v628 = vmul.f32 %v243, %v554
  %v629 = vmul.f32 %v244, %v554
  %v630 = vmul.f32 %v245, %v554
  %v631 = vmul.f32 %v246, %v554
  %v632 = vmul.f32 %v247, %v554
  %v633 = vmul.f32 %v248, %v554
  %v634 = vmul.f32 %v249, %v554
  %v635 = vmul.f32 %v250, %v554
  %v636 = vmul.f32 %v251, %v554
  %v637 = vmul.f32 %v252, %v554
  %v638 = vmul.f32 %v253, %v554
  %v639 = vmul.f32 %v254, %v554
  %v640 = vmul.f32 %v255, %v554
  %v641 = vmul.f32 %v256, %v554
  %v642 = vmul.f32 %v257, %v554
  %v643 = vmul.f32 %v258, %v554
  %v644 = vmul.f32 %v259, %v554
  %v645 = vmul.f32 %v260, %v554
  %v646 = vmul.f32 %v261, %v554
  %v647 = vmul.f32 %v262, %v554
  %v648 = vmul.f32 %v263, %v554
  %v649 = vmul.f32 %v264, %v554
  %v650 = vmul.f32 %v265, %v554
  %v651 = vmul.f32 %v266, %v554
  %v652 = vmul.f32 %v267, %v554
  %v653 = vmul.f32 %v268, %v554
  %v654 = vmul.f32 %v269, %v554
  %v655 = vmul.f32 %v270, %v554
  %v656 = vmul.f32 %v271, %v554
  %v657 = vmul.f32 %v272, %v554
  %v658 = vmul.f32 %v273, %v554
  %v659 = vmul.f32 %v274, %v554
  %v660 = vmul.f32 %v275, %v554
  %v661 = vmul.f32 %v276, %v554
  %v662 = vmul.f32 %v277, %v554
  %v663 = vmul.f32 %v278, %v554
  %v664 = vmul.f32 %v279, %v554
  %v665 = vmul.f32 %v280, %v554
  %v666 = vmul.f32 %v281, %v554
  %v667 = vmul.f32 %v282, %v554
  %v668 = vmul.f32 %v283, %v554
  %v669 = vmul.f32 %v284, %v554
  %v670 = vmul.f32 %v285, %v554
  %v671 = vmul.f32 %v286, %v554
  %v672 = vmul.f32 %v287, %v554
  %v673 = vmul.f32 %v288, %v554
  %v674 = vmul.f32 %v289, %v554
  %v675 = vmul.f32 %v290, %v554
  %v676 = vmul.f32 %v291, %v554
  %v677 = vmul.f32 %v292, %v554
  %v678 = vmul.f32 %v293, %v554
  %v679 = vmul.f32 %v294, %v554
  %v680 = vmul.f32 %v295, %v554
  %v681 = vmul.f32 %v296, %v554
  %v682 = vmul.f32 %v297, %v554
  %v683 = vmul.f32 %v298, %v554
  %v684 = vmul.f32 %v299, %v554
  %v685 = vmul.f32 %v300, %v554
  %v686 = vmul.f32 %v301, %v554
  %v687 = vmul.f32 %v302, %v554
  %v688 = vmul.f32 %v303, %v554
  %v689 = vmul.f32 %v304, %v554
  %v690 = vmul.f32 %v305, %v554
  %v691 = vmul.f32 %v306, %v554
  %v692 = vmul.f32 %v307, %v554
  %v693 = vmul.f32 %v308, %v554
  %v694 = vmul.f32 %v309, %v554
  %vm835 = vcmask 1046528
  %v836 = vrot.slane %v555, 1
  %v837 = vrot.slane %v556, 1
  %v838 = vsel %vm835, %v836, %v837
  %v839 = vrot.slane %v557, 1
  %v840 = vsel %vm835, %v837, %v839
  %v841 = vrot.slane %v558, 1
  %v842 = vsel %vm835, %v839, %v841
  %v843 = vrot.slane %v559, 1
  %v844 = vsel %vm835, %v841, %v843
  %v845 = vrot.slane %v560, 1
  %v846 = vrot.slane %v561, 1
  %v847 = vsel %vm835, %v845, %v846
  %v848 = vrot.slane %v562, 1
  %v849 = vsel %vm835, %v846, %v848
  %v850 = vrot.slane %v563, 1
  %v851 = vsel %vm835, %v848, %v850
  %v852 = vrot.slane %v564, 1
  %v853 = vsel %vm835, %v850, %v852
  %v854 = vrot.slane %v565, 1
  %v855 = vrot.slane %v566, 1
  %v856 = vsel %vm835, %v854, %v855
  %v857 = vrot.slane %v567, 1
  %v858 = vsel %vm835, %v855, %v857
  %v859 = vrot.slane %v568, 1
  %v860 = vsel %vm835, %v857, %v859
  %v861 = vrot.slane %v569, 1
  %v862 = vsel %vm835, %v859, %v861
  %v863 = vrot.slane %v570, 1
  %v864 = vrot.slane %v571, 1
  %v865 = vsel %vm835, %v863, %v864
  %v866 = vrot.slane %v572, 1
  %v867 = vsel %vm835, %v864, %v866
  %v868 = vrot.slane %v573, 1
  %v869 = vsel %vm835, %v866, %v868
  %v870 = vrot.slane %v574, 1
  %v871 = vsel %vm835, %v868, %v870
  %v872 = vrot.slane %v575, 1
  %v873 = vrot.slane %v576, 1
  %v874 = vsel %vm835, %v872, %v873
  %v875 = vrot.slane %v577, 1
  %v876 = vsel %vm835, %v873, %v875
  %v877 = vrot.slane %v578, 1
  %v878 = vsel %vm835, %v875, %v877
  %v879 = vrot.slane %v579, 1
  %v880 = vsel %vm835, %v877, %v879
  %v881 = vrot.slane %v580, 1
  %v882 = vrot.slane %v581, 1
  %v883 = vsel %vm835, %v881, %v882
  %v884 = vrot.slane %v582, 1
  %v885 = vsel %vm835, %v882, %v884
  %v886 = vrot.slane %v583, 1
  %v887 = vsel %vm835, %v884, %v886
  %v888 = vrot.slane %v584, 1
  %v889 = vsel %vm835, %v886, %v888
  %v890 = vrot.slane %v585, 1
  %v891 = vrot.slane %v586, 1
  %v892 = vsel %vm835, %v890, %v891
  %v893 = vrot.slane %v587, 1
  %v894 = vsel %vm835, %v891, %v893
  %v895 = vrot.slane %v588, 1
  %v896 = vsel %vm835, %v893, %v895
  %v897 = vrot.slane %v589, 1
  %v898 = vsel %vm835, %v895, %v897
  %v899 = vrot.slane %v590, 1
  %v900 = vrot.slane %v591, 1
  %v901 = vsel %vm835, %v899, %v900
  %v902 = vrot.slane %v592, 1
  %v903 = vsel %vm835, %v900, %v902
  %v904 = vrot.slane %v593, 1
  %v905 = vsel %vm835, %v902, %v904
  %v906 = vrot.slane %v594, 1
  %v907 = vsel %vm835, %v904, %v906
  %v908 = vrot.slane %v595, 1
  %v909 = vrot.slane %v596, 1
  %v910 = vsel %vm835, %v908, %v909
  %v911 = vrot.slane %v597, 1
  %v912 = vsel %vm835, %v909, %v911
  %v913 = vrot.slane %v598, 1
  %v914 = vsel %vm835, %v911, %v913
  %v915 = vrot.slane %v599, 1
  %v916 = vsel %vm835, %v913, %v915
  %v917 = vrot.slane %v600, 1
  %v918 = vrot.slane %v601, 1
  %v919 = vsel %vm835, %v917, %v918
  %v920 = vrot.slane %v602, 1
  %v921 = vsel %vm835, %v918, %v920
  %v922 = vrot.slane %v603, 1
  %v923 = vsel %vm835, %v920, %v922
  %v924 = vrot.slane %v604, 1
  %v925 = vsel %vm835, %v922, %v924
  %v926 = vrot.slane %v605, 1
  %v927 = vrot.slane %v606, 1
  %v928 = vsel %vm835, %v926, %v927
  %v929 = vrot.slane %v607, 1
  %v930 = vsel %vm835, %v927, %v929
  %v931 = vrot.slane %v608, 1
  %v932 = vsel %vm835, %v929, %v931
  %v933 = vrot.slane %v609, 1
  %v934 = vsel %vm835, %v931, %v933
  %v935 = vrot.slane %v610, 1
  %v936 = vrot.slane %v611, 1
  %v937 = vsel %vm835, %v935, %v936
  %v938 = vrot.slane %v612, 1
  %v939 = vsel %vm835, %v936, %v938
  %v940 = vrot.slane %v613, 1
  %v941 = vsel %vm835, %v938, %v940
  %v942 = vrot.slane %v614, 1
  %v943 = vsel %vm835, %v940, %v942
  %v944 = vrot.slane %v615, 1
  %v945 = vrot.slane %v616, 1
  %v946 = vsel %vm835, %v944, %v945
  %v947 = vrot.slane %v617, 1
  %v948 = vsel %vm835, %v945, %v947
  %v949 = vrot.slane %v618, 1
  %v950 = vsel %vm835, %v947, %v949
  %v951 = vrot.slane %v619, 1
  %v952 = vsel %vm835, %v949, %v951
  %v953 = vrot.slane %v620, 1
  %v954 = vrot.slane %v621, 1
  %v955 = vsel %vm835, %v953, %v954
  %v956 = vrot.slane %v622, 1
  %v957 = vsel %vm835, %v954, %v956
  %v958 = vrot.slane %v623, 1
  %v959 = vsel %vm835, %v956, %v958
  %v960 = vrot.slane %v624, 1
  %v961 = vsel %vm835, %v958, %v960
  %v962 = vrot.slane %v625, 1
  %v963 = vrot.slane %v626, 1
  %v964 = vsel %vm835, %v962, %v963
  %v965 = vrot.slane %v627, 1
  %v966 = vsel %vm835, %v963, %v965
  %v967 = vrot.slane %v628, 1
  %v968 = vsel %vm835, %v965, %v967
  %v969 = vrot.slane %v629, 1
  %v970 = vsel %vm835, %v967, %v969
  %v971 = vrot.slane %v630, 1
  %v972 = vrot.slane %v631, 1
  %v973 = vsel %vm835, %v971, %v972
  %v974 = vrot.slane %v632, 1
  %v975 = vsel %vm835, %v972, %v974
  %v976 = vrot.slane %v633, 1
  %v977 = vsel %vm835, %v974, %v976
  %v978 = vrot.slane %v634, 1
  %v979 = vsel %vm835, %v976, %v978
  %v980 = vrot.slane %v635, 1
  %v981 = vrot.slane %v636, 1
  %v982 = vsel %vm835, %v980, %v981
  %v983 = vrot.slane %v637, 1
  %v984 = vsel %vm835, %v981, %v983
  %v985 = vrot.slane %v638, 1
  %v986 = vsel %vm835, %v983, %v985
  %v987 = vrot.slane %v639, 1
  %v988 = vsel %vm835, %v985, %v987
  %v989 = vrot.slane %v640, 1
  %v990 = vrot.slane %v641, 1
  %v991 = vsel %vm835, %v989, %v990
  %v992 = vrot.slane %v642, 1
  %v993 = vsel %vm835, %v990, %v992
  %v994 = vrot.slane %v643, 1
  %v995 = vsel %vm835, %v992, %v994
  %v996 = vrot.slane %v644, 1
  %v997 = vsel %vm835, %v994, %v996
  %v998 = vrot.slane %v645, 1
  %v999 = vrot.slane %v646, 1
  %v1000 = vsel %vm835, %v998, %v999
  %v1001 = vrot.slane %v647, 1
  %v1002 = vsel %vm835, %v999, %v1001
  %v1003 = vrot.slane %v648, 1
  %v1004 = vsel %vm835, %v1001, %v1003
  %v1005 = vrot.slane %v649, 1
  %v1006 = vsel %vm835, %v1003, %v1005
  %v1007 = vrot.slane %v650, 1
  %v1008 = vrot.slane %v651, 1
  %v1009 = vsel %vm835, %v1007, %v1008
  %v1010 = vrot.slane %v652, 1
  %v1011 = vsel %vm835, %v1008, %v1010
  %v1012 = vrot.slane %v653, 1
  %v1013 = vsel %vm835, %v1010, %v1012
  %v1014 = vrot.slane %v654, 1
  %v1015 = vsel %vm835, %v1012, %v1014
  %v1016 = vrot.slane %v655, 1
  %v1017 = vrot.slane %v656, 1
  %v1018 = vsel %vm835, %v1016, %v1017
  %v1019 = vrot.slane %v657, 1
  %v1020 = vsel %vm835, %v1017, %v1019
  %v1021 = vrot.slane %v658, 1
  %v1022 = vsel %vm835, %v1019, %v1021
  %v1023 = vrot.slane %v659, 1
  %v1024 = vsel %vm835, %v1021, %v1023
  %v1025 = vrot.slane %v660, 1
  %v1026 = vrot.slane %v661, 1
  %v1027 = vsel %vm835, %v1025, %v1026
  %v1028 = vrot.slane %v662, 1
  %v1029 = vsel %vm835, %v1026, %v1028
  %v1030 = vrot.slane %v663, 1
  %v1031 = vsel %vm835, %v1028, %v1030
  %v1032 = vrot.slane %v664, 1
  %v1033 = vsel %vm835, %v1030, %v1032
  %v1034 = vrot.slane %v665, 1
  %v1035 = vrot.slane %v666, 1
  %v1036 = vsel %vm835, %v1034, %v1035
  %v1037 = vrot.slane %v667, 1
  %v1038 = vsel %vm835, %v1035, %v1037
  %v1039 = vrot.slane %v668, 1
  %v1040 = vsel %vm835, %v1037, %v1039
  %v1041 = vrot.slane %v669, 1
  %v1042 = vsel %vm835, %v1039, %v1041
  %v1043 = vrot.slane %v670, 1
  %v1044 = vrot.slane %v671, 1
  %v1045 = vsel %vm835, %v1043, %v1044
  %v1046 = vrot.slane %v672, 1
  %v1047 = vsel %vm835, %v1044, %v1046
  %v1048 = vrot.slane %v673, 1
  %v1049 = vsel %vm835, %v1046, %v1048
  %v1050 = vrot.slane %v674, 1
  %v1051 = vsel %vm835, %v1048, %v1050
  %v1052 = vrot.slane %v675, 1
  %v1053 = vrot.slane %v676, 1
  %v1054 = vsel %vm835, %v1052, %v1053
  %v1055 = vrot.slane %v677, 1
  %v1056 = vsel %vm835, %v1053, %v1055
  %v1057 = vrot.slane %v678, 1
  %v1058 = vsel %vm835, %v1055, %v1057
  %v1059 = vrot.slane %v679, 1
  %v1060 = vsel %vm835, %v1057, %v1059
  %v1061 = vrot.slane %v680, 1
  %v1062 = vrot.slane %v681, 1
  %v1063 = vsel %vm835, %v1061, %v1062
  %v1064 = vrot.slane %v682, 1
  %v1065 = vsel %vm835, %v1062, %v1064
  %v1066 = vrot.slane %v683, 1
  %v1067 = vsel %vm835, %v1064, %v1066
  %v1068 = vrot.slane %v684, 1
  %v1069 = vsel %vm835, %v1066, %v1068
  %v1070 = vrot.slane %v685, 1
  %v1071 = vrot.slane %v686, 1
  %v1072 = vsel %vm835, %v1070, %v1071
  %v1073 = vrot.slane %v687, 1
  %v1074 = vsel %vm835, %v1071, %v1073
  %v1075 = vrot.slane %v688, 1
  %v1076 = vsel %vm835, %v1073, %v1075
  %v1077 = vrot.slane %v689, 1
  %v1078 = vsel %vm835, %v1075, %v1077
  %v1079 = vrot.slane %v690, 1
  %v1080 = vrot.slane %v691, 1
  %v1081 = vsel %vm835, %v1079, %v1080
  %v1082 = vrot.slane %v692, 1
  %v1083 = vsel %vm835, %v1080, %v1082
  %v1084 = vrot.slane %v693, 1
  %v1085 = vsel %vm835, %v1082, %v1084
  %v1086 = vrot.slane %v694, 1
  %v1087 = vsel %vm835, %v1084, %v1086
  %v1200 = vadd.f32 %v439, %v838
  %v1201 = vadd.f32 %v440, %v840
  %v1202 = vadd.f32 %v441, %v842
  %v1203 = vadd.f32 %v442, %v844
  %v1204 = vadd.f32 %v443, %v847
  %v1205 = vadd.f32 %v444, %v849
  %v1206 = vadd.f32 %v445, %v851
  %v1207 = vadd.f32 %v446, %v853
  %v1208 = vadd.f32 %v447, %v856
  %v1209 = vadd.f32 %v448, %v858
  %v1210 = vadd.f32 %v449, %v860
  %v1211 = vadd.f32 %v450, %v862
  %v1212 = vadd.f32 %v451, %v865
  %v1213 = vadd.f32 %v452, %v867
  %v1214 = vadd.f32 %v453, %v869
  %v1215 = vadd.f32 %v454, %v871
  %v1216 = vadd.f32 %v455, %v874
  %v1217 = vadd.f32 %v456, %v876
  %v1218 = vadd.f32 %v457, %v878
  %v1219 = vadd.f32 %v458, %v880
  %v1220 = vadd.f32 %v459, %v883
  %v1221 = vadd.f32 %v460, %v885
  %v1222 = vadd.f32 %v461, %v887
  %v1223 = vadd.f32 %v462, %v889
  %v1224 = vadd.f32 %v463, %v892
  %v1225 = vadd.f32 %v464, %v894
  %v1226 = vadd.f32 %v465, %v896
  %v1227 = vadd.f32 %v466, %v898
  %v1228 = vadd.f32 %v467, %v901
  %v1229 = vadd.f32 %v468, %v903
  %v1230 = vadd.f32 %v469, %v905
  %v1231 = vadd.f32 %v470, %v907
  %v1232 = vadd.f32 %v471, %v910
  %v1233 = vadd.f32 %v472, %v912
  %v1234 = vadd.f32 %v473, %v914
  %v1235 = vadd.f32 %v474, %v916
  %v1236 = vadd.f32 %v475, %v919
  %v1237 = vadd.f32 %v476, %v921
  %v1238 = vadd.f32 %v477, %v923
  %v1239 = vadd.f32 %v478, %v925
  %v1240 = vadd.f32 %v479, %v928
  %v1241 = vadd.f32 %v480, %v930
  %v1242 = vadd.f32 %v481, %v932
  %v1243 = vadd.f32 %v482, %v934
  %v1244 = vadd.f32 %v483, %v937
  %v1245 = vadd.f32 %v484, %v939
  %v1246 = vadd.f32 %v485, %v941
  %v1247 = vadd.f32 %v486, %v943
  %v1248 = vadd.f32 %v487, %v946
  %v1249 = vadd.f32 %v488, %v948
  %v1250 = vadd.f32 %v489, %v950
  %v1251 = vadd.f32 %v490, %v952
  %v1252 = vadd.f32 %v491, %v955
  %v1253 = vadd.f32 %v492, %v957
  %v1254 = vadd.f32 %v493, %v959
  %v1255 = vadd.f32 %v494, %v961
  %v1256 = vadd.f32 %v495, %v964
  %v1257 = vadd.f32 %v496, %v966
  %v1258 = vadd.f32 %v497, %v968
  %v1259 = vadd.f32 %v498, %v970
  %v1260 = vadd.f32 %v499, %v973
  %v1261 = vadd.f32 %v500, %v975
  %v1262 = vadd.f32 %v501, %v977
  %v1263 = vadd.f32 %v502, %v979
  %v1264 = vadd.f32 %v503, %v982
  %v1265 = vadd.f32 %v504, %v984
  %v1266 = vadd.f32 %v505, %v986
  %v1267 = vadd.f32 %v506, %v988
  %v1268 = vadd.f32 %v507, %v991
  %v1269 = vadd.f32 %v508, %v993
  %v1270 = vadd.f32 %v509, %v995
  %v1271 = vadd.f32 %v510, %v997
  %v1272 = vadd.f32 %v511, %v1000
  %v1273 = vadd.f32 %v512, %v1002
  %v1274 = vadd.f32 %v513, %v1004
  %v1275 = vadd.f32 %v514, %v1006
  %v1276 = vadd.f32 %v515, %v1009
  %v1277 = vadd.f32 %v516, %v1011
  %v1278 = vadd.f32 %v517, %v1013
  %v1279 = vadd.f32 %v518, %v1015
  %v1280 = vadd.f32 %v519, %v1018
  %v1281 = vadd.f32 %v520, %v1020
  %v1282 = vadd.f32 %v521, %v1022
  %v1283 = vadd.f32 %v522, %v1024
  %v1284 = vadd.f32 %v523, %v1027
  %v1285 = vadd.f32 %v524, %v1029
  %v1286 = vadd.f32 %v525, %v1031
  %v1287 = vadd.f32 %v526, %v1033
  %v1288 = vadd.f32 %v527, %v1036
  %v1289 = vadd.f32 %v528, %v1038
  %v1290 = vadd.f32 %v529, %v1040
  %v1291 = vadd.f32 %v530, %v1042
  %v1292 = vadd.f32 %v531, %v1045
  %v1293 = vadd.f32 %v532, %v1047
  %v1294 = vadd.f32 %v533, %v1049
  %v1295 = vadd.f32 %v534, %v1051
  %v1296 = vadd.f32 %v535, %v1054
  %v1297 = vadd.f32 %v536, %v1056
  %v1298 = vadd.f32 %v537, %v1058
  %v1299 = vadd.f32 %v538, %v1060
  %v1300 = vadd.f32 %v539, %v1063
  %v1301 = vadd.f32 %v540, %v1065
  %v1302 = vadd.f32 %v541, %v1067
  %v1303 = vadd.f32 %v542, %v1069
  %v1304 = vadd.f32 %v543, %v1072
  %v1305 = vadd.f32 %v544, %v1074
  %v1306 = vadd.f32 %v545, %v1076
  %v1307 = vadd.f32 %v546, %v1078
  %v1308 = vadd.f32 %v547, %v1081
  %v1309 = vadd.f32 %v548, %v1083
  %v1310 = vadd.f32 %v549, %v1085
  %v1311 = vadd.f32 %v550, %v1087
  %v1312 = vlaneseq
  %v1313 = vshrl.u32 %v1312, 7
  %v1314 = vsub.s32 2, %v1313
  %v1315 = vrot.slane %v320, %v1314
  %v1316 = vmul.f32 %v170, %v1315
  %v1317 = vmul.f32 %v171, %v1315
  %v1318 = vmul.f32 %v172, %v1315
  %v1319 = vmul.f32 %v173, %v1315
  %v1320 = vmul.f32 %v174, %v1315
  %v1321 = vmul.f32 %v175, %v1315
  %v1322 = vmul.f32 %v176, %v1315
  %v1323 = vmul.f32 %v177, %v1315
  %v1324 = vmul.f32 %v178, %v1315
  %v1325 = vmul.f32 %v179, %v1315
  %v1326 = vmul.f32 %v180, %v1315
  %v1327 = vmul.f32 %v181, %v1315
  %v1328 = vmul.f32 %v182, %v1315
  %v1329 = vmul.f32 %v183, %v1315
  %v1330 = vmul.f32 %v184, %v1315
  %v1331 = vmul.f32 %v185, %v1315
  %v1332 = vmul.f32 %v186, %v1315
  %v1333 = vmul.f32 %v187, %v1315
  %v1334 = vmul.f32 %v188, %v1315
  %v1335 = vmul.f32 %v189, %v1315
  %v1336 = vmul.f32 %v190, %v1315
  %v1337 = vmul.f32 %v191, %v1315
  %v1338 = vmul.f32 %v192, %v1315
  %v1339 = vmul.f32 %v193, %v1315
  %v1340 = vmul.f32 %v194, %v1315
  %v1341 = vmul.f32 %v195, %v1315
  %v1342 = vmul.f32 %v196, %v1315
  %v1343 = vmul.f32 %v197, %v1315
  %v1344 = vmul.f32 %v198, %v1315
  %v1345 = vmul.f32 %v199, %v1315
  %v1346 = vmul.f32 %v200, %v1315
  %v1347 = vmul.f32 %v201, %v1315
  %v1348 = vmul.f32 %v202, %v1315
  %v1349 = vmul.f32 %v203, %v1315
  %v1350 = vmul.f32 %v204, %v1315
  %v1351 = vmul.f32 %v205, %v1315
  %v1352 = vmul.f32 %v206, %v1315
  %v1353 = vmul.f32 %v207, %v1315
  %v1354 = vmul.f32 %v208, %v1315
  %v1355 = vmul.f32 %v209, %v1315
  %v1356 = vmul.f32 %v210, %v1315
  %v1357 = vmul.f32 %v211, %v1315
  %v1358 = vmul.f32 %v212, %v1315
  %v1359 = vmul.f32 %v213, %v1315
  %v1360 = vmul.f32 %v214, %v1315
  %v1361 = vmul.f32 %v215, %v1315
  %v1362 = vmul.f32 %v216, %v1315
  %v1363 = vmul.f32 %v217, %v1315
  %v1364 = vmul.f32 %v218, %v1315
  %v1365 = vmul.f32 %v219, %v1315
  %v1366 = vmul.f32 %v220, %v1315
  %v1367 = vmul.f32 %v221, %v1315
  %v1368 = vmul.f32 %v222, %v1315
  %v1369 = vmul.f32 %v223, %v1315
  %v1370 = vmul.f32 %v224, %v1315
  %v1371 = vmul.f32 %v225, %v1315
  %v1372 = vmul.f32 %v226, %v1315
  %v1373 = vmul.f32 %v227, %v1315
  %v1374 = vmul.f32 %v228, %v1315
  %v1375 = vmul.f32 %v229, %v1315
  %v1376 = vmul.f32 %v230, %v1315
  %v1377 = vmul.f32 %v231, %v1315
  %v1378 = vmul.f32 %v232, %v1315
  %v1379 = vmul.f32 %v233, %v1315
  %v1380 = vmul.f32 %v234, %v1315
  %v1381 = vmul.f32 %v235, %v1315
  %v1382 = vmul.f32 %v236, %v1315
  %v1383 = vmul.f32 %v237, %v1315
  %v1384 = vmul.f32 %v238, %v1315
  %v1385 = vmul.f32 %v239, %v1315
  %v1386 = vmul.f32 %v240, %v1315
  %v1387 = vmul.f32 %v241, %v1315
  %v1388 = vmul.f32 %v242, %v1315
  %v1389 = vmul.f32 %v243, %v1315
  %v1390 = vmul.f32 %v244, %v1315
  %v1391 = vmul.f32 %v245, %v1315
  %v1392 = vmul.f32 %v246, %v1315
  %v1393 = vmul.f32 %v247, %v1315
  %v1394 = vmul.f32 %v248, %v1315
  %v1395 = vmul.f32 %v249, %v1315
  %v1396 = vmul.f32 %v250, %v1315
  %v1397 = vmul.f32 %v251, %v1315
  %v1398 = vmul.f32 %v252, %v1315
  %v1399 = vmul.f32 %v253, %v1315
  %v1400 = vmul.f32 %v254, %v1315
  %v1401 = vmul.f32 %v255, %v1315
  %v1402 = vmul.f32 %v256, %v1315
  %v1403 = vmul.f32 %v257, %v1315
  %v1404 = vmul.f32 %v258, %v1315
  %v1405 = vmul.f32 %v259, %v1315
  %v1406 = vmul.f32 %v260, %v1315
  %v1407 = vmul.f32 %v261, %v1315
  %v1408 = vmul.f32 %v262, %v1315
  %v1409 = vmul.f32 %v263, %v1315
  %v1410 = vmul.f32 %v264, %v1315
  %v1411 = vmul.f32 %v265, %v1315
  %v1412 = vmul.f32 %v266, %v1315
  %v1413 = vmul.f32 %v267, %v1315
  %v1414 = vmul.f32 %v268, %v1315
  %v1415 = vmul.f32 %v269, %v1315
  %v1416 = vmul.f32 %v270, %v1315
  %v1417 = vmul.f32 %v271, %v1315
  %v1418 = vmul.f32 %v272, %v1315
  %v1419 = vmul.f32 %v273, %v1315
  %v1420 = vmul.f32 %v274, %v1315
  %v1421 = vmul.f32 %v275, %v1315
  %v1422 = vmul.f32 %v276, %v1315
  %v1423 = vmul.f32 %v277, %v1315
  %v1424 = vmul.f32 %v278, %v1315
  %v1425 = vmul.f32 %v279, %v1315
  %v1426 = vmul.f32 %v280, %v1315
  %v1427 = vmul.f32 %v281, %v1315
  %v1428 = vmul.f32 %v282, %v1315
  %v1429 = vmul.f32 %v283, %v1315
  %v1430 = vmul.f32 %v284, %v1315
  %v1431 = vmul.f32 %v285, %v1315
  %v1432 = vmul.f32 %v286, %v1315
  %v1433 = vmul.f32 %v287, %v1315
  %v1434 = vmul.f32 %v288, %v1315
  %v1435 = vmul.f32 %v289, %v1315
  %v1436 = vmul.f32 %v290, %v1315
  %v1437 = vmul.f32 %v291, %v1315
  %v1438 = vmul.f32 %v292, %v1315
  %v1439 = vmul.f32 %v293, %v1315
  %v1440 = vmul.f32 %v294, %v1315
  %v1441 = vmul.f32 %v295, %v1315
  %v1442 = vmul.f32 %v296, %v1315
  %v1443 = vmul.f32 %v297, %v1315
  %v1444 = vmul.f32 %v298, %v1315
  %v1445 = vmul.f32 %v299, %v1315
  %v1446 = vmul.f32 %v300, %v1315
  %v1447 = vmul.f32 %v301, %v1315
  %v1448 = vmul.f32 %v302, %v1315
  %v1449 = vmul.f32 %v303, %v1315
  %v1450 = vmul.f32 %v304, %v1315
  %v1451 = vmul.f32 %v305, %v1315
  %v1452 = vmul.f32 %v306, %v1315
  %v1453 = vmul.f32 %v307, %v1315
  %v1454 = vmul.f32 %v308, %v1315
  %v1455 = vmul.f32 %v309, %v1315
  %vm1596 = vcmask 1045504
  %v1597 = vrot.slane %v1316, 2
  %v1598 = vrot.slane %v1317, 2
  %v1599 = vsel %vm1596, %v1597, %v1598
  %v1600 = vrot.slane %v1318, 2
  %v1601 = vsel %vm1596, %v1598, %v1600
  %v1602 = vrot.slane %v1319, 2
  %v1603 = vsel %vm1596, %v1600, %v1602
  %v1604 = vrot.slane %v1320, 2
  %v1605 = vsel %vm1596, %v1602, %v1604
  %v1606 = vrot.slane %v1321, 2
  %v1607 = vrot.slane %v1322, 2
  %v1608 = vsel %vm1596, %v1606, %v1607
  %v1609 = vrot.slane %v1323, 2
  %v1610 = vsel %vm1596, %v1607, %v1609
  %v1611 = vrot.slane %v1324, 2
  %v1612 = vsel %vm1596, %v1609, %v1611
  %v1613 = vrot.slane %v1325, 2
  %v1614 = vsel %vm1596, %v1611, %v1613
  %v1615 = vrot.slane %v1326, 2
  %v1616 = vrot.slane %v1327, 2
  %v1617 = vsel %vm1596, %v1615, %v1616
  %v1618 = vrot.slane %v1328, 2
  %v1619 = vsel %vm1596, %v1616, %v1618
  %v1620 = vrot.slane %v1329, 2
  %v1621 = vsel %vm1596, %v1618, %v1620
  %v1622 = vrot.slane %v1330, 2
  %v1623 = vsel %vm1596, %v1620, %v1622
  %v1624 = vrot.slane %v1331, 2
  %v1625 = vrot.slane %v1332, 2
  %v1626 = vsel %vm1596, %v1624, %v1625
  %v1627 = vrot.slane %v1333, 2
  %v1628 = vsel %vm1596, %v1625, %v1627
  %v1629 = vrot.slane %v1334, 2
  %v1630 = vsel %vm1596, %v1627, %v1629
  %v1631 = vrot.slane %v1335, 2
  %v1632 = vsel %vm1596, %v1629, %v1631
  %v1633 = vrot.slane %v1336, 2
  %v1634 = vrot.slane %v1337, 2
  %v1635 = vsel %vm1596, %v1633, %v1634
  %v1636 = vrot.slane %v1338, 2
  %v1637 = vsel %vm1596, %v1634, %v1636
  %v1638 = vrot.slane %v1339, 2
  %v1639 = vsel %vm1596, %v1636, %v1638
  %v1640 = vrot.slane %v1340, 2
  %v1641 = vsel %vm1596, %v1638, %v1640
  %v1642 = vrot.slane %v1341, 2
  %v1643 = vrot.slane %v1342, 2
  %v1644 = vsel %vm1596, %v1642, %v1643
  %v1645 = vrot.slane %v1343, 2
  %v1646 = vsel %vm1596, %v1643, %v1645
  %v1647 = vrot.slane %v1344, 2
  %v1648 = vsel %vm1596, %v1645, %v1647
  %v1649 = vrot.slane %v1345, 2
  %v1650 = vsel %vm1596, %v1647, %v1649
  %v1651 = vrot.slane %v1346, 2
  %v1652 = vrot.slane %v1347, 2
  %v1653 = vsel %vm1596, %v1651, %v1652
  %v1654 = vrot.slane %v1348, 2
  %v1655 = vsel %vm1596, %v1652, %v1654
  %v1656 = vrot.slane %v1349, 2
  %v1657 = vsel %vm1596, %v1654, %v1656
  %v1658 = vrot.slane %v1350, 2
  %v1659 = vsel %vm1596, %v1656, %v1658
  %v1660 = vrot.slane %v1351, 2
  %v1661 = vrot.slane %v1352, 2
  %v1662 = vsel %vm1596, %v1660, %v1661
  %v1663 = vrot.slane %v1353, 2
  %v1664 = vsel %vm1596, %v1661, %v1663
  %v1665 = vrot.slane %v1354, 2
  %v1666 = vsel %vm1596, %v1663, %v1665
  %v1667 = vrot.slane %v1355, 2
  %v1668 = vsel %vm1596, %v1665, %v1667
  %v1669 = vrot.slane %v1356, 2
  %v1670 = vrot.slane %v1357, 2
  %v1671 = vsel %vm1596, %v1669, %v1670
  %v1672 = vrot.slane %v1358, 2
  %v1673 = vsel %vm1596, %v1670, %v1672
  %v1674 = vrot.slane %v1359, 2
  %v1675 = vsel %vm1596, %v1672, %v1674
  %v1676 = vrot.slane %v1360, 2
  %v1677 = vsel %vm1596, %v1674, %v1676
  %v1678 = vrot.slane %v1361, 2
  %v1679 = vrot.slane %v1362, 2
  %v1680 = vsel %vm1596, %v1678, %v1679
  %v1681 = vrot.slane %v1363, 2
  %v1682 = vsel %vm1596, %v1679, %v1681
  %v1683 = vrot.slane %v1364, 2
  %v1684 = vsel %vm1596, %v1681, %v1683
  %v1685 = vrot.slane %v1365, 2
  %v1686 = vsel %vm1596, %v1683, %v1685
  %v1687 = vrot.slane %v1366, 2
  %v1688 = vrot.slane %v1367, 2
  %v1689 = vsel %vm1596, %v1687, %v1688
  %v1690 = vrot.slane %v1368, 2
  %v1691 = vsel %vm1596, %v1688, %v1690
  %v1692 = vrot.slane %v1369, 2
  %v1693 = vsel %vm1596, %v1690, %v1692
  %v1694 = vrot.slane %v1370, 2
  %v1695 = vsel %vm1596, %v1692, %v1694
  %v1696 = vrot.slane %v1371, 2
  %v1697 = vrot.slane %v1372, 2
  %v1698 = vsel %vm1596, %v1696, %v1697
  %v1699 = vrot.slane %v1373, 2
  %v1700 = vsel %vm1596, %v1697, %v1699
  %v1701 = vrot.slane %v1374, 2
  %v1702 = vsel %vm1596, %v1699, %v1701
  %v1703 = vrot.slane %v1375, 2
  %v1704 = vsel %vm1596, %v1701, %v1703
  %v1705 = vrot.slane %v1376, 2
  %v1706 = vrot.slane %v1377, 2
  %v1707 = vsel %vm1596, %v1705, %v1706
  %v1708 = vrot.slane %v1378, 2
  %v1709 = vsel %vm1596, %v1706, %v1708
  %v1710 = vrot.slane %v1379, 2
  %v1711 = vsel %vm1596, %v1708, %v1710
  %v1712 = vrot.slane %v1380, 2
  %v1713 = vsel %vm1596, %v1710, %v1712
  %v1714 = vrot.slane %v1381, 2
  %v1715 = vrot.slane %v1382, 2
  %v1716 = vsel %vm1596, %v1714, %v1715
  %v1717 = vrot.slane %v1383, 2
  %v1718 = vsel %vm1596, %v1715, %v1717
  %v1719 = vrot.slane %v1384, 2
  %v1720 = vsel %vm1596, %v1717, %v1719
  %v1721 = vrot.slane %v1385, 2
  %v1722 = vsel %vm1596, %v1719, %v1721
  %v1723 = vrot.slane %v1386, 2
  %v1724 = vrot.slane %v1387, 2
  %v1725 = vsel %vm1596, %v1723, %v1724
  %v1726 = vrot.slane %v1388, 2
  %v1727 = vsel %vm1596, %v1724, %v1726
  %v1728 = vrot.slane %v1389, 2
  %v1729 = vsel %vm1596, %v1726, %v1728
  %v1730 = vrot.slane %v1390, 2
  %v1731 = vsel %vm1596, %v1728, %v1730
  %v1732 = vrot.slane %v1391, 2
  %v1733 = vrot.slane %v1392, 2
  %v1734 = vsel %vm1596, %v1732, %v1733
  %v1735 = vrot.slane %v1393, 2
  %v1736 = vsel %vm1596, %v1733, %v1735
  %v1737 = vrot.slane %v1394, 2
  %v1738 = vsel %vm1596, %v1735, %v1737
  %v1739 = vrot.slane %v1395, 2
  %v1740 = vsel %vm1596, %v1737, %v1739
  %v1741 = vrot.slane %v1396, 2
  %v1742 = vrot.slane %v1397, 2
  %v1743 = vsel %vm1596, %v1741, %v1742
  %v1744 = vrot.slane %v1398, 2
  %v1745 = vsel %vm1596, %v1742, %v1744
  %v1746 = vrot.slane %v1399, 2
  %v1747 = vsel %vm1596, %v1744, %v1746
  %v1748 = vrot.slane %v1400, 2
  %v1749 = vsel %vm1596, %v1746, %v1748
  %v1750 = vrot.slane %v1401, 2
  %v1751 = vrot.slane %v1402, 2
  %v1752 = vsel %vm1596, %v1750, %v1751
  %v1753 = vrot.slane %v1403, 2
  %v1754 = vsel %vm1596, %v1751, %v1753
  %v1755 = vrot.slane %v1404, 2
  %v1756 = vsel %vm1596, %v1753, %v1755
  %v1757 = vrot.slane %v1405, 2
  %v1758 = vsel %vm1596, %v1755, %v1757
  %v1759 = vrot.slane %v1406, 2
  %v1760 = vrot.slane %v1407, 2
  %v1761 = vsel %vm1596, %v1759, %v1760
  %v1762 = vrot.slane %v1408, 2
  %v1763 = vsel %vm1596, %v1760, %v1762
  %v1764 = vrot.slane %v1409, 2
  %v1765 = vsel %vm1596, %v1762, %v1764
  %v1766 = vrot.slane %v1410, 2
  %v1767 = vsel %vm1596, %v1764, %v1766
  %v1768 = vrot.slane %v1411, 2
  %v1769 = vrot.slane %v1412, 2
  %v1770 = vsel %vm1596, %v1768, %v1769
  %v1771 = vrot.slane %v1413, 2
  %v1772 = vsel %vm1596, %v1769, %v1771
  %v1773 = vrot.slane %v1414, 2
  %v1774 = vsel %vm1596, %v1771, %v1773
  %v1775 = vrot.slane %v1415, 2
  %v1776 = vsel %vm1596, %v1773, %v1775
  %v1777 = vrot.slane %v1416, 2
  %v1778 = vrot.slane %v1417, 2
  %v1779 = vsel %vm1596, %v1777, %v1778
  %v1780 = vrot.slane %v1418, 2
  %v1781 = vsel %vm1596, %v1778, %v1780
  %v1782 = vrot.slane %v1419, 2
  %v1783 = vsel %vm1596, %v1780, %v1782
  %v1784 = vrot.slane %v1420, 2
  %v1785 = vsel %vm1596, %v1782, %v1784
  %v1786 = vrot.slane %v1421, 2
  %v1787 = vrot.slane %v1422, 2
  %v1788 = vsel %vm1596, %v1786, %v1787
  %v1789 = vrot.slane %v1423, 2
  %v1790 = vsel %vm1596, %v1787, %v1789
  %v1791 = vrot.slane %v1424, 2
  %v1792 = vsel %vm1596, %v1789, %v1791
  %v1793 = vrot.slane %v1425, 2
  %v1794 = vsel %vm1596, %v1791, %v1793
  %v1795 = vrot.slane %v1426, 2
  %v1796 = vrot.slane %v1427, 2
  %v1797 = vsel %vm1596, %v1795, %v1796
  %v1798 = vrot.slane %v1428, 2
  %v1799 = vsel %vm1596, %v1796, %v1798
  %v1800 = vrot.slane %v1429, 2
  %v1801 = vsel %vm1596, %v1798, %v1800
  %v1802 = vrot.slane %v1430, 2
  %v1803 = vsel %vm1596, %v1800, %v1802
  %v1804 = vrot.slane %v1431, 2
  %v1805 = vrot.slane %v1432, 2
  %v1806 = vsel %vm1596, %v1804, %v1805
  %v1807 = vrot.slane %v1433, 2
  %v1808 = vsel %vm1596, %v1805, %v1807
  %v1809 = vrot.slane %v1434, 2
  %v1810 = vsel %vm1596, %v1807, %v1809
  %v1811 = vrot.slane %v1435, 2
  %v1812 = vsel %vm1596, %v1809, %v1811
  %v1813 = vrot.slane %v1436, 2
  %v1814 = vrot.slane %v1437, 2
  %v1815 = vsel %vm1596, %v1813, %v1814
  %v1816 = vrot.slane %v1438, 2
  %v1817 = vsel %vm1596, %v1814, %v1816
  %v1818 = vrot.slane %v1439, 2
  %v1819 = vsel %vm1596, %v1816, %v1818
  %v1820 = vrot.slane %v1440, 2
  %v1821 = vsel %vm1596, %v1818, %v1820
  %v1822 = vrot.slane %v1441, 2
  %v1823 = vrot.slane %v1442, 2
  %v1824 = vsel %vm1596, %v1822, %v1823
  %v1825 = vrot.slane %v1443, 2
  %v1826 = vsel %vm1596, %v1823, %v1825
  %v1827 = vrot.slane %v1444, 2
  %v1828 = vsel %vm1596, %v1825, %v1827
  %v1829 = vrot.slane %v1445, 2
  %v1830 = vsel %vm1596, %v1827, %v1829
  %v1831 = vrot.slane %v1446, 2
  %v1832 = vrot.slane %v1447, 2
  %v1833 = vsel %vm1596, %v1831, %v1832
  %v1834 = vrot.slane %v1448, 2
  %v1835 = vsel %vm1596, %v1832, %v1834
  %v1836 = vrot.slane %v1449, 2
  %v1837 = vsel %vm1596, %v1834, %v1836
  %v1838 = vrot.slane %v1450, 2
  %v1839 = vsel %vm1596, %v1836, %v1838
  %v1840 = vrot.slane %v1451, 2
  %v1841 = vrot.slane %v1452, 2
  %v1842 = vsel %vm1596, %v1840, %v1841
  %v1843 = vrot.slane %v1453, 2
  %v1844 = vsel %vm1596, %v1841, %v1843
  %v1845 = vrot.slane %v1454, 2
  %v1846 = vsel %vm1596, %v1843, %v1845
  %v1847 = vrot.slane %v1455, 2
  %v1848 = vsel %vm1596, %v1845, %v1847
  %v1961 = vadd.f32 %v1200, %v1599
  %v1962 = vadd.f32 %v1201, %v1601
  %v1963 = vadd.f32 %v1202, %v1603
  %v1964 = vadd.f32 %v1203, %v1605
  %v1965 = vadd.f32 %v1204, %v1608
  %v1966 = vadd.f32 %v1205, %v1610
  %v1967 = vadd.f32 %v1206, %v1612
  %v1968 = vadd.f32 %v1207, %v1614
  %v1969 = vadd.f32 %v1208, %v1617
  %v1970 = vadd.f32 %v1209, %v1619
  %v1971 = vadd.f32 %v1210, %v1621
  %v1972 = vadd.f32 %v1211, %v1623
  %v1973 = vadd.f32 %v1212, %v1626
  %v1974 = vadd.f32 %v1213, %v1628
  %v1975 = vadd.f32 %v1214, %v1630
  %v1976 = vadd.f32 %v1215, %v1632
  %v1977 = vadd.f32 %v1216, %v1635
  %v1978 = vadd.f32 %v1217, %v1637
  %v1979 = vadd.f32 %v1218, %v1639
  %v1980 = vadd.f32 %v1219, %v1641
  %v1981 = vadd.f32 %v1220, %v1644
  %v1982 = vadd.f32 %v1221, %v1646
  %v1983 = vadd.f32 %v1222, %v1648
  %v1984 = vadd.f32 %v1223, %v1650
  %v1985 = vadd.f32 %v1224, %v1653
  %v1986 = vadd.f32 %v1225, %v1655
  %v1987 = vadd.f32 %v1226, %v1657
  %v1988 = vadd.f32 %v1227, %v1659
  %v1989 = vadd.f32 %v1228, %v1662
  %v1990 = vadd.f32 %v1229, %v1664
  %v1991 = vadd.f32 %v1230, %v1666
  %v1992 = vadd.f32 %v1231, %v1668
  %v1993 = vadd.f32 %v1232, %v1671
  %v1994 = vadd.f32 %v1233, %v1673
  %v1995 = vadd.f32 %v1234, %v1675
  %v1996 = vadd.f32 %v1235, %v1677
  %v1997 = vadd.f32 %v1236, %v1680
  %v1998 = vadd.f32 %v1237, %v1682
  %v1999 = vadd.f32 %v1238, %v1684
  %v2000 = vadd.f32 %v1239, %v1686
  %v2001 = vadd.f32 %v1240, %v1689
  %v2002 = vadd.f32 %v1241, %v1691
  %v2003 = vadd.f32 %v1242, %v1693
  %v2004 = vadd.f32 %v1243, %v1695
  %v2005 = vadd.f32 %v1244, %v1698
  %v2006 = vadd.f32 %v1245, %v1700
  %v2007 = vadd.f32 %v1246, %v1702
  %v2008 = vadd.f32 %v1247, %v1704
  %v2009 = vadd.f32 %v1248, %v1707
  %v2010 = vadd.f32 %v1249, %v1709
  %v2011 = vadd.f32 %v1250, %v1711
  %v2012 = vadd.f32 %v1251, %v1713
  %v2013 = vadd.f32 %v1252, %v1716
  %v2014 = vadd.f32 %v1253, %v1718
  %v2015 = vadd.f32 %v1254, %v1720
  %v2016 = vadd.f32 %v1255, %v1722
  %v2017 = vadd.f32 %v1256, %v1725
  %v2018 = vadd.f32 %v1257, %v1727
  %v2019 = vadd.f32 %v1258, %v1729
  %v2020 = vadd.f32 %v1259, %v1731
  %v2021 = vadd.f32 %v1260, %v1734
  %v2022 = vadd.f32 %v1261, %v1736
  %v2023 = vadd.f32 %v1262, %v1738
  %v2024 = vadd.f32 %v1263, %v1740
  %v2025 = vadd.f32 %v1264, %v1743
  %v2026 = vadd.f32 %v1265, %v1745
  %v2027 = vadd.f32 %v1266, %v1747
  %v2028 = vadd.f32 %v1267, %v1749
  %v2029 = vadd.f32 %v1268, %v1752
  %v2030 = vadd.f32 %v1269, %v1754
  %v2031 = vadd.f32 %v1270, %v1756
  %v2032 = vadd.f32 %v1271, %v1758
  %v2033 = vadd.f32 %v1272, %v1761
  %v2034 = vadd.f32 %v1273, %v1763
  %v2035 = vadd.f32 %v1274, %v1765
  %v2036 = vadd.f32 %v1275, %v1767
  %v2037 = vadd.f32 %v1276, %v1770
  %v2038 = vadd.f32 %v1277, %v1772
  %v2039 = vadd.f32 %v1278, %v1774
  %v2040 = vadd.f32 %v1279, %v1776
  %v2041 = vadd.f32 %v1280, %v1779
  %v2042 = vadd.f32 %v1281, %v1781
  %v2043 = vadd.f32 %v1282, %v1783
  %v2044 = vadd.f32 %v1283, %v1785
  %v2045 = vadd.f32 %v1284, %v1788
  %v2046 = vadd.f32 %v1285, %v1790
  %v2047 = vadd.f32 %v1286, %v1792
  %v2048 = vadd.f32 %v1287, %v1794
  %v2049 = vadd.f32 %v1288, %v1797
  %v2050 = vadd.f32 %v1289, %v1799
  %v2051 = vadd.f32 %v1290, %v1801
  %v2052 = vadd.f32 %v1291, %v1803
  %v2053 = vadd.f32 %v1292, %v1806
  %v2054 = vadd.f32 %v1293, %v1808
  %v2055 = vadd.f32 %v1294, %v1810
  %v2056 = vadd.f32 %v1295, %v1812
  %v2057 = vadd.f32 %v1296, %v1815
  %v2058 = vadd.f32 %v1297, %v1817
  %v2059 = vadd.f32 %v1298, %v1819
  %v2060 = vadd.f32 %v1299, %v1821
  %v2061 = vadd.f32 %v1300, %v1824
  %v2062 = vadd.f32 %v1301, %v1826
  %v2063 = vadd.f32 %v1302, %v1828
  %v2064 = vadd.f32 %v1303, %v1830
  %v2065 = vadd.f32 %v1304, %v1833
  %v2066 = vadd.f32 %v1305, %v1835
  %v2067 = vadd.f32 %v1306, %v1837
  %v2068 = vadd.f32 %v1307, %v1839
  %v2069 = vadd.f32 %v1308, %v1842
  %v2070 = vadd.f32 %v1309, %v1844
  %v2071 = vadd.f32 %v1310, %v1846
  %v2072 = vadd.f32 %v1311, %v1848
  %v2073 = vlaneseq
  %v2074 = vshrl.u32 %v2073, 7
  %v2075 = vsub.s32 0, %v2074
  %v2076 = vrot.slane %v321, %v2075
  %v2077 = vmul.f32 %v175, %v2076
  %v2078 = vmul.f32 %v176, %v2076
  %v2079 = vmul.f32 %v177, %v2076
  %v2080 = vmul.f32 %v178, %v2076
  %v2081 = vmul.f32 %v180, %v2076
  %v2082 = vmul.f32 %v181, %v2076
  %v2083 = vmul.f32 %v182, %v2076
  %v2084 = vmul.f32 %v183, %v2076
  %v2085 = vmul.f32 %v185, %v2076
  %v2086 = vmul.f32 %v186, %v2076
  %v2087 = vmul.f32 %v187, %v2076
  %v2088 = vmul.f32 %v188, %v2076
  %v2089 = vmul.f32 %v190, %v2076
  %v2090 = vmul.f32 %v191, %v2076
  %v2091 = vmul.f32 %v192, %v2076
  %v2092 = vmul.f32 %v193, %v2076
  %v2093 = vmul.f32 %v195, %v2076
  %v2094 = vmul.f32 %v196, %v2076
  %v2095 = vmul.f32 %v197, %v2076
  %v2096 = vmul.f32 %v198, %v2076
  %v2097 = vmul.f32 %v200, %v2076
  %v2098 = vmul.f32 %v201, %v2076
  %v2099 = vmul.f32 %v202, %v2076
  %v2100 = vmul.f32 %v203, %v2076
  %v2101 = vmul.f32 %v205, %v2076
  %v2102 = vmul.f32 %v206, %v2076
  %v2103 = vmul.f32 %v207, %v2076
  %v2104 = vmul.f32 %v208, %v2076
  %v2105 = vmul.f32 %v210, %v2076
  %v2106 = vmul.f32 %v211, %v2076
  %v2107 = vmul.f32 %v212, %v2076
  %v2108 = vmul.f32 %v213, %v2076
  %v2109 = vmul.f32 %v215, %v2076
  %v2110 = vmul.f32 %v216, %v2076
  %v2111 = vmul.f32 %v217, %v2076
  %v2112 = vmul.f32 %v218, %v2076
  %v2113 = vmul.f32 %v220, %v2076
  %v2114 = vmul.f32 %v221, %v2076
  %v2115 = vmul.f32 %v222, %v2076
  %v2116 = vmul.f32 %v223, %v2076
  %v2117 = vmul.f32 %v225, %v2076
  %v2118 = vmul.f32 %v226, %v2076
  %v2119 = vmul.f32 %v227, %v2076
  %v2120 = vmul.f32 %v228, %v2076
  %v2121 = vmul.f32 %v230, %v2076
  %v2122 = vmul.f32 %v231, %v2076
  %v2123 = vmul.f32 %v232, %v2076
  %v2124 = vmul.f32 %v233, %v2076
  %v2125 = vmul.f32 %v235, %v2076
  %v2126 = vmul.f32 %v236, %v2076
  %v2127 = vmul.f32 %v237, %v2076
  %v2128 = vmul.f32 %v238, %v2076
  %v2129 = vmul.f32 %v240, %v2076
  %v2130 = vmul.f32 %v241, %v2076
  %v2131 = vmul.f32 %v242, %v2076
  %v2132 = vmul.f32 %v243, %v2076
  %v2133 = vmul.f32 %v245, %v2076
  %v2134 = vmul.f32 %v246, %v2076
  %v2135 = vmul.f32 %v247, %v2076
  %v2136 = vmul.f32 %v248, %v2076
  %v2137 = vmul.f32 %v250, %v2076
  %v2138 = vmul.f32 %v251, %v2076
  %v2139 = vmul.f32 %v252, %v2076
  %v2140 = vmul.f32 %v253, %v2076
  %v2141 = vmul.f32 %v255, %v2076
  %v2142 = vmul.f32 %v256, %v2076
  %v2143 = vmul.f32 %v257, %v2076
  %v2144 = vmul.f32 %v258, %v2076
  %v2145 = vmul.f32 %v260, %v2076
  %v2146 = vmul.f32 %v261, %v2076
  %v2147 = vmul.f32 %v262, %v2076
  %v2148 = vmul.f32 %v263, %v2076
  %v2149 = vmul.f32 %v265, %v2076
  %v2150 = vmul.f32 %v266, %v2076
  %v2151 = vmul.f32 %v267, %v2076
  %v2152 = vmul.f32 %v268, %v2076
  %v2153 = vmul.f32 %v270, %v2076
  %v2154 = vmul.f32 %v271, %v2076
  %v2155 = vmul.f32 %v272, %v2076
  %v2156 = vmul.f32 %v273, %v2076
  %v2157 = vmul.f32 %v275, %v2076
  %v2158 = vmul.f32 %v276, %v2076
  %v2159 = vmul.f32 %v277, %v2076
  %v2160 = vmul.f32 %v278, %v2076
  %v2161 = vmul.f32 %v280, %v2076
  %v2162 = vmul.f32 %v281, %v2076
  %v2163 = vmul.f32 %v282, %v2076
  %v2164 = vmul.f32 %v283, %v2076
  %v2165 = vmul.f32 %v285, %v2076
  %v2166 = vmul.f32 %v286, %v2076
  %v2167 = vmul.f32 %v287, %v2076
  %v2168 = vmul.f32 %v288, %v2076
  %v2169 = vmul.f32 %v290, %v2076
  %v2170 = vmul.f32 %v291, %v2076
  %v2171 = vmul.f32 %v292, %v2076
  %v2172 = vmul.f32 %v293, %v2076
  %v2173 = vmul.f32 %v295, %v2076
  %v2174 = vmul.f32 %v296, %v2076
  %v2175 = vmul.f32 %v297, %v2076
  %v2176 = vmul.f32 %v298, %v2076
  %v2177 = vmul.f32 %v300, %v2076
  %v2178 = vmul.f32 %v301, %v2076
  %v2179 = vmul.f32 %v302, %v2076
  %v2180 = vmul.f32 %v303, %v2076
  %v2181 = vmul.f32 %v305, %v2076
  %v2182 = vmul.f32 %v306, %v2076
  %v2183 = vmul.f32 %v307, %v2076
  %v2184 = vmul.f32 %v308, %v2076
  %v2185 = vmul.f32 %v310, %v2076
  %v2186 = vmul.f32 %v311, %v2076
  %v2187 = vmul.f32 %v312, %v2076
  %v2188 = vmul.f32 %v313, %v2076
  %v2189 = vadd.f32 %v1961, %v2077
  %v2190 = vadd.f32 %v1962, %v2078
  %v2191 = vadd.f32 %v1963, %v2079
  %v2192 = vadd.f32 %v1964, %v2080
  %v2193 = vadd.f32 %v1965, %v2081
  %v2194 = vadd.f32 %v1966, %v2082
  %v2195 = vadd.f32 %v1967, %v2083
  %v2196 = vadd.f32 %v1968, %v2084
  %v2197 = vadd.f32 %v1969, %v2085
  %v2198 = vadd.f32 %v1970, %v2086
  %v2199 = vadd.f32 %v1971, %v2087
  %v2200 = vadd.f32 %v1972, %v2088
  %v2201 = vadd.f32 %v1973, %v2089
  %v2202 = vadd.f32 %v1974, %v2090
  %v2203 = vadd.f32 %v1975, %v2091
  %v2204 = vadd.f32 %v1976, %v2092
  %v2205 = vadd.f32 %v1977, %v2093
  %v2206 = vadd.f32 %v1978, %v2094
  %v2207 = vadd.f32 %v1979, %v2095
  %v2208 = vadd.f32 %v1980, %v2096
  %v2209 = vadd.f32 %v1981, %v2097
  %v2210 = vadd.f32 %v1982, %v2098
  %v2211 = vadd.f32 %v1983, %v2099
  %v2212 = vadd.f32 %v1984, %v2100
  %v2213 = vadd.f32 %v1985, %v2101
  %v2214 = vadd.f32 %v1986, %v2102
  %v2215 = vadd.f32 %v1987, %v2103
  %v2216 = vadd.f32 %v1988, %v2104
  %v2217 = vadd.f32 %v1989, %v2105
  %v2218 = vadd.f32 %v1990, %v2106
  %v2219 = vadd.f32 %v1991, %v2107
  %v2220 = vadd.f32 %v1992, %v2108
  %v2221 = vadd.f32 %v1993, %v2109
  %v2222 = vadd.f32 %v1994, %v2110
  %v2223 = vadd.f32 %v1995, %v2111
  %v2224 = vadd.f32 %v1996, %v2112
  %v2225 = vadd.f32 %v1997, %v2113
  %v2226 = vadd.f32 %v1998, %v2114
  %v2227 = vadd.f32 %v1999, %v2115
  %v2228 = vadd.f32 %v2000, %v2116
  %v2229 = vadd.f32 %v2001, %v2117
  %v2230 = vadd.f32 %v2002, %v2118
  %v2231 = vadd.f32 %v2003, %v2119
  %v2232 = vadd.f32 %v2004, %v2120
  %v2233 = vadd.f32 %v2005, %v2121
  %v2234 = vadd.f32 %v2006, %v2122
  %v2235 = vadd.f32 %v2007, %v2123
  %v2236 = vadd.f32 %v2008, %v2124
  %v2237 = vadd.f32 %v2009, %v2125
  %v2238 = vadd.f32 %v2010, %v2126
  %v2239 = vadd.f32 %v2011, %v2127
  %v2240 = vadd.f32 %v2012, %v2128
  %v2241 = vadd.f32 %v2013, %v2129
  %v2242 = vadd.f32 %v2014, %v2130
  %v2243 = vadd.f32 %v2015, %v2131
  %v2244 = vadd.f32 %v2016, %v2132
  %v2245 = vadd.f32 %v2017, %v2133
  %v2246 = vadd.f32 %v2018, %v2134
  %v2247 = vadd.f32 %v2019, %v2135
  %v2248 = vadd.f32 %v2020, %v2136
  %v2249 = vadd.f32 %v2021, %v2137
  %v2250 = vadd.f32 %v2022, %v2138
  %v2251 = vadd.f32 %v2023, %v2139
  %v2252 = vadd.f32 %v2024, %v2140
  %v2253 = vadd.f32 %v2025, %v2141
  %v2254 = vadd.f32 %v2026, %v2142
  %v2255 = vadd.f32 %v2027, %v2143
  %v2256 = vadd.f32 %v2028, %v2144
  %v2257 = vadd.f32 %v2029, %v2145
  %v2258 = vadd.f32 %v2030, %v2146
  %v2259 = vadd.f32 %v2031, %v2147
  %v2260 = vadd.f32 %v2032, %v2148
  %v2261 = vadd.f32 %v2033, %v2149
  %v2262 = vadd.f32 %v2034, %v2150
  %v2263 = vadd.f32 %v2035, %v2151
  %v2264 = vadd.f32 %v2036, %v2152
  %v2265 = vadd.f32 %v2037, %v2153
  %v2266 = vadd.f32 %v2038, %v2154
  %v2267 = vadd.f32 %v2039, %v2155
  %v2268 = vadd.f32 %v2040, %v2156
  %v2269 = vadd.f32 %v2041, %v2157
  %v2270 = vadd.f32 %v2042, %v2158
  %v2271 = vadd.f32 %v2043, %v2159
  %v2272 = vadd.f32 %v2044, %v2160
  %v2273 = vadd.f32 %v2045, %v2161
  %v2274 = vadd.f32 %v2046, %v2162
  %v2275 = vadd.f32 %v2047, %v2163
  %v2276 = vadd.f32 %v2048, %v2164
  %v2277 = vadd.f32 %v2049, %v2165
  %v2278 = vadd.f32 %v2050, %v2166
  %v2279 = vadd.f32 %v2051, %v2167
  %v2280 = vadd.f32 %v2052, %v2168
  %v2281 = vadd.f32 %v2053, %v2169
  %v2282 = vadd.f32 %v2054, %v2170
  %v2283 = vadd.f32 %v2055, %v2171
  %v2284 = vadd.f32 %v2056, %v2172
  %v2285 = vadd.f32 %v2057, %v2173
  %v2286 = vadd.f32 %v2058, %v2174
  %v2287 = vadd.f32 %v2059, %v2175
  %v2288 = vadd.f32 %v2060, %v2176
  %v2289 = vadd.f32 %v2061, %v2177
  %v2290 = vadd.f32 %v2062, %v2178
  %v2291 = vadd.f32 %v2063, %v2179
  %v2292 = vadd.f32 %v2064, %v2180
  %v2293 = vadd.f32 %v2065, %v2181
  %v2294 = vadd.f32 %v2066, %v2182
  %v2295 = vadd.f32 %v2067, %v2183
  %v2296 = vadd.f32 %v2068, %v2184
  %v2297 = vadd.f32 %v2069, %v2185
  %v2298 = vadd.f32 %v2070, %v2186
  %v2299 = vadd.f32 %v2071, %v2187
  %v2300 = vadd.f32 %v2072, %v2188
  %v2301 = vlaneseq
  %v2302 = vshrl.u32 %v2301, 7
  %v2303 = vsub.s32 1, %v2302
  %v2304 = vrot.slane %v321, %v2303
  %v2305 = vmul.f32 %v175, %v2304
  %v2306 = vmul.f32 %v176, %v2304
  %v2307 = vmul.f32 %v177, %v2304
  %v2308 = vmul.f32 %v178, %v2304
  %v2309 = vmul.f32 %v179, %v2304
  %v2310 = vmul.f32 %v180, %v2304
  %v2311 = vmul.f32 %v181, %v2304
  %v2312 = vmul.f32 %v182, %v2304
  %v2313 = vmul.f32 %v183, %v2304
  %v2314 = vmul.f32 %v184, %v2304
  %v2315 = vmul.f32 %v185, %v2304
  %v2316 = vmul.f32 %v186, %v2304
  %v2317 = vmul.f32 %v187, %v2304
  %v2318 = vmul.f32 %v188, %v2304
  %v2319 = vmul.f32 %v189, %v2304
  %v2320 = vmul.f32 %v190, %v2304
  %v2321 = vmul.f32 %v191, %v2304
  %v2322 = vmul.f32 %v192, %v2304
  %v2323 = vmul.f32 %v193, %v2304
  %v2324 = vmul.f32 %v194, %v2304
  %v2325 = vmul.f32 %v195, %v2304
  %v2326 = vmul.f32 %v196, %v2304
  %v2327 = vmul.f32 %v197, %v2304
  %v2328 = vmul.f32 %v198, %v2304
  %v2329 = vmul.f32 %v199, %v2304
  %v2330 = vmul.f32 %v200, %v2304
  %v2331 = vmul.f32 %v201, %v2304
  %v2332 = vmul.f32 %v202, %v2304
  %v2333 = vmul.f32 %v203, %v2304
  %v2334 = vmul.f32 %v204, %v2304
  %v2335 = vmul.f32 %v205, %v2304
  %v2336 = vmul.f32 %v206, %v2304
  %v2337 = vmul.f32 %v207, %v2304
  %v2338 = vmul.f32 %v208, %v2304
  %v2339 = vmul.f32 %v209, %v2304
  %v2340 = vmul.f32 %v210, %v2304
  %v2341 = vmul.f32 %v211, %v2304
  %v2342 = vmul.f32 %v212, %v2304
  %v2343 = vmul.f32 %v213, %v2304
  %v2344 = vmul.f32 %v214, %v2304
  %v2345 = vmul.f32 %v215, %v2304
  %v2346 = vmul.f32 %v216, %v2304
  %v2347 = vmul.f32 %v217, %v2304
  %v2348 = vmul.f32 %v218, %v2304
  %v2349 = vmul.f32 %v219, %v2304
  %v2350 = vmul.f32 %v220, %v2304
  %v2351 = vmul.f32 %v221, %v2304
  %v2352 = vmul.f32 %v222, %v2304
  %v2353 = vmul.f32 %v223, %v2304
  %v2354 = vmul.f32 %v224, %v2304
  %v2355 = vmul.f32 %v225, %v2304
  %v2356 = vmul.f32 %v226, %v2304
  %v2357 = vmul.f32 %v227, %v2304
  %v2358 = vmul.f32 %v228, %v2304
  %v2359 = vmul.f32 %v229, %v2304
  %v2360 = vmul.f32 %v230, %v2304
  %v2361 = vmul.f32 %v231, %v2304
  %v2362 = vmul.f32 %v232, %v2304
  %v2363 = vmul.f32 %v233, %v2304
  %v2364 = vmul.f32 %v234, %v2304
  %v2365 = vmul.f32 %v235, %v2304
  %v2366 = vmul.f32 %v236, %v2304
  %v2367 = vmul.f32 %v237, %v2304
  %v2368 = vmul.f32 %v238, %v2304
  %v2369 = vmul.f32 %v239, %v2304
  %v2370 = vmul.f32 %v240, %v2304
  %v2371 = vmul.f32 %v241, %v2304
  %v2372 = vmul.f32 %v242, %v2304
  %v2373 = vmul.f32 %v243, %v2304
  %v2374 = vmul.f32 %v244, %v2304
  %v2375 = vmul.f32 %v245, %v2304
  %v2376 = vmul.f32 %v246, %v2304
  %v2377 = vmul.f32 %v247, %v2304
  %v2378 = vmul.f32 %v248, %v2304
  %v2379 = vmul.f32 %v249, %v2304
  %v2380 = vmul.f32 %v250, %v2304
  %v2381 = vmul.f32 %v251, %v2304
  %v2382 = vmul.f32 %v252, %v2304
  %v2383 = vmul.f32 %v253, %v2304
  %v2384 = vmul.f32 %v254, %v2304
  %v2385 = vmul.f32 %v255, %v2304
  %v2386 = vmul.f32 %v256, %v2304
  %v2387 = vmul.f32 %v257, %v2304
  %v2388 = vmul.f32 %v258, %v2304
  %v2389 = vmul.f32 %v259, %v2304
  %v2390 = vmul.f32 %v260, %v2304
  %v2391 = vmul.f32 %v261, %v2304
  %v2392 = vmul.f32 %v262, %v2304
  %v2393 = vmul.f32 %v263, %v2304
  %v2394 = vmul.f32 %v264, %v2304
  %v2395 = vmul.f32 %v265, %v2304
  %v2396 = vmul.f32 %v266, %v2304
  %v2397 = vmul.f32 %v267, %v2304
  %v2398 = vmul.f32 %v268, %v2304
  %v2399 = vmul.f32 %v269, %v2304
  %v2400 = vmul.f32 %v270, %v2304
  %v2401 = vmul.f32 %v271, %v2304
  %v2402 = vmul.f32 %v272, %v2304
  %v2403 = vmul.f32 %v273, %v2304
  %v2404 = vmul.f32 %v274, %v2304
  %v2405 = vmul.f32 %v275, %v2304
  %v2406 = vmul.f32 %v276, %v2304
  %v2407 = vmul.f32 %v277, %v2304
  %v2408 = vmul.f32 %v278, %v2304
  %v2409 = vmul.f32 %v279, %v2304
  %v2410 = vmul.f32 %v280, %v2304
  %v2411 = vmul.f32 %v281, %v2304
  %v2412 = vmul.f32 %v282, %v2304
  %v2413 = vmul.f32 %v283, %v2304
  %v2414 = vmul.f32 %v284, %v2304
  %v2415 = vmul.f32 %v285, %v2304
  %v2416 = vmul.f32 %v286, %v2304
  %v2417 = vmul.f32 %v287, %v2304
  %v2418 = vmul.f32 %v288, %v2304
  %v2419 = vmul.f32 %v289, %v2304
  %v2420 = vmul.f32 %v290, %v2304
  %v2421 = vmul.f32 %v291, %v2304
  %v2422 = vmul.f32 %v292, %v2304
  %v2423 = vmul.f32 %v293, %v2304
  %v2424 = vmul.f32 %v294, %v2304
  %v2425 = vmul.f32 %v295, %v2304
  %v2426 = vmul.f32 %v296, %v2304
  %v2427 = vmul.f32 %v297, %v2304
  %v2428 = vmul.f32 %v298, %v2304
  %v2429 = vmul.f32 %v299, %v2304
  %v2430 = vmul.f32 %v300, %v2304
  %v2431 = vmul.f32 %v301, %v2304
  %v2432 = vmul.f32 %v302, %v2304
  %v2433 = vmul.f32 %v303, %v2304
  %v2434 = vmul.f32 %v304, %v2304
  %v2435 = vmul.f32 %v305, %v2304
  %v2436 = vmul.f32 %v306, %v2304
  %v2437 = vmul.f32 %v307, %v2304
  %v2438 = vmul.f32 %v308, %v2304
  %v2439 = vmul.f32 %v309, %v2304
  %v2440 = vmul.f32 %v310, %v2304
  %v2441 = vmul.f32 %v311, %v2304
  %v2442 = vmul.f32 %v312, %v2304
  %v2443 = vmul.f32 %v313, %v2304
  %v2444 = vmul.f32 %v314, %v2304
  %v2585 = vrot.slane %v2305, 1
  %v2586 = vrot.slane %v2306, 1
  %v2587 = vsel %vm835, %v2585, %v2586
  %v2588 = vrot.slane %v2307, 1
  %v2589 = vsel %vm835, %v2586, %v2588
  %v2590 = vrot.slane %v2308, 1
  %v2591 = vsel %vm835, %v2588, %v2590
  %v2592 = vrot.slane %v2309, 1
  %v2593 = vsel %vm835, %v2590, %v2592
  %v2594 = vrot.slane %v2310, 1
  %v2595 = vrot.slane %v2311, 1
  %v2596 = vsel %vm835, %v2594, %v2595
  %v2597 = vrot.slane %v2312, 1
  %v2598 = vsel %vm835, %v2595, %v2597
  %v2599 = vrot.slane %v2313, 1
  %v2600 = vsel %vm835, %v2597, %v2599
  %v2601 = vrot.slane %v2314, 1
  %v2602 = vsel %vm835, %v2599, %v2601
  %v2603 = vrot.slane %v2315, 1
  %v2604 = vrot.slane %v2316, 1
  %v2605 = vsel %vm835, %v2603, %v2604
  %v2606 = vrot.slane %v2317, 1
  %v2607 = vsel %vm835, %v2604, %v2606
  %v2608 = vrot.slane %v2318, 1
  %v2609 = vsel %vm835, %v2606, %v2608
  %v2610 = vrot.slane %v2319, 1
  %v2611 = vsel %vm835, %v2608, %v2610
  %v2612 = vrot.slane %v2320, 1
  %v2613 = vrot.slane %v2321, 1
  %v2614 = vsel %vm835, %v2612, %v2613
  %v2615 = vrot.slane %v2322, 1
  %v2616 = vsel %vm835, %v2613, %v2615
  %v2617 = vrot.slane %v2323, 1
  %v2618 = vsel %vm835, %v2615, %v2617
  %v2619 = vrot.slane %v2324, 1
  %v2620 = vsel %vm835, %v2617, %v2619
  %v2621 = vrot.slane %v2325, 1
  %v2622 = vrot.slane %v2326, 1
  %v2623 = vsel %vm835, %v2621, %v2622
  %v2624 = vrot.slane %v2327, 1
  %v2625 = vsel %vm835, %v2622, %v2624
  %v2626 = vrot.slane %v2328, 1
  %v2627 = vsel %vm835, %v2624, %v2626
  %v2628 = vrot.slane %v2329, 1
  %v2629 = vsel %vm835, %v2626, %v2628
  %v2630 = vrot.slane %v2330, 1
  %v2631 = vrot.slane %v2331, 1
  %v2632 = vsel %vm835, %v2630, %v2631
  %v2633 = vrot.slane %v2332, 1
  %v2634 = vsel %vm835, %v2631, %v2633
  %v2635 = vrot.slane %v2333, 1
  %v2636 = vsel %vm835, %v2633, %v2635
  %v2637 = vrot.slane %v2334, 1
  %v2638 = vsel %vm835, %v2635, %v2637
  %v2639 = vrot.slane %v2335, 1
  %v2640 = vrot.slane %v2336, 1
  %v2641 = vsel %vm835, %v2639, %v2640
  %v2642 = vrot.slane %v2337, 1
  %v2643 = vsel %vm835, %v2640, %v2642
  %v2644 = vrot.slane %v2338, 1
  %v2645 = vsel %vm835, %v2642, %v2644
  %v2646 = vrot.slane %v2339, 1
  %v2647 = vsel %vm835, %v2644, %v2646
  %v2648 = vrot.slane %v2340, 1
  %v2649 = vrot.slane %v2341, 1
  %v2650 = vsel %vm835, %v2648, %v2649
  %v2651 = vrot.slane %v2342, 1
  %v2652 = vsel %vm835, %v2649, %v2651
  %v2653 = vrot.slane %v2343, 1
  %v2654 = vsel %vm835, %v2651, %v2653
  %v2655 = vrot.slane %v2344, 1
  %v2656 = vsel %vm835, %v2653, %v2655
  %v2657 = vrot.slane %v2345, 1
  %v2658 = vrot.slane %v2346, 1
  %v2659 = vsel %vm835, %v2657, %v2658
  %v2660 = vrot.slane %v2347, 1
  %v2661 = vsel %vm835, %v2658, %v2660
  %v2662 = vrot.slane %v2348, 1
  %v2663 = vsel %vm835, %v2660, %v2662
  %v2664 = vrot.slane %v2349, 1
  %v2665 = vsel %vm835, %v2662, %v2664
  %v2666 = vrot.slane %v2350, 1
  %v2667 = vrot.slane %v2351, 1
  %v2668 = vsel %vm835, %v2666, %v2667
  %v2669 = vrot.slane %v2352, 1
  %v2670 = vsel %vm835, %v2667, %v2669
  %v2671 = vrot.slane %v2353, 1
  %v2672 = vsel %vm835, %v2669, %v2671
  %v2673 = vrot.slane %v2354, 1
  %v2674 = vsel %vm835, %v2671, %v2673
  %v2675 = vrot.slane %v2355, 1
  %v2676 = vrot.slane %v2356, 1
  %v2677 = vsel %vm835, %v2675, %v2676
  %v2678 = vrot.slane %v2357, 1
  %v2679 = vsel %vm835, %v2676, %v2678
  %v2680 = vrot.slane %v2358, 1
  %v2681 = vsel %vm835, %v2678, %v2680
  %v2682 = vrot.slane %v2359, 1
  %v2683 = vsel %vm835, %v2680, %v2682
  %v2684 = vrot.slane %v2360, 1
  %v2685 = vrot.slane %v2361, 1
  %v2686 = vsel %vm835, %v2684, %v2685
  %v2687 = vrot.slane %v2362, 1
  %v2688 = vsel %vm835, %v2685, %v2687
  %v2689 = vrot.slane %v2363, 1
  %v2690 = vsel %vm835, %v2687, %v2689
  %v2691 = vrot.slane %v2364, 1
  %v2692 = vsel %vm835, %v2689, %v2691
  %v2693 = vrot.slane %v2365, 1
  %v2694 = vrot.slane %v2366, 1
  %v2695 = vsel %vm835, %v2693, %v2694
  %v2696 = vrot.slane %v2367, 1
  %v2697 = vsel %vm835, %v2694, %v2696
  %v2698 = vrot.slane %v2368, 1
  %v2699 = vsel %vm835, %v2696, %v2698
  %v2700 = vrot.slane %v2369, 1
  %v2701 = vsel %vm835, %v2698, %v2700
  %v2702 = vrot.slane %v2370, 1
  %v2703 = vrot.slane %v2371, 1
  %v2704 = vsel %vm835, %v2702, %v2703
  %v2705 = vrot.slane %v2372, 1
  %v2706 = vsel %vm835, %v2703, %v2705
  %v2707 = vrot.slane %v2373, 1
  %v2708 = vsel %vm835, %v2705, %v2707
  %v2709 = vrot.slane %v2374, 1
  %v2710 = vsel %vm835, %v2707, %v2709
  %v2711 = vrot.slane %v2375, 1
  %v2712 = vrot.slane %v2376, 1
  %v2713 = vsel %vm835, %v2711, %v2712
  %v2714 = vrot.slane %v2377, 1
  %v2715 = vsel %vm835, %v2712, %v2714
  %v2716 = vrot.slane %v2378, 1
  %v2717 = vsel %vm835, %v2714, %v2716
  %v2718 = vrot.slane %v2379, 1
  %v2719 = vsel %vm835, %v2716, %v2718
  %v2720 = vrot.slane %v2380, 1
  %v2721 = vrot.slane %v2381, 1
  %v2722 = vsel %vm835, %v2720, %v2721
  %v2723 = vrot.slane %v2382, 1
  %v2724 = vsel %vm835, %v2721, %v2723
  %v2725 = vrot.slane %v2383, 1
  %v2726 = vsel %vm835, %v2723, %v2725
  %v2727 = vrot.slane %v2384, 1
  %v2728 = vsel %vm835, %v2725, %v2727
  %v2729 = vrot.slane %v2385, 1
  %v2730 = vrot.slane %v2386, 1
  %v2731 = vsel %vm835, %v2729, %v2730
  %v2732 = vrot.slane %v2387, 1
  %v2733 = vsel %vm835, %v2730, %v2732
  %v2734 = vrot.slane %v2388, 1
  %v2735 = vsel %vm835, %v2732, %v2734
  %v2736 = vrot.slane %v2389, 1
  %v2737 = vsel %vm835, %v2734, %v2736
  %v2738 = vrot.slane %v2390, 1
  %v2739 = vrot.slane %v2391, 1
  %v2740 = vsel %vm835, %v2738, %v2739
  %v2741 = vrot.slane %v2392, 1
  %v2742 = vsel %vm835, %v2739, %v2741
  %v2743 = vrot.slane %v2393, 1
  %v2744 = vsel %vm835, %v2741, %v2743
  %v2745 = vrot.slane %v2394, 1
  %v2746 = vsel %vm835, %v2743, %v2745
  %v2747 = vrot.slane %v2395, 1
  %v2748 = vrot.slane %v2396, 1
  %v2749 = vsel %vm835, %v2747, %v2748
  %v2750 = vrot.slane %v2397, 1
  %v2751 = vsel %vm835, %v2748, %v2750
  %v2752 = vrot.slane %v2398, 1
  %v2753 = vsel %vm835, %v2750, %v2752
  %v2754 = vrot.slane %v2399, 1
  %v2755 = vsel %vm835, %v2752, %v2754
  %v2756 = vrot.slane %v2400, 1
  %v2757 = vrot.slane %v2401, 1
  %v2758 = vsel %vm835, %v2756, %v2757
  %v2759 = vrot.slane %v2402, 1
  %v2760 = vsel %vm835, %v2757, %v2759
  %v2761 = vrot.slane %v2403, 1
  %v2762 = vsel %vm835, %v2759, %v2761
  %v2763 = vrot.slane %v2404, 1
  %v2764 = vsel %vm835, %v2761, %v2763
  %v2765 = vrot.slane %v2405, 1
  %v2766 = vrot.slane %v2406, 1
  %v2767 = vsel %vm835, %v2765, %v2766
  %v2768 = vrot.slane %v2407, 1
  %v2769 = vsel %vm835, %v2766, %v2768
  %v2770 = vrot.slane %v2408, 1
  %v2771 = vsel %vm835, %v2768, %v2770
  %v2772 = vrot.slane %v2409, 1
  %v2773 = vsel %vm835, %v2770, %v2772
  %v2774 = vrot.slane %v2410, 1
  %v2775 = vrot.slane %v2411, 1
  %v2776 = vsel %vm835, %v2774, %v2775
  %v2777 = vrot.slane %v2412, 1
  %v2778 = vsel %vm835, %v2775, %v2777
  %v2779 = vrot.slane %v2413, 1
  %v2780 = vsel %vm835, %v2777, %v2779
  %v2781 = vrot.slane %v2414, 1
  %v2782 = vsel %vm835, %v2779, %v2781
  %v2783 = vrot.slane %v2415, 1
  %v2784 = vrot.slane %v2416, 1
  %v2785 = vsel %vm835, %v2783, %v2784
  %v2786 = vrot.slane %v2417, 1
  %v2787 = vsel %vm835, %v2784, %v2786
  %v2788 = vrot.slane %v2418, 1
  %v2789 = vsel %vm835, %v2786, %v2788
  %v2790 = vrot.slane %v2419, 1
  %v2791 = vsel %vm835, %v2788, %v2790
  %v2792 = vrot.slane %v2420, 1
  %v2793 = vrot.slane %v2421, 1
  %v2794 = vsel %vm835, %v2792, %v2793
  %v2795 = vrot.slane %v2422, 1
  %v2796 = vsel %vm835, %v2793, %v2795
  %v2797 = vrot.slane %v2423, 1
  %v2798 = vsel %vm835, %v2795, %v2797
  %v2799 = vrot.slane %v2424, 1
  %v2800 = vsel %vm835, %v2797, %v2799
  %v2801 = vrot.slane %v2425, 1
  %v2802 = vrot.slane %v2426, 1
  %v2803 = vsel %vm835, %v2801, %v2802
  %v2804 = vrot.slane %v2427, 1
  %v2805 = vsel %vm835, %v2802, %v2804
  %v2806 = vrot.slane %v2428, 1
  %v2807 = vsel %vm835, %v2804, %v2806
  %v2808 = vrot.slane %v2429, 1
  %v2809 = vsel %vm835, %v2806, %v2808
  %v2810 = vrot.slane %v2430, 1
  %v2811 = vrot.slane %v2431, 1
  %v2812 = vsel %vm835, %v2810, %v2811
  %v2813 = vrot.slane %v2432, 1
  %v2814 = vsel %vm835, %v2811, %v2813
  %v2815 = vrot.slane %v2433, 1
  %v2816 = vsel %vm835, %v2813, %v2815
  %v2817 = vrot.slane %v2434, 1
  %v2818 = vsel %vm835, %v2815, %v2817
  %v2819 = vrot.slane %v2435, 1
  %v2820 = vrot.slane %v2436, 1
  %v2821 = vsel %vm835, %v2819, %v2820
  %v2822 = vrot.slane %v2437, 1
  %v2823 = vsel %vm835, %v2820, %v2822
  %v2824 = vrot.slane %v2438, 1
  %v2825 = vsel %vm835, %v2822, %v2824
  %v2826 = vrot.slane %v2439, 1
  %v2827 = vsel %vm835, %v2824, %v2826
  %v2828 = vrot.slane %v2440, 1
  %v2829 = vrot.slane %v2441, 1
  %v2830 = vsel %vm835, %v2828, %v2829
  %v2831 = vrot.slane %v2442, 1
  %v2832 = vsel %vm835, %v2829, %v2831
  %v2833 = vrot.slane %v2443, 1
  %v2834 = vsel %vm835, %v2831, %v2833
  %v2835 = vrot.slane %v2444, 1
  %v2836 = vsel %vm835, %v2833, %v2835
  %v2949 = vadd.f32 %v2189, %v2587
  %v2950 = vadd.f32 %v2190, %v2589
  %v2951 = vadd.f32 %v2191, %v2591
  %v2952 = vadd.f32 %v2192, %v2593
  %v2953 = vadd.f32 %v2193, %v2596
  %v2954 = vadd.f32 %v2194, %v2598
  %v2955 = vadd.f32 %v2195, %v2600
  %v2956 = vadd.f32 %v2196, %v2602
  %v2957 = vadd.f32 %v2197, %v2605
  %v2958 = vadd.f32 %v2198, %v2607
  %v2959 = vadd.f32 %v2199, %v2609
  %v2960 = vadd.f32 %v2200, %v2611
  %v2961 = vadd.f32 %v2201, %v2614
  %v2962 = vadd.f32 %v2202, %v2616
  %v2963 = vadd.f32 %v2203, %v2618
  %v2964 = vadd.f32 %v2204, %v2620
  %v2965 = vadd.f32 %v2205, %v2623
  %v2966 = vadd.f32 %v2206, %v2625
  %v2967 = vadd.f32 %v2207, %v2627
  %v2968 = vadd.f32 %v2208, %v2629
  %v2969 = vadd.f32 %v2209, %v2632
  %v2970 = vadd.f32 %v2210, %v2634
  %v2971 = vadd.f32 %v2211, %v2636
  %v2972 = vadd.f32 %v2212, %v2638
  %v2973 = vadd.f32 %v2213, %v2641
  %v2974 = vadd.f32 %v2214, %v2643
  %v2975 = vadd.f32 %v2215, %v2645
  %v2976 = vadd.f32 %v2216, %v2647
  %v2977 = vadd.f32 %v2217, %v2650
  %v2978 = vadd.f32 %v2218, %v2652
  %v2979 = vadd.f32 %v2219, %v2654
  %v2980 = vadd.f32 %v2220, %v2656
  %v2981 = vadd.f32 %v2221, %v2659
  %v2982 = vadd.f32 %v2222, %v2661
  %v2983 = vadd.f32 %v2223, %v2663
  %v2984 = vadd.f32 %v2224, %v2665
  %v2985 = vadd.f32 %v2225, %v2668
  %v2986 = vadd.f32 %v2226, %v2670
  %v2987 = vadd.f32 %v2227, %v2672
  %v2988 = vadd.f32 %v2228, %v2674
  %v2989 = vadd.f32 %v2229, %v2677
  %v2990 = vadd.f32 %v2230, %v2679
  %v2991 = vadd.f32 %v2231, %v2681
  %v2992 = vadd.f32 %v2232, %v2683
  %v2993 = vadd.f32 %v2233, %v2686
  %v2994 = vadd.f32 %v2234, %v2688
  %v2995 = vadd.f32 %v2235, %v2690
  %v2996 = vadd.f32 %v2236, %v2692
  %v2997 = vadd.f32 %v2237, %v2695
  %v2998 = vadd.f32 %v2238, %v2697
  %v2999 = vadd.f32 %v2239, %v2699
  %v3000 = vadd.f32 %v2240, %v2701
  %v3001 = vadd.f32 %v2241, %v2704
  %v3002 = vadd.f32 %v2242, %v2706
  %v3003 = vadd.f32 %v2243, %v2708
  %v3004 = vadd.f32 %v2244, %v2710
  %v3005 = vadd.f32 %v2245, %v2713
  %v3006 = vadd.f32 %v2246, %v2715
  %v3007 = vadd.f32 %v2247, %v2717
  %v3008 = vadd.f32 %v2248, %v2719
  %v3009 = vadd.f32 %v2249, %v2722
  %v3010 = vadd.f32 %v2250, %v2724
  %v3011 = vadd.f32 %v2251, %v2726
  %v3012 = vadd.f32 %v2252, %v2728
  %v3013 = vadd.f32 %v2253, %v2731
  %v3014 = vadd.f32 %v2254, %v2733
  %v3015 = vadd.f32 %v2255, %v2735
  %v3016 = vadd.f32 %v2256, %v2737
  %v3017 = vadd.f32 %v2257, %v2740
  %v3018 = vadd.f32 %v2258, %v2742
  %v3019 = vadd.f32 %v2259, %v2744
  %v3020 = vadd.f32 %v2260, %v2746
  %v3021 = vadd.f32 %v2261, %v2749
  %v3022 = vadd.f32 %v2262, %v2751
  %v3023 = vadd.f32 %v2263, %v2753
  %v3024 = vadd.f32 %v2264, %v2755
  %v3025 = vadd.f32 %v2265, %v2758
  %v3026 = vadd.f32 %v2266, %v2760
  %v3027 = vadd.f32 %v2267, %v2762
  %v3028 = vadd.f32 %v2268, %v2764
  %v3029 = vadd.f32 %v2269, %v2767
  %v3030 = vadd.f32 %v2270, %v2769
  %v3031 = vadd.f32 %v2271, %v2771
  %v3032 = vadd.f32 %v2272, %v2773
  %v3033 = vadd.f32 %v2273, %v2776
  %v3034 = vadd.f32 %v2274, %v2778
  %v3035 = vadd.f32 %v2275, %v2780
  %v3036 = vadd.f32 %v2276, %v2782
  %v3037 = vadd.f32 %v2277, %v2785
  %v3038 = vadd.f32 %v2278, %v2787
  %v3039 = vadd.f32 %v2279, %v2789
  %v3040 = vadd.f32 %v2280, %v2791
  %v3041 = vadd.f32 %v2281, %v2794
  %v3042 = vadd.f32 %v2282, %v2796
  %v3043 = vadd.f32 %v2283, %v2798
  %v3044 = vadd.f32 %v2284, %v2800
  %v3045 = vadd.f32 %v2285, %v2803
  %v3046 = vadd.f32 %v2286, %v2805
  %v3047 = vadd.f32 %v2287, %v2807
  %v3048 = vadd.f32 %v2288, %v2809
  %v3049 = vadd.f32 %v2289, %v2812
  %v3050 = vadd.f32 %v2290, %v2814
  %v3051 = vadd.f32 %v2291, %v2816
  %v3052 = vadd.f32 %v2292, %v2818
  %v3053 = vadd.f32 %v2293, %v2821
  %v3054 = vadd.f32 %v2294, %v2823
  %v3055 = vadd.f32 %v2295, %v2825
  %v3056 = vadd.f32 %v2296, %v2827
  %v3057 = vadd.f32 %v2297, %v2830
  %v3058 = vadd.f32 %v2298, %v2832
  %v3059 = vadd.f32 %v2299, %v2834
  %v3060 = vadd.f32 %v2300, %v2836
  %v3061 = vlaneseq
  %v3062 = vshrl.u32 %v3061, 7
  %v3063 = vsub.s32 2, %v3062
  %v3064 = vrot.slane %v321, %v3063
  %v3065 = vmul.f32 %v175, %v3064
  %v3066 = vmul.f32 %v176, %v3064
  %v3067 = vmul.f32 %v177, %v3064
  %v3068 = vmul.f32 %v178, %v3064
  %v3069 = vmul.f32 %v179, %v3064
  %v3070 = vmul.f32 %v180, %v3064
  %v3071 = vmul.f32 %v181, %v3064
  %v3072 = vmul.f32 %v182, %v3064
  %v3073 = vmul.f32 %v183, %v3064
  %v3074 = vmul.f32 %v184, %v3064
  %v3075 = vmul.f32 %v185, %v3064
  %v3076 = vmul.f32 %v186, %v3064
  %v3077 = vmul.f32 %v187, %v3064
  %v3078 = vmul.f32 %v188, %v3064
  %v3079 = vmul.f32 %v189, %v3064
  %v3080 = vmul.f32 %v190, %v3064
  %v3081 = vmul.f32 %v191, %v3064
  %v3082 = vmul.f32 %v192, %v3064
  %v3083 = vmul.f32 %v193, %v3064
  %v3084 = vmul.f32 %v194, %v3064
  %v3085 = vmul.f32 %v195, %v3064
  %v3086 = vmul.f32 %v196, %v3064
  %v3087 = vmul.f32 %v197, %v3064
  %v3088 = vmul.f32 %v198, %v3064
  %v3089 = vmul.f32 %v199, %v3064
  %v3090 = vmul.f32 %v200, %v3064
  %v3091 = vmul.f32 %v201, %v3064
  %v3092 = vmul.f32 %v202, %v3064
  %v3093 = vmul.f32 %v203, %v3064
  %v3094 = vmul.f32 %v204, %v3064
  %v3095 = vmul.f32 %v205, %v3064
  %v3096 = vmul.f32 %v206, %v3064
  %v3097 = vmul.f32 %v207, %v3064
  %v3098 = vmul.f32 %v208, %v3064
  %v3099 = vmul.f32 %v209, %v3064
  %v3100 = vmul.f32 %v210, %v3064
  %v3101 = vmul.f32 %v211, %v3064
  %v3102 = vmul.f32 %v212, %v3064
  %v3103 = vmul.f32 %v213, %v3064
  %v3104 = vmul.f32 %v214, %v3064
  %v3105 = vmul.f32 %v215, %v3064
  %v3106 = vmul.f32 %v216, %v3064
  %v3107 = vmul.f32 %v217, %v3064
  %v3108 = vmul.f32 %v218, %v3064
  %v3109 = vmul.f32 %v219, %v3064
  %v3110 = vmul.f32 %v220, %v3064
  %v3111 = vmul.f32 %v221, %v3064
  %v3112 = vmul.f32 %v222, %v3064
  %v3113 = vmul.f32 %v223, %v3064
  %v3114 = vmul.f32 %v224, %v3064
  %v3115 = vmul.f32 %v225, %v3064
  %v3116 = vmul.f32 %v226, %v3064
  %v3117 = vmul.f32 %v227, %v3064
  %v3118 = vmul.f32 %v228, %v3064
  %v3119 = vmul.f32 %v229, %v3064
  %v3120 = vmul.f32 %v230, %v3064
  %v3121 = vmul.f32 %v231, %v3064
  %v3122 = vmul.f32 %v232, %v3064
  %v3123 = vmul.f32 %v233, %v3064
  %v3124 = vmul.f32 %v234, %v3064
  %v3125 = vmul.f32 %v235, %v3064
  %v3126 = vmul.f32 %v236, %v3064
  %v3127 = vmul.f32 %v237, %v3064
  %v3128 = vmul.f32 %v238, %v3064
  %v3129 = vmul.f32 %v239, %v3064
  %v3130 = vmul.f32 %v240, %v3064
  %v3131 = vmul.f32 %v241, %v3064
  %v3132 = vmul.f32 %v242, %v3064
  %v3133 = vmul.f32 %v243, %v3064
  %v3134 = vmul.f32 %v244, %v3064
  %v3135 = vmul.f32 %v245, %v3064
  %v3136 = vmul.f32 %v246, %v3064
  %v3137 = vmul.f32 %v247, %v3064
  %v3138 = vmul.f32 %v248, %v3064
  %v3139 = vmul.f32 %v249, %v3064
  %v3140 = vmul.f32 %v250, %v3064
  %v3141 = vmul.f32 %v251, %v3064
  %v3142 = vmul.f32 %v252, %v3064
  %v3143 = vmul.f32 %v253, %v3064
  %v3144 = vmul.f32 %v254, %v3064
  %v3145 = vmul.f32 %v255, %v3064
  %v3146 = vmul.f32 %v256, %v3064
  %v3147 = vmul.f32 %v257, %v3064
  %v3148 = vmul.f32 %v258, %v3064
  %v3149 = vmul.f32 %v259, %v3064
  %v3150 = vmul.f32 %v260, %v3064
  %v3151 = vmul.f32 %v261, %v3064
  %v3152 = vmul.f32 %v262, %v3064
  %v3153 = vmul.f32 %v263, %v3064
  %v3154 = vmul.f32 %v264, %v3064
  %v3155 = vmul.f32 %v265, %v3064
  %v3156 = vmul.f32 %v266, %v3064
  %v3157 = vmul.f32 %v267, %v3064
  %v3158 = vmul.f32 %v268, %v3064
  %v3159 = vmul.f32 %v269, %v3064
  %v3160 = vmul.f32 %v270, %v3064
  %v3161 = vmul.f32 %v271, %v3064
  %v3162 = vmul.f32 %v272, %v3064
  %v3163 = vmul.f32 %v273, %v3064
  %v3164 = vmul.f32 %v274, %v3064
  %v3165 = vmul.f32 %v275, %v3064
  %v3166 = vmul.f32 %v276, %v3064
  %v3167 = vmul.f32 %v277, %v3064
  %v3168 = vmul.f32 %v278, %v3064
  %v3169 = vmul.f32 %v279, %v3064
  %v3170 = vmul.f32 %v280, %v3064
  %v3171 = vmul.f32 %v281, %v3064
  %v3172 = vmul.f32 %v282, %v3064
  %v3173 = vmul.f32 %v283, %v3064
  %v3174 = vmul.f32 %v284, %v3064
  %v3175 = vmul.f32 %v285, %v3064
  %v3176 = vmul.f32 %v286, %v3064
  %v3177 = vmul.f32 %v287, %v3064
  %v3178 = vmul.f32 %v288, %v3064
  %v3179 = vmul.f32 %v289, %v3064
  %v3180 = vmul.f32 %v290, %v3064
  %v3181 = vmul.f32 %v291, %v3064
  %v3182 = vmul.f32 %v292, %v3064
  %v3183 = vmul.f32 %v293, %v3064
  %v3184 = vmul.f32 %v294, %v3064
  %v3185 = vmul.f32 %v295, %v3064
  %v3186 = vmul.f32 %v296, %v3064
  %v3187 = vmul.f32 %v297, %v3064
  %v3188 = vmul.f32 %v298, %v3064
  %v3189 = vmul.f32 %v299, %v3064
  %v3190 = vmul.f32 %v300, %v3064
  %v3191 = vmul.f32 %v301, %v3064
  %v3192 = vmul.f32 %v302, %v3064
  %v3193 = vmul.f32 %v303, %v3064
  %v3194 = vmul.f32 %v304, %v3064
  %v3195 = vmul.f32 %v305, %v3064
  %v3196 = vmul.f32 %v306, %v3064
  %v3197 = vmul.f32 %v307, %v3064
  %v3198 = vmul.f32 %v308, %v3064
  %v3199 = vmul.f32 %v309, %v3064
  %v3200 = vmul.f32 %v310, %v3064
  %v3201 = vmul.f32 %v311, %v3064
  %v3202 = vmul.f32 %v312, %v3064
  %v3203 = vmul.f32 %v313, %v3064
  %v3204 = vmul.f32 %v314, %v3064
  %v3345 = vrot.slane %v3065, 2
  %v3346 = vrot.slane %v3066, 2
  %v3347 = vsel %vm1596, %v3345, %v3346
  %v3348 = vrot.slane %v3067, 2
  %v3349 = vsel %vm1596, %v3346, %v3348
  %v3350 = vrot.slane %v3068, 2
  %v3351 = vsel %vm1596, %v3348, %v3350
  %v3352 = vrot.slane %v3069, 2
  %v3353 = vsel %vm1596, %v3350, %v3352
  %v3354 = vrot.slane %v3070, 2
  %v3355 = vrot.slane %v3071, 2
  %v3356 = vsel %vm1596, %v3354, %v3355
  %v3357 = vrot.slane %v3072, 2
  %v3358 = vsel %vm1596, %v3355, %v3357
  %v3359 = vrot.slane %v3073, 2
  %v3360 = vsel %vm1596, %v3357, %v3359
  %v3361 = vrot.slane %v3074, 2
  %v3362 = vsel %vm1596, %v3359, %v3361
  %v3363 = vrot.slane %v3075, 2
  %v3364 = vrot.slane %v3076, 2
  %v3365 = vsel %vm1596, %v3363, %v3364
  %v3366 = vrot.slane %v3077, 2
  %v3367 = vsel %vm1596, %v3364, %v3366
  %v3368 = vrot.slane %v3078, 2
  %v3369 = vsel %vm1596, %v3366, %v3368
  %v3370 = vrot.slane %v3079, 2
  %v3371 = vsel %vm1596, %v3368, %v3370
  %v3372 = vrot.slane %v3080, 2
  %v3373 = vrot.slane %v3081, 2
  %v3374 = vsel %vm1596, %v3372, %v3373
  %v3375 = vrot.slane %v3082, 2
  %v3376 = vsel %vm1596, %v3373, %v3375
  %v3377 = vrot.slane %v3083, 2
  %v3378 = vsel %vm1596, %v3375, %v3377
  %v3379 = vrot.slane %v3084, 2
  %v3380 = vsel %vm1596, %v3377, %v3379
  %v3381 = vrot.slane %v3085, 2
  %v3382 = vrot.slane %v3086, 2
  %v3383 = vsel %vm1596, %v3381, %v3382
  %v3384 = vrot.slane %v3087, 2
  %v3385 = vsel %vm1596, %v3382, %v3384
  %v3386 = vrot.slane %v3088, 2
  %v3387 = vsel %vm1596, %v3384, %v3386
  %v3388 = vrot.slane %v3089, 2
  %v3389 = vsel %vm1596, %v3386, %v3388
  %v3390 = vrot.slane %v3090, 2
  %v3391 = vrot.slane %v3091, 2
  %v3392 = vsel %vm1596, %v3390, %v3391
  %v3393 = vrot.slane %v3092, 2
  %v3394 = vsel %vm1596, %v3391, %v3393
  %v3395 = vrot.slane %v3093, 2
  %v3396 = vsel %vm1596, %v3393, %v3395
  %v3397 = vrot.slane %v3094, 2
  %v3398 = vsel %vm1596, %v3395, %v3397
  %v3399 = vrot.slane %v3095, 2
  %v3400 = vrot.slane %v3096, 2
  %v3401 = vsel %vm1596, %v3399, %v3400
  %v3402 = vrot.slane %v3097, 2
  %v3403 = vsel %vm1596, %v3400, %v3402
  %v3404 = vrot.slane %v3098, 2
  %v3405 = vsel %vm1596, %v3402, %v3404
  %v3406 = vrot.slane %v3099, 2
  %v3407 = vsel %vm1596, %v3404, %v3406
  %v3408 = vrot.slane %v3100, 2
  %v3409 = vrot.slane %v3101, 2
  %v3410 = vsel %vm1596, %v3408, %v3409
  %v3411 = vrot.slane %v3102, 2
  %v3412 = vsel %vm1596, %v3409, %v3411
  %v3413 = vrot.slane %v3103, 2
  %v3414 = vsel %vm1596, %v3411, %v3413
  %v3415 = vrot.slane %v3104, 2
  %v3416 = vsel %vm1596, %v3413, %v3415
  %v3417 = vrot.slane %v3105, 2
  %v3418 = vrot.slane %v3106, 2
  %v3419 = vsel %vm1596, %v3417, %v3418
  %v3420 = vrot.slane %v3107, 2
  %v3421 = vsel %vm1596, %v3418, %v3420
  %v3422 = vrot.slane %v3108, 2
  %v3423 = vsel %vm1596, %v3420, %v3422
  %v3424 = vrot.slane %v3109, 2
  %v3425 = vsel %vm1596, %v3422, %v3424
  %v3426 = vrot.slane %v3110, 2
  %v3427 = vrot.slane %v3111, 2
  %v3428 = vsel %vm1596, %v3426, %v3427
  %v3429 = vrot.slane %v3112, 2
  %v3430 = vsel %vm1596, %v3427, %v3429
  %v3431 = vrot.slane %v3113, 2
  %v3432 = vsel %vm1596, %v3429, %v3431
  %v3433 = vrot.slane %v3114, 2
  %v3434 = vsel %vm1596, %v3431, %v3433
  %v3435 = vrot.slane %v3115, 2
  %v3436 = vrot.slane %v3116, 2
  %v3437 = vsel %vm1596, %v3435, %v3436
  %v3438 = vrot.slane %v3117, 2
  %v3439 = vsel %vm1596, %v3436, %v3438
  %v3440 = vrot.slane %v3118, 2
  %v3441 = vsel %vm1596, %v3438, %v3440
  %v3442 = vrot.slane %v3119, 2
  %v3443 = vsel %vm1596, %v3440, %v3442
  %v3444 = vrot.slane %v3120, 2
  %v3445 = vrot.slane %v3121, 2
  %v3446 = vsel %vm1596, %v3444, %v3445
  %v3447 = vrot.slane %v3122, 2
  %v3448 = vsel %vm1596, %v3445, %v3447
  %v3449 = vrot.slane %v3123, 2
  %v3450 = vsel %vm1596, %v3447, %v3449
  %v3451 = vrot.slane %v3124, 2
  %v3452 = vsel %vm1596, %v3449, %v3451
  %v3453 = vrot.slane %v3125, 2
  %v3454 = vrot.slane %v3126, 2
  %v3455 = vsel %vm1596, %v3453, %v3454
  %v3456 = vrot.slane %v3127, 2
  %v3457 = vsel %vm1596, %v3454, %v3456
  %v3458 = vrot.slane %v3128, 2
  %v3459 = vsel %vm1596, %v3456, %v3458
  %v3460 = vrot.slane %v3129, 2
  %v3461 = vsel %vm1596, %v3458, %v3460
  %v3462 = vrot.slane %v3130, 2
  %v3463 = vrot.slane %v3131, 2
  %v3464 = vsel %vm1596, %v3462, %v3463
  %v3465 = vrot.slane %v3132, 2
  %v3466 = vsel %vm1596, %v3463, %v3465
  %v3467 = vrot.slane %v3133, 2
  %v3468 = vsel %vm1596, %v3465, %v3467
  %v3469 = vrot.slane %v3134, 2
  %v3470 = vsel %vm1596, %v3467, %v3469
  %v3471 = vrot.slane %v3135, 2
  %v3472 = vrot.slane %v3136, 2
  %v3473 = vsel %vm1596, %v3471, %v3472
  %v3474 = vrot.slane %v3137, 2
  %v3475 = vsel %vm1596, %v3472, %v3474
  %v3476 = vrot.slane %v3138, 2
  %v3477 = vsel %vm1596, %v3474, %v3476
  %v3478 = vrot.slane %v3139, 2
  %v3479 = vsel %vm1596, %v3476, %v3478
  %v3480 = vrot.slane %v3140, 2
  %v3481 = vrot.slane %v3141, 2
  %v3482 = vsel %vm1596, %v3480, %v3481
  %v3483 = vrot.slane %v3142, 2
  %v3484 = vsel %vm1596, %v3481, %v3483
  %v3485 = vrot.slane %v3143, 2
  %v3486 = vsel %vm1596, %v3483, %v3485
  %v3487 = vrot.slane %v3144, 2
  %v3488 = vsel %vm1596, %v3485, %v3487
  %v3489 = vrot.slane %v3145, 2
  %v3490 = vrot.slane %v3146, 2
  %v3491 = vsel %vm1596, %v3489, %v3490
  %v3492 = vrot.slane %v3147, 2
  %v3493 = vsel %vm1596, %v3490, %v3492
  %v3494 = vrot.slane %v3148, 2
  %v3495 = vsel %vm1596, %v3492, %v3494
  %v3496 = vrot.slane %v3149, 2
  %v3497 = vsel %vm1596, %v3494, %v3496
  %v3498 = vrot.slane %v3150, 2
  %v3499 = vrot.slane %v3151, 2
  %v3500 = vsel %vm1596, %v3498, %v3499
  %v3501 = vrot.slane %v3152, 2
  %v3502 = vsel %vm1596, %v3499, %v3501
  %v3503 = vrot.slane %v3153, 2
  %v3504 = vsel %vm1596, %v3501, %v3503
  %v3505 = vrot.slane %v3154, 2
  %v3506 = vsel %vm1596, %v3503, %v3505
  %v3507 = vrot.slane %v3155, 2
  %v3508 = vrot.slane %v3156, 2
  %v3509 = vsel %vm1596, %v3507, %v3508
  %v3510 = vrot.slane %v3157, 2
  %v3511 = vsel %vm1596, %v3508, %v3510
  %v3512 = vrot.slane %v3158, 2
  %v3513 = vsel %vm1596, %v3510, %v3512
  %v3514 = vrot.slane %v3159, 2
  %v3515 = vsel %vm1596, %v3512, %v3514
  %v3516 = vrot.slane %v3160, 2
  %v3517 = vrot.slane %v3161, 2
  %v3518 = vsel %vm1596, %v3516, %v3517
  %v3519 = vrot.slane %v3162, 2
  %v3520 = vsel %vm1596, %v3517, %v3519
  %v3521 = vrot.slane %v3163, 2
  %v3522 = vsel %vm1596, %v3519, %v3521
  %v3523 = vrot.slane %v3164, 2
  %v3524 = vsel %vm1596, %v3521, %v3523
  %v3525 = vrot.slane %v3165, 2
  %v3526 = vrot.slane %v3166, 2
  %v3527 = vsel %vm1596, %v3525, %v3526
  %v3528 = vrot.slane %v3167, 2
  %v3529 = vsel %vm1596, %v3526, %v3528
  %v3530 = vrot.slane %v3168, 2
  %v3531 = vsel %vm1596, %v3528, %v3530
  %v3532 = vrot.slane %v3169, 2
  %v3533 = vsel %vm1596, %v3530, %v3532
  %v3534 = vrot.slane %v3170, 2
  %v3535 = vrot.slane %v3171, 2
  %v3536 = vsel %vm1596, %v3534, %v3535
  %v3537 = vrot.slane %v3172, 2
  %v3538 = vsel %vm1596, %v3535, %v3537
  %v3539 = vrot.slane %v3173, 2
  %v3540 = vsel %vm1596, %v3537, %v3539
  %v3541 = vrot.slane %v3174, 2
  %v3542 = vsel %vm1596, %v3539, %v3541
  %v3543 = vrot.slane %v3175, 2
  %v3544 = vrot.slane %v3176, 2
  %v3545 = vsel %vm1596, %v3543, %v3544
  %v3546 = vrot.slane %v3177, 2
  %v3547 = vsel %vm1596, %v3544, %v3546
  %v3548 = vrot.slane %v3178, 2
  %v3549 = vsel %vm1596, %v3546, %v3548
  %v3550 = vrot.slane %v3179, 2
  %v3551 = vsel %vm1596, %v3548, %v3550
  %v3552 = vrot.slane %v3180, 2
  %v3553 = vrot.slane %v3181, 2
  %v3554 = vsel %vm1596, %v3552, %v3553
  %v3555 = vrot.slane %v3182, 2
  %v3556 = vsel %vm1596, %v3553, %v3555
  %v3557 = vrot.slane %v3183, 2
  %v3558 = vsel %vm1596, %v3555, %v3557
  %v3559 = vrot.slane %v3184, 2
  %v3560 = vsel %vm1596, %v3557, %v3559
  %v3561 = vrot.slane %v3185, 2
  %v3562 = vrot.slane %v3186, 2
  %v3563 = vsel %vm1596, %v3561, %v3562
  %v3564 = vrot.slane %v3187, 2
  %v3565 = vsel %vm1596, %v3562, %v3564
  %v3566 = vrot.slane %v3188, 2
  %v3567 = vsel %vm1596, %v3564, %v3566
  %v3568 = vrot.slane %v3189, 2
  %v3569 = vsel %vm1596, %v3566, %v3568
  %v3570 = vrot.slane %v3190, 2
  %v3571 = vrot.slane %v3191, 2
  %v3572 = vsel %vm1596, %v3570, %v3571
  %v3573 = vrot.slane %v3192, 2
  %v3574 = vsel %vm1596, %v3571, %v3573
  %v3575 = vrot.slane %v3193, 2
  %v3576 = vsel %vm1596, %v3573, %v3575
  %v3577 = vrot.slane %v3194, 2
  %v3578 = vsel %vm1596, %v3575, %v3577
  %v3579 = vrot.slane %v3195, 2
  %v3580 = vrot.slane %v3196, 2
  %v3581 = vsel %vm1596, %v3579, %v3580
  %v3582 = vrot.slane %v3197, 2
  %v3583 = vsel %vm1596, %v3580, %v3582
  %v3584 = vrot.slane %v3198, 2
  %v3585 = vsel %vm1596, %v3582, %v3584
  %v3586 = vrot.slane %v3199, 2
  %v3587 = vsel %vm1596, %v3584, %v3586
  %v3588 = vrot.slane %v3200, 2
  %v3589 = vrot.slane %v3201, 2
  %v3590 = vsel %vm1596, %v3588, %v3589
  %v3591 = vrot.slane %v3202, 2
  %v3592 = vsel %vm1596, %v3589, %v3591
  %v3593 = vrot.slane %v3203, 2
  %v3594 = vsel %vm1596, %v3591, %v3593
  %v3595 = vrot.slane %v3204, 2
  %v3596 = vsel %vm1596, %v3593, %v3595
  %v3709 = vadd.f32 %v2949, %v3347
  %v3710 = vadd.f32 %v2950, %v3349
  %v3711 = vadd.f32 %v2951, %v3351
  %v3712 = vadd.f32 %v2952, %v3353
  %v3713 = vadd.f32 %v2953, %v3356
  %v3714 = vadd.f32 %v2954, %v3358
  %v3715 = vadd.f32 %v2955, %v3360
  %v3716 = vadd.f32 %v2956, %v3362
  %v3717 = vadd.f32 %v2957, %v3365
  %v3718 = vadd.f32 %v2958, %v3367
  %v3719 = vadd.f32 %v2959, %v3369
  %v3720 = vadd.f32 %v2960, %v3371
  %v3721 = vadd.f32 %v2961, %v3374
  %v3722 = vadd.f32 %v2962, %v3376
  %v3723 = vadd.f32 %v2963, %v3378
  %v3724 = vadd.f32 %v2964, %v3380
  %v3725 = vadd.f32 %v2965, %v3383
  %v3726 = vadd.f32 %v2966, %v3385
  %v3727 = vadd.f32 %v2967, %v3387
  %v3728 = vadd.f32 %v2968, %v3389
  %v3729 = vadd.f32 %v2969, %v3392
  %v3730 = vadd.f32 %v2970, %v3394
  %v3731 = vadd.f32 %v2971, %v3396
  %v3732 = vadd.f32 %v2972, %v3398
  %v3733 = vadd.f32 %v2973, %v3401
  %v3734 = vadd.f32 %v2974, %v3403
  %v3735 = vadd.f32 %v2975, %v3405
  %v3736 = vadd.f32 %v2976, %v3407
  %v3737 = vadd.f32 %v2977, %v3410
  %v3738 = vadd.f32 %v2978, %v3412
  %v3739 = vadd.f32 %v2979, %v3414
  %v3740 = vadd.f32 %v2980, %v3416
  %v3741 = vadd.f32 %v2981, %v3419
  %v3742 = vadd.f32 %v2982, %v3421
  %v3743 = vadd.f32 %v2983, %v3423
  %v3744 = vadd.f32 %v2984, %v3425
  %v3745 = vadd.f32 %v2985, %v3428
  %v3746 = vadd.f32 %v2986, %v3430
  %v3747 = vadd.f32 %v2987, %v3432
  %v3748 = vadd.f32 %v2988, %v3434
  %v3749 = vadd.f32 %v2989, %v3437
  %v3750 = vadd.f32 %v2990, %v3439
  %v3751 = vadd.f32 %v2991, %v3441
  %v3752 = vadd.f32 %v2992, %v3443
  %v3753 = vadd.f32 %v2993, %v3446
  %v3754 = vadd.f32 %v2994, %v3448
  %v3755 = vadd.f32 %v2995, %v3450
  %v3756 = vadd.f32 %v2996, %v3452
  %v3757 = vadd.f32 %v2997, %v3455
  %v3758 = vadd.f32 %v2998, %v3457
  %v3759 = vadd.f32 %v2999, %v3459
  %v3760 = vadd.f32 %v3000, %v3461
  %v3761 = vadd.f32 %v3001, %v3464
  %v3762 = vadd.f32 %v3002, %v3466
  %v3763 = vadd.f32 %v3003, %v3468
  %v3764 = vadd.f32 %v3004, %v3470
  %v3765 = vadd.f32 %v3005, %v3473
  %v3766 = vadd.f32 %v3006, %v3475
  %v3767 = vadd.f32 %v3007, %v3477
  %v3768 = vadd.f32 %v3008, %v3479
  %v3769 = vadd.f32 %v3009, %v3482
  %v3770 = vadd.f32 %v3010, %v3484
  %v3771 = vadd.f32 %v3011, %v3486
  %v3772 = vadd.f32 %v3012, %v3488
  %v3773 = vadd.f32 %v3013, %v3491
  %v3774 = vadd.f32 %v3014, %v3493
  %v3775 = vadd.f32 %v3015, %v3495
  %v3776 = vadd.f32 %v3016, %v3497
  %v3777 = vadd.f32 %v3017, %v3500
  %v3778 = vadd.f32 %v3018, %v3502
  %v3779 = vadd.f32 %v3019, %v3504
  %v3780 = vadd.f32 %v3020, %v3506
  %v3781 = vadd.f32 %v3021, %v3509
  %v3782 = vadd.f32 %v3022, %v3511
  %v3783 = vadd.f32 %v3023, %v3513
  %v3784 = vadd.f32 %v3024, %v3515
  %v3785 = vadd.f32 %v3025, %v3518
  %v3786 = vadd.f32 %v3026, %v3520
  %v3787 = vadd.f32 %v3027, %v3522
  %v3788 = vadd.f32 %v3028, %v3524
  %v3789 = vadd.f32 %v3029, %v3527
  %v3790 = vadd.f32 %v3030, %v3529
  %v3791 = vadd.f32 %v3031, %v3531
  %v3792 = vadd.f32 %v3032, %v3533
  %v3793 = vadd.f32 %v3033, %v3536
  %v3794 = vadd.f32 %v3034, %v3538
  %v3795 = vadd.f32 %v3035, %v3540
  %v3796 = vadd.f32 %v3036, %v3542
  %v3797 = vadd.f32 %v3037, %v3545
  %v3798 = vadd.f32 %v3038, %v3547
  %v3799 = vadd.f32 %v3039, %v3549
  %v3800 = vadd.f32 %v3040, %v3551
  %v3801 = vadd.f32 %v3041, %v3554
  %v3802 = vadd.f32 %v3042, %v3556
  %v3803 = vadd.f32 %v3043, %v3558
  %v3804 = vadd.f32 %v3044, %v3560
  %v3805 = vadd.f32 %v3045, %v3563
  %v3806 = vadd.f32 %v3046, %v3565
  %v3807 = vadd.f32 %v3047, %v3567
  %v3808 = vadd.f32 %v3048, %v3569
  %v3809 = vadd.f32 %v3049, %v3572
  %v3810 = vadd.f32 %v3050, %v3574
  %v3811 = vadd.f32 %v3051, %v3576
  %v3812 = vadd.f32 %v3052, %v3578
  %v3813 = vadd.f32 %v3053, %v3581
  %v3814 = vadd.f32 %v3054, %v3583
  %v3815 = vadd.f32 %v3055, %v3585
  %v3816 = vadd.f32 %v3056, %v3587
  %v3817 = vadd.f32 %v3057, %v3590
  %v3818 = vadd.f32 %v3058, %v3592
  %v3819 = vadd.f32 %v3059, %v3594
  %v3820 = vadd.f32 %v3060, %v3596
  %v3821 = vlaneseq
  %v3822 = vshrl.u32 %v3821, 7
  %v3823 = vsub.s32 0, %v3822
  %v3824 = vrot.slane %v322, %v3823
  %v3825 = vmul.f32 %v180, %v3824
  %v3826 = vmul.f32 %v181, %v3824
  %v3827 = vmul.f32 %v182, %v3824
  %v3828 = vmul.f32 %v183, %v3824
  %v3829 = vmul.f32 %v185, %v3824
  %v3830 = vmul.f32 %v186, %v3824
  %v3831 = vmul.f32 %v187, %v3824
  %v3832 = vmul.f32 %v188, %v3824
  %v3833 = vmul.f32 %v190, %v3824
  %v3834 = vmul.f32 %v191, %v3824
  %v3835 = vmul.f32 %v192, %v3824
  %v3836 = vmul.f32 %v193, %v3824
  %v3837 = vmul.f32 %v195, %v3824
  %v3838 = vmul.f32 %v196, %v3824
  %v3839 = vmul.f32 %v197, %v3824
  %v3840 = vmul.f32 %v198, %v3824
  %v3841 = vmul.f32 %v200, %v3824
  %v3842 = vmul.f32 %v201, %v3824
  %v3843 = vmul.f32 %v202, %v3824
  %v3844 = vmul.f32 %v203, %v3824
  %v3845 = vmul.f32 %v205, %v3824
  %v3846 = vmul.f32 %v206, %v3824
  %v3847 = vmul.f32 %v207, %v3824
  %v3848 = vmul.f32 %v208, %v3824
  %v3849 = vmul.f32 %v210, %v3824
  %v3850 = vmul.f32 %v211, %v3824
  %v3851 = vmul.f32 %v212, %v3824
  %v3852 = vmul.f32 %v213, %v3824
  %v3853 = vmul.f32 %v215, %v3824
  %v3854 = vmul.f32 %v216, %v3824
  %v3855 = vmul.f32 %v217, %v3824
  %v3856 = vmul.f32 %v218, %v3824
  %v3857 = vmul.f32 %v220, %v3824
  %v3858 = vmul.f32 %v221, %v3824
  %v3859 = vmul.f32 %v222, %v3824
  %v3860 = vmul.f32 %v223, %v3824
  %v3861 = vmul.f32 %v225, %v3824
  %v3862 = vmul.f32 %v226, %v3824
  %v3863 = vmul.f32 %v227, %v3824
  %v3864 = vmul.f32 %v228, %v3824
  %v3865 = vmul.f32 %v230, %v3824
  %v3866 = vmul.f32 %v231, %v3824
  %v3867 = vmul.f32 %v232, %v3824
  %v3868 = vmul.f32 %v233, %v3824
  %v3869 = vmul.f32 %v235, %v3824
  %v3870 = vmul.f32 %v236, %v3824
  %v3871 = vmul.f32 %v237, %v3824
  %v3872 = vmul.f32 %v238, %v3824
  %v3873 = vmul.f32 %v240, %v3824
  %v3874 = vmul.f32 %v241, %v3824
  %v3875 = vmul.f32 %v242, %v3824
  %v3876 = vmul.f32 %v243, %v3824
  %v3877 = vmul.f32 %v245, %v3824
  %v3878 = vmul.f32 %v246, %v3824
  %v3879 = vmul.f32 %v247, %v3824
  %v3880 = vmul.f32 %v248, %v3824
  %v3881 = vmul.f32 %v250, %v3824
  %v3882 = vmul.f32 %v251, %v3824
  %v3883 = vmul.f32 %v252, %v3824
  %v3884 = vmul.f32 %v253, %v3824
  %v3885 = vmul.f32 %v255, %v3824
  %v3886 = vmul.f32 %v256, %v3824
  %v3887 = vmul.f32 %v257, %v3824
  %v3888 = vmul.f32 %v258, %v3824
  %v3889 = vmul.f32 %v260, %v3824
  %v3890 = vmul.f32 %v261, %v3824
  %v3891 = vmul.f32 %v262, %v3824
  %v3892 = vmul.f32 %v263, %v3824
  %v3893 = vmul.f32 %v265, %v3824
  %v3894 = vmul.f32 %v266, %v3824
  %v3895 = vmul.f32 %v267, %v3824
  %v3896 = vmul.f32 %v268, %v3824
  %v3897 = vmul.f32 %v270, %v3824
  %v3898 = vmul.f32 %v271, %v3824
  %v3899 = vmul.f32 %v272, %v3824
  %v3900 = vmul.f32 %v273, %v3824
  %v3901 = vmul.f32 %v275, %v3824
  %v3902 = vmul.f32 %v276, %v3824
  %v3903 = vmul.f32 %v277, %v3824
  %v3904 = vmul.f32 %v278, %v3824
  %v3905 = vmul.f32 %v280, %v3824
  %v3906 = vmul.f32 %v281, %v3824
  %v3907 = vmul.f32 %v282, %v3824
  %v3908 = vmul.f32 %v283, %v3824
  %v3909 = vmul.f32 %v285, %v3824
  %v3910 = vmul.f32 %v286, %v3824
  %v3911 = vmul.f32 %v287, %v3824
  %v3912 = vmul.f32 %v288, %v3824
  %v3913 = vmul.f32 %v290, %v3824
  %v3914 = vmul.f32 %v291, %v3824
  %v3915 = vmul.f32 %v292, %v3824
  %v3916 = vmul.f32 %v293, %v3824
  %v3917 = vmul.f32 %v295, %v3824
  %v3918 = vmul.f32 %v296, %v3824
  %v3919 = vmul.f32 %v297, %v3824
  %v3920 = vmul.f32 %v298, %v3824
  %v3921 = vmul.f32 %v300, %v3824
  %v3922 = vmul.f32 %v301, %v3824
  %v3923 = vmul.f32 %v302, %v3824
  %v3924 = vmul.f32 %v303, %v3824
  %v3925 = vmul.f32 %v305, %v3824
  %v3926 = vmul.f32 %v306, %v3824
  %v3927 = vmul.f32 %v307, %v3824
  %v3928 = vmul.f32 %v308, %v3824
  %v3929 = vmul.f32 %v310, %v3824
  %v3930 = vmul.f32 %v311, %v3824
  %v3931 = vmul.f32 %v312, %v3824
  %v3932 = vmul.f32 %v313, %v3824
  %v3933 = vmul.f32 %v315, %v3824
  %v3934 = vmul.f32 %v316, %v3824
  %v3935 = vmul.f32 %v317, %v3824
  %v3936 = vmul.f32 %v318, %v3824
  %v3937 = vadd.f32 %v3709, %v3825
  %v3938 = vadd.f32 %v3710, %v3826
  %v3939 = vadd.f32 %v3711, %v3827
  %v3940 = vadd.f32 %v3712, %v3828
  %v3941 = vadd.f32 %v3713, %v3829
  %v3942 = vadd.f32 %v3714, %v3830
  %v3943 = vadd.f32 %v3715, %v3831
  %v3944 = vadd.f32 %v3716, %v3832
  %v3945 = vadd.f32 %v3717, %v3833
  %v3946 = vadd.f32 %v3718, %v3834
  %v3947 = vadd.f32 %v3719, %v3835
  %v3948 = vadd.f32 %v3720, %v3836
  %v3949 = vadd.f32 %v3721, %v3837
  %v3950 = vadd.f32 %v3722, %v3838
  %v3951 = vadd.f32 %v3723, %v3839
  %v3952 = vadd.f32 %v3724, %v3840
  %v3953 = vadd.f32 %v3725, %v3841
  %v3954 = vadd.f32 %v3726, %v3842
  %v3955 = vadd.f32 %v3727, %v3843
  %v3956 = vadd.f32 %v3728, %v3844
  %v3957 = vadd.f32 %v3729, %v3845
  %v3958 = vadd.f32 %v3730, %v3846
  %v3959 = vadd.f32 %v3731, %v3847
  %v3960 = vadd.f32 %v3732, %v3848
  %v3961 = vadd.f32 %v3733, %v3849
  %v3962 = vadd.f32 %v3734, %v3850
  %v3963 = vadd.f32 %v3735, %v3851
  %v3964 = vadd.f32 %v3736, %v3852
  %v3965 = vadd.f32 %v3737, %v3853
  %v3966 = vadd.f32 %v3738, %v3854
  %v3967 = vadd.f32 %v3739, %v3855
  %v3968 = vadd.f32 %v3740, %v3856
  %v3969 = vadd.f32 %v3741, %v3857
  %v3970 = vadd.f32 %v3742, %v3858
  %v3971 = vadd.f32 %v3743, %v3859
  %v3972 = vadd.f32 %v3744, %v3860
  %v3973 = vadd.f32 %v3745, %v3861
  %v3974 = vadd.f32 %v3746, %v3862
  %v3975 = vadd.f32 %v3747, %v3863
  %v3976 = vadd.f32 %v3748, %v3864
  %v3977 = vadd.f32 %v3749, %v3865
  %v3978 = vadd.f32 %v3750, %v3866
  %v3979 = vadd.f32 %v3751, %v3867
  %v3980 = vadd.f32 %v3752, %v3868
  %v3981 = vadd.f32 %v3753, %v3869
  %v3982 = vadd.f32 %v3754, %v3870
  %v3983 = vadd.f32 %v3755, %v3871
  %v3984 = vadd.f32 %v3756, %v3872
  %v3985 = vadd.f32 %v3757, %v3873
  %v3986 = vadd.f32 %v3758, %v3874
  %v3987 = vadd.f32 %v3759, %v3875
  %v3988 = vadd.f32 %v3760, %v3876
  %v3989 = vadd.f32 %v3761, %v3877
  %v3990 = vadd.f32 %v3762, %v3878
  %v3991 = vadd.f32 %v3763, %v3879
  %v3992 = vadd.f32 %v3764, %v3880
  %v3993 = vadd.f32 %v3765, %v3881
  %v3994 = vadd.f32 %v3766, %v3882
  %v3995 = vadd.f32 %v3767, %v3883
  %v3996 = vadd.f32 %v3768, %v3884
  %v3997 = vadd.f32 %v3769, %v3885
  %v3998 = vadd.f32 %v3770, %v3886
  %v3999 = vadd.f32 %v3771, %v3887
  %v4000 = vadd.f32 %v3772, %v3888
  %v4001 = vadd.f32 %v3773, %v3889
  %v4002 = vadd.f32 %v3774, %v3890
  %v4003 = vadd.f32 %v3775, %v3891
  %v4004 = vadd.f32 %v3776, %v3892
  %v4005 = vadd.f32 %v3777, %v3893
  %v4006 = vadd.f32 %v3778, %v3894
  %v4007 = vadd.f32 %v3779, %v3895
  %v4008 = vadd.f32 %v3780, %v3896
  %v4009 = vadd.f32 %v3781, %v3897
  %v4010 = vadd.f32 %v3782, %v3898
  %v4011 = vadd.f32 %v3783, %v3899
  %v4012 = vadd.f32 %v3784, %v3900
  %v4013 = vadd.f32 %v3785, %v3901
  %v4014 = vadd.f32 %v3786, %v3902
  %v4015 = vadd.f32 %v3787, %v3903
  %v4016 = vadd.f32 %v3788, %v3904
  %v4017 = vadd.f32 %v3789, %v3905
  %v4018 = vadd.f32 %v3790, %v3906
  %v4019 = vadd.f32 %v3791, %v3907
  %v4020 = vadd.f32 %v3792, %v3908
  %v4021 = vadd.f32 %v3793, %v3909
  %v4022 = vadd.f32 %v3794, %v3910
  %v4023 = vadd.f32 %v3795, %v3911
  %v4024 = vadd.f32 %v3796, %v3912
  %v4025 = vadd.f32 %v3797, %v3913
  %v4026 = vadd.f32 %v3798, %v3914
  %v4027 = vadd.f32 %v3799, %v3915
  %v4028 = vadd.f32 %v3800, %v3916
  %v4029 = vadd.f32 %v3801, %v3917
  %v4030 = vadd.f32 %v3802, %v3918
  %v4031 = vadd.f32 %v3803, %v3919
  %v4032 = vadd.f32 %v3804, %v3920
  %v4033 = vadd.f32 %v3805, %v3921
  %v4034 = vadd.f32 %v3806, %v3922
  %v4035 = vadd.f32 %v3807, %v3923
  %v4036 = vadd.f32 %v3808, %v3924
  %v4037 = vadd.f32 %v3809, %v3925
  %v4038 = vadd.f32 %v3810, %v3926
  %v4039 = vadd.f32 %v3811, %v3927
  %v4040 = vadd.f32 %v3812, %v3928
  %v4041 = vadd.f32 %v3813, %v3929
  %v4042 = vadd.f32 %v3814, %v3930
  %v4043 = vadd.f32 %v3815, %v3931
  %v4044 = vadd.f32 %v3816, %v3932
  %v4045 = vadd.f32 %v3817, %v3933
  %v4046 = vadd.f32 %v3818, %v3934
  %v4047 = vadd.f32 %v3819, %v3935
  %v4048 = vadd.f32 %v3820, %v3936
  %v4049 = vlaneseq
  %v4050 = vshrl.u32 %v4049, 7
  %v4051 = vsub.s32 1, %v4050
  %v4052 = vrot.slane %v322, %v4051
  %v4053 = vmul.f32 %v180, %v4052
  %v4054 = vmul.f32 %v181, %v4052
  %v4055 = vmul.f32 %v182, %v4052
  %v4056 = vmul.f32 %v183, %v4052
  %v4057 = vmul.f32 %v184, %v4052
  %v4058 = vmul.f32 %v185, %v4052
  %v4059 = vmul.f32 %v186, %v4052
  %v4060 = vmul.f32 %v187, %v4052
  %v4061 = vmul.f32 %v188, %v4052
  %v4062 = vmul.f32 %v189, %v4052
  %v4063 = vmul.f32 %v190, %v4052
  %v4064 = vmul.f32 %v191, %v4052
  %v4065 = vmul.f32 %v192, %v4052
  %v4066 = vmul.f32 %v193, %v4052
  %v4067 = vmul.f32 %v194, %v4052
  %v4068 = vmul.f32 %v195, %v4052
  %v4069 = vmul.f32 %v196, %v4052
  %v4070 = vmul.f32 %v197, %v4052
  %v4071 = vmul.f32 %v198, %v4052
  %v4072 = vmul.f32 %v199, %v4052
  %v4073 = vmul.f32 %v200, %v4052
  %v4074 = vmul.f32 %v201, %v4052
  %v4075 = vmul.f32 %v202, %v4052
  %v4076 = vmul.f32 %v203, %v4052
  %v4077 = vmul.f32 %v204, %v4052
  %v4078 = vmul.f32 %v205, %v4052
  %v4079 = vmul.f32 %v206, %v4052
  %v4080 = vmul.f32 %v207, %v4052
  %v4081 = vmul.f32 %v208, %v4052
  %v4082 = vmul.f32 %v209, %v4052
  %v4083 = vmul.f32 %v210, %v4052
  %v4084 = vmul.f32 %v211, %v4052
  %v4085 = vmul.f32 %v212, %v4052
  %v4086 = vmul.f32 %v213, %v4052
  %v4087 = vmul.f32 %v214, %v4052
  %v4088 = vmul.f32 %v215, %v4052
  %v4089 = vmul.f32 %v216, %v4052
  %v4090 = vmul.f32 %v217, %v4052
  %v4091 = vmul.f32 %v218, %v4052
  %v4092 = vmul.f32 %v219, %v4052
  %v4093 = vmul.f32 %v220, %v4052
  %v4094 = vmul.f32 %v221, %v4052
  %v4095 = vmul.f32 %v222, %v4052
  %v4096 = vmul.f32 %v223, %v4052
  %v4097 = vmul.f32 %v224, %v4052
  %v4098 = vmul.f32 %v225, %v4052
  %v4099 = vmul.f32 %v226, %v4052
  %v4100 = vmul.f32 %v227, %v4052
  %v4101 = vmul.f32 %v228, %v4052
  %v4102 = vmul.f32 %v229, %v4052
  %v4103 = vmul.f32 %v230, %v4052
  %v4104 = vmul.f32 %v231, %v4052
  %v4105 = vmul.f32 %v232, %v4052
  %v4106 = vmul.f32 %v233, %v4052
  %v4107 = vmul.f32 %v234, %v4052
  %v4108 = vmul.f32 %v235, %v4052
  %v4109 = vmul.f32 %v236, %v4052
  %v4110 = vmul.f32 %v237, %v4052
  %v4111 = vmul.f32 %v238, %v4052
  %v4112 = vmul.f32 %v239, %v4052
  %v4113 = vmul.f32 %v240, %v4052
  %v4114 = vmul.f32 %v241, %v4052
  %v4115 = vmul.f32 %v242, %v4052
  %v4116 = vmul.f32 %v243, %v4052
  %v4117 = vmul.f32 %v244, %v4052
  %v4118 = vmul.f32 %v245, %v4052
  %v4119 = vmul.f32 %v246, %v4052
  %v4120 = vmul.f32 %v247, %v4052
  %v4121 = vmul.f32 %v248, %v4052
  %v4122 = vmul.f32 %v249, %v4052
  %v4123 = vmul.f32 %v250, %v4052
  %v4124 = vmul.f32 %v251, %v4052
  %v4125 = vmul.f32 %v252, %v4052
  %v4126 = vmul.f32 %v253, %v4052
  %v4127 = vmul.f32 %v254, %v4052
  %v4128 = vmul.f32 %v255, %v4052
  %v4129 = vmul.f32 %v256, %v4052
  %v4130 = vmul.f32 %v257, %v4052
  %v4131 = vmul.f32 %v258, %v4052
  %v4132 = vmul.f32 %v259, %v4052
  %v4133 = vmul.f32 %v260, %v4052
  %v4134 = vmul.f32 %v261, %v4052
  %v4135 = vmul.f32 %v262, %v4052
  %v4136 = vmul.f32 %v263, %v4052
  %v4137 = vmul.f32 %v264, %v4052
  %v4138 = vmul.f32 %v265, %v4052
  %v4139 = vmul.f32 %v266, %v4052
  %v4140 = vmul.f32 %v267, %v4052
  %v4141 = vmul.f32 %v268, %v4052
  %v4142 = vmul.f32 %v269, %v4052
  %v4143 = vmul.f32 %v270, %v4052
  %v4144 = vmul.f32 %v271, %v4052
  %v4145 = vmul.f32 %v272, %v4052
  %v4146 = vmul.f32 %v273, %v4052
  %v4147 = vmul.f32 %v274, %v4052
  %v4148 = vmul.f32 %v275, %v4052
  %v4149 = vmul.f32 %v276, %v4052
  %v4150 = vmul.f32 %v277, %v4052
  %v4151 = vmul.f32 %v278, %v4052
  %v4152 = vmul.f32 %v279, %v4052
  %v4153 = vmul.f32 %v280, %v4052
  %v4154 = vmul.f32 %v281, %v4052
  %v4155 = vmul.f32 %v282, %v4052
  %v4156 = vmul.f32 %v283, %v4052
  %v4157 = vmul.f32 %v284, %v4052
  %v4158 = vmul.f32 %v285, %v4052
  %v4159 = vmul.f32 %v286, %v4052
  %v4160 = vmul.f32 %v287, %v4052
  %v4161 = vmul.f32 %v288, %v4052
  %v4162 = vmul.f32 %v289, %v4052
  %v4163 = vmul.f32 %v290, %v4052
  %v4164 = vmul.f32 %v291, %v4052
  %v4165 = vmul.f32 %v292, %v4052
  %v4166 = vmul.f32 %v293, %v4052
  %v4167 = vmul.f32 %v294, %v4052
  %v4168 = vmul.f32 %v295, %v4052
  %v4169 = vmul.f32 %v296, %v4052
  %v4170 = vmul.f32 %v297, %v4052
  %v4171 = vmul.f32 %v298, %v4052
  %v4172 = vmul.f32 %v299, %v4052
  %v4173 = vmul.f32 %v300, %v4052
  %v4174 = vmul.f32 %v301, %v4052
  %v4175 = vmul.f32 %v302, %v4052
  %v4176 = vmul.f32 %v303, %v4052
  %v4177 = vmul.f32 %v304, %v4052
  %v4178 = vmul.f32 %v305, %v4052
  %v4179 = vmul.f32 %v306, %v4052
  %v4180 = vmul.f32 %v307, %v4052
  %v4181 = vmul.f32 %v308, %v4052
  %v4182 = vmul.f32 %v309, %v4052
  %v4183 = vmul.f32 %v310, %v4052
  %v4184 = vmul.f32 %v311, %v4052
  %v4185 = vmul.f32 %v312, %v4052
  %v4186 = vmul.f32 %v313, %v4052
  %v4187 = vmul.f32 %v314, %v4052
  %v4188 = vmul.f32 %v315, %v4052
  %v4189 = vmul.f32 %v316, %v4052
  %v4190 = vmul.f32 %v317, %v4052
  %v4191 = vmul.f32 %v318, %v4052
  %v4192 = vmul.f32 %v319, %v4052
  %v4333 = vrot.slane %v4053, 1
  %v4334 = vrot.slane %v4054, 1
  %v4335 = vsel %vm835, %v4333, %v4334
  %v4336 = vrot.slane %v4055, 1
  %v4337 = vsel %vm835, %v4334, %v4336
  %v4338 = vrot.slane %v4056, 1
  %v4339 = vsel %vm835, %v4336, %v4338
  %v4340 = vrot.slane %v4057, 1
  %v4341 = vsel %vm835, %v4338, %v4340
  %v4342 = vrot.slane %v4058, 1
  %v4343 = vrot.slane %v4059, 1
  %v4344 = vsel %vm835, %v4342, %v4343
  %v4345 = vrot.slane %v4060, 1
  %v4346 = vsel %vm835, %v4343, %v4345
  %v4347 = vrot.slane %v4061, 1
  %v4348 = vsel %vm835, %v4345, %v4347
  %v4349 = vrot.slane %v4062, 1
  %v4350 = vsel %vm835, %v4347, %v4349
  %v4351 = vrot.slane %v4063, 1
  %v4352 = vrot.slane %v4064, 1
  %v4353 = vsel %vm835, %v4351, %v4352
  %v4354 = vrot.slane %v4065, 1
  %v4355 = vsel %vm835, %v4352, %v4354
  %v4356 = vrot.slane %v4066, 1
  %v4357 = vsel %vm835, %v4354, %v4356
  %v4358 = vrot.slane %v4067, 1
  %v4359 = vsel %vm835, %v4356, %v4358
  %v4360 = vrot.slane %v4068, 1
  %v4361 = vrot.slane %v4069, 1
  %v4362 = vsel %vm835, %v4360, %v4361
  %v4363 = vrot.slane %v4070, 1
  %v4364 = vsel %vm835, %v4361, %v4363
  %v4365 = vrot.slane %v4071, 1
  %v4366 = vsel %vm835, %v4363, %v4365
  %v4367 = vrot.slane %v4072, 1
  %v4368 = vsel %vm835, %v4365, %v4367
  %v4369 = vrot.slane %v4073, 1
  %v4370 = vrot.slane %v4074, 1
  %v4371 = vsel %vm835, %v4369, %v4370
  %v4372 = vrot.slane %v4075, 1
  %v4373 = vsel %vm835, %v4370, %v4372
  %v4374 = vrot.slane %v4076, 1
  %v4375 = vsel %vm835, %v4372, %v4374
  %v4376 = vrot.slane %v4077, 1
  %v4377 = vsel %vm835, %v4374, %v4376
  %v4378 = vrot.slane %v4078, 1
  %v4379 = vrot.slane %v4079, 1
  %v4380 = vsel %vm835, %v4378, %v4379
  %v4381 = vrot.slane %v4080, 1
  %v4382 = vsel %vm835, %v4379, %v4381
  %v4383 = vrot.slane %v4081, 1
  %v4384 = vsel %vm835, %v4381, %v4383
  %v4385 = vrot.slane %v4082, 1
  %v4386 = vsel %vm835, %v4383, %v4385
  %v4387 = vrot.slane %v4083, 1
  %v4388 = vrot.slane %v4084, 1
  %v4389 = vsel %vm835, %v4387, %v4388
  %v4390 = vrot.slane %v4085, 1
  %v4391 = vsel %vm835, %v4388, %v4390
  %v4392 = vrot.slane %v4086, 1
  %v4393 = vsel %vm835, %v4390, %v4392
  %v4394 = vrot.slane %v4087, 1
  %v4395 = vsel %vm835, %v4392, %v4394
  %v4396 = vrot.slane %v4088, 1
  %v4397 = vrot.slane %v4089, 1
  %v4398 = vsel %vm835, %v4396, %v4397
  %v4399 = vrot.slane %v4090, 1
  %v4400 = vsel %vm835, %v4397, %v4399
  %v4401 = vrot.slane %v4091, 1
  %v4402 = vsel %vm835, %v4399, %v4401
  %v4403 = vrot.slane %v4092, 1
  %v4404 = vsel %vm835, %v4401, %v4403
  %v4405 = vrot.slane %v4093, 1
  %v4406 = vrot.slane %v4094, 1
  %v4407 = vsel %vm835, %v4405, %v4406
  %v4408 = vrot.slane %v4095, 1
  %v4409 = vsel %vm835, %v4406, %v4408
  %v4410 = vrot.slane %v4096, 1
  %v4411 = vsel %vm835, %v4408, %v4410
  %v4412 = vrot.slane %v4097, 1
  %v4413 = vsel %vm835, %v4410, %v4412
  %v4414 = vrot.slane %v4098, 1
  %v4415 = vrot.slane %v4099, 1
  %v4416 = vsel %vm835, %v4414, %v4415
  %v4417 = vrot.slane %v4100, 1
  %v4418 = vsel %vm835, %v4415, %v4417
  %v4419 = vrot.slane %v4101, 1
  %v4420 = vsel %vm835, %v4417, %v4419
  %v4421 = vrot.slane %v4102, 1
  %v4422 = vsel %vm835, %v4419, %v4421
  %v4423 = vrot.slane %v4103, 1
  %v4424 = vrot.slane %v4104, 1
  %v4425 = vsel %vm835, %v4423, %v4424
  %v4426 = vrot.slane %v4105, 1
  %v4427 = vsel %vm835, %v4424, %v4426
  %v4428 = vrot.slane %v4106, 1
  %v4429 = vsel %vm835, %v4426, %v4428
  %v4430 = vrot.slane %v4107, 1
  %v4431 = vsel %vm835, %v4428, %v4430
  %v4432 = vrot.slane %v4108, 1
  %v4433 = vrot.slane %v4109, 1
  %v4434 = vsel %vm835, %v4432, %v4433
  %v4435 = vrot.slane %v4110, 1
  %v4436 = vsel %vm835, %v4433, %v4435
  %v4437 = vrot.slane %v4111, 1
  %v4438 = vsel %vm835, %v4435, %v4437
  %v4439 = vrot.slane %v4112, 1
  %v4440 = vsel %vm835, %v4437, %v4439
  %v4441 = vrot.slane %v4113, 1
  %v4442 = vrot.slane %v4114, 1
  %v4443 = vsel %vm835, %v4441, %v4442
  %v4444 = vrot.slane %v4115, 1
  %v4445 = vsel %vm835, %v4442, %v4444
  %v4446 = vrot.slane %v4116, 1
  %v4447 = vsel %vm835, %v4444, %v4446
  %v4448 = vrot.slane %v4117, 1
  %v4449 = vsel %vm835, %v4446, %v4448
  %v4450 = vrot.slane %v4118, 1
  %v4451 = vrot.slane %v4119, 1
  %v4452 = vsel %vm835, %v4450, %v4451
  %v4453 = vrot.slane %v4120, 1
  %v4454 = vsel %vm835, %v4451, %v4453
  %v4455 = vrot.slane %v4121, 1
  %v4456 = vsel %vm835, %v4453, %v4455
  %v4457 = vrot.slane %v4122, 1
  %v4458 = vsel %vm835, %v4455, %v4457
  %v4459 = vrot.slane %v4123, 1
  %v4460 = vrot.slane %v4124, 1
  %v4461 = vsel %vm835, %v4459, %v4460
  %v4462 = vrot.slane %v4125, 1
  %v4463 = vsel %vm835, %v4460, %v4462
  %v4464 = vrot.slane %v4126, 1
  %v4465 = vsel %vm835, %v4462, %v4464
  %v4466 = vrot.slane %v4127, 1
  %v4467 = vsel %vm835, %v4464, %v4466
  %v4468 = vrot.slane %v4128, 1
  %v4469 = vrot.slane %v4129, 1
  %v4470 = vsel %vm835, %v4468, %v4469
  %v4471 = vrot.slane %v4130, 1
  %v4472 = vsel %vm835, %v4469, %v4471
  %v4473 = vrot.slane %v4131, 1
  %v4474 = vsel %vm835, %v4471, %v4473
  %v4475 = vrot.slane %v4132, 1
  %v4476 = vsel %vm835, %v4473, %v4475
  %v4477 = vrot.slane %v4133, 1
  %v4478 = vrot.slane %v4134, 1
  %v4479 = vsel %vm835, %v4477, %v4478
  %v4480 = vrot.slane %v4135, 1
  %v4481 = vsel %vm835, %v4478, %v4480
  %v4482 = vrot.slane %v4136, 1
  %v4483 = vsel %vm835, %v4480, %v4482
  %v4484 = vrot.slane %v4137, 1
  %v4485 = vsel %vm835, %v4482, %v4484
  %v4486 = vrot.slane %v4138, 1
  %v4487 = vrot.slane %v4139, 1
  %v4488 = vsel %vm835, %v4486, %v4487
  %v4489 = vrot.slane %v4140, 1
  %v4490 = vsel %vm835, %v4487, %v4489
  %v4491 = vrot.slane %v4141, 1
  %v4492 = vsel %vm835, %v4489, %v4491
  %v4493 = vrot.slane %v4142, 1
  %v4494 = vsel %vm835, %v4491, %v4493
  %v4495 = vrot.slane %v4143, 1
  %v4496 = vrot.slane %v4144, 1
  %v4497 = vsel %vm835, %v4495, %v4496
  %v4498 = vrot.slane %v4145, 1
  %v4499 = vsel %vm835, %v4496, %v4498
  %v4500 = vrot.slane %v4146, 1
  %v4501 = vsel %vm835, %v4498, %v4500
  %v4502 = vrot.slane %v4147, 1
  %v4503 = vsel %vm835, %v4500, %v4502
  %v4504 = vrot.slane %v4148, 1
  %v4505 = vrot.slane %v4149, 1
  %v4506 = vsel %vm835, %v4504, %v4505
  %v4507 = vrot.slane %v4150, 1
  %v4508 = vsel %vm835, %v4505, %v4507
  %v4509 = vrot.slane %v4151, 1
  %v4510 = vsel %vm835, %v4507, %v4509
  %v4511 = vrot.slane %v4152, 1
  %v4512 = vsel %vm835, %v4509, %v4511
  %v4513 = vrot.slane %v4153, 1
  %v4514 = vrot.slane %v4154, 1
  %v4515 = vsel %vm835, %v4513, %v4514
  %v4516 = vrot.slane %v4155, 1
  %v4517 = vsel %vm835, %v4514, %v4516
  %v4518 = vrot.slane %v4156, 1
  %v4519 = vsel %vm835, %v4516, %v4518
  %v4520 = vrot.slane %v4157, 1
  %v4521 = vsel %vm835, %v4518, %v4520
  %v4522 = vrot.slane %v4158, 1
  %v4523 = vrot.slane %v4159, 1
  %v4524 = vsel %vm835, %v4522, %v4523
  %v4525 = vrot.slane %v4160, 1
  %v4526 = vsel %vm835, %v4523, %v4525
  %v4527 = vrot.slane %v4161, 1
  %v4528 = vsel %vm835, %v4525, %v4527
  %v4529 = vrot.slane %v4162, 1
  %v4530 = vsel %vm835, %v4527, %v4529
  %v4531 = vrot.slane %v4163, 1
  %v4532 = vrot.slane %v4164, 1
  %v4533 = vsel %vm835, %v4531, %v4532
  %v4534 = vrot.slane %v4165, 1
  %v4535 = vsel %vm835, %v4532, %v4534
  %v4536 = vrot.slane %v4166, 1
  %v4537 = vsel %vm835, %v4534, %v4536
  %v4538 = vrot.slane %v4167, 1
  %v4539 = vsel %vm835, %v4536, %v4538
  %v4540 = vrot.slane %v4168, 1
  %v4541 = vrot.slane %v4169, 1
  %v4542 = vsel %vm835, %v4540, %v4541
  %v4543 = vrot.slane %v4170, 1
  %v4544 = vsel %vm835, %v4541, %v4543
  %v4545 = vrot.slane %v4171, 1
  %v4546 = vsel %vm835, %v4543, %v4545
  %v4547 = vrot.slane %v4172, 1
  %v4548 = vsel %vm835, %v4545, %v4547
  %v4549 = vrot.slane %v4173, 1
  %v4550 = vrot.slane %v4174, 1
  %v4551 = vsel %vm835, %v4549, %v4550
  %v4552 = vrot.slane %v4175, 1
  %v4553 = vsel %vm835, %v4550, %v4552
  %v4554 = vrot.slane %v4176, 1
  %v4555 = vsel %vm835, %v4552, %v4554
  %v4556 = vrot.slane %v4177, 1
  %v4557 = vsel %vm835, %v4554, %v4556
  %v4558 = vrot.slane %v4178, 1
  %v4559 = vrot.slane %v4179, 1
  %v4560 = vsel %vm835, %v4558, %v4559
  %v4561 = vrot.slane %v4180, 1
  %v4562 = vsel %vm835, %v4559, %v4561
  %v4563 = vrot.slane %v4181, 1
  %v4564 = vsel %vm835, %v4561, %v4563
  %v4565 = vrot.slane %v4182, 1
  %v4566 = vsel %vm835, %v4563, %v4565
  %v4567 = vrot.slane %v4183, 1
  %v4568 = vrot.slane %v4184, 1
  %v4569 = vsel %vm835, %v4567, %v4568
  %v4570 = vrot.slane %v4185, 1
  %v4571 = vsel %vm835, %v4568, %v4570
  %v4572 = vrot.slane %v4186, 1
  %v4573 = vsel %vm835, %v4570, %v4572
  %v4574 = vrot.slane %v4187, 1
  %v4575 = vsel %vm835, %v4572, %v4574
  %v4576 = vrot.slane %v4188, 1
  %v4577 = vrot.slane %v4189, 1
  %v4578 = vsel %vm835, %v4576, %v4577
  %v4579 = vrot.slane %v4190, 1
  %v4580 = vsel %vm835, %v4577, %v4579
  %v4581 = vrot.slane %v4191, 1
  %v4582 = vsel %vm835, %v4579, %v4581
  %v4583 = vrot.slane %v4192, 1
  %v4584 = vsel %vm835, %v4581, %v4583
  %v4697 = vadd.f32 %v3937, %v4335
  %v4698 = vadd.f32 %v3938, %v4337
  %v4699 = vadd.f32 %v3939, %v4339
  %v4700 = vadd.f32 %v3940, %v4341
  %v4701 = vadd.f32 %v3941, %v4344
  %v4702 = vadd.f32 %v3942, %v4346
  %v4703 = vadd.f32 %v3943, %v4348
  %v4704 = vadd.f32 %v3944, %v4350
  %v4705 = vadd.f32 %v3945, %v4353
  %v4706 = vadd.f32 %v3946, %v4355
  %v4707 = vadd.f32 %v3947, %v4357
  %v4708 = vadd.f32 %v3948, %v4359
  %v4709 = vadd.f32 %v3949, %v4362
  %v4710 = vadd.f32 %v3950, %v4364
  %v4711 = vadd.f32 %v3951, %v4366
  %v4712 = vadd.f32 %v3952, %v4368
  %v4713 = vadd.f32 %v3953, %v4371
  %v4714 = vadd.f32 %v3954, %v4373
  %v4715 = vadd.f32 %v3955, %v4375
  %v4716 = vadd.f32 %v3956, %v4377
  %v4717 = vadd.f32 %v3957, %v4380
  %v4718 = vadd.f32 %v3958, %v4382
  %v4719 = vadd.f32 %v3959, %v4384
  %v4720 = vadd.f32 %v3960, %v4386
  %v4721 = vadd.f32 %v3961, %v4389
  %v4722 = vadd.f32 %v3962, %v4391
  %v4723 = vadd.f32 %v3963, %v4393
  %v4724 = vadd.f32 %v3964, %v4395
  %v4725 = vadd.f32 %v3965, %v4398
  %v4726 = vadd.f32 %v3966, %v4400
  %v4727 = vadd.f32 %v3967, %v4402
  %v4728 = vadd.f32 %v3968, %v4404
  %v4729 = vadd.f32 %v3969, %v4407
  %v4730 = vadd.f32 %v3970, %v4409
  %v4731 = vadd.f32 %v3971, %v4411
  %v4732 = vadd.f32 %v3972, %v4413
  %v4733 = vadd.f32 %v3973, %v4416
  %v4734 = vadd.f32 %v3974, %v4418
  %v4735 = vadd.f32 %v3975, %v4420
  %v4736 = vadd.f32 %v3976, %v4422
  %v4737 = vadd.f32 %v3977, %v4425
  %v4738 = vadd.f32 %v3978, %v4427
  %v4739 = vadd.f32 %v3979, %v4429
  %v4740 = vadd.f32 %v3980, %v4431
  %v4741 = vadd.f32 %v3981, %v4434
  %v4742 = vadd.f32 %v3982, %v4436
  %v4743 = vadd.f32 %v3983, %v4438
  %v4744 = vadd.f32 %v3984, %v4440
  %v4745 = vadd.f32 %v3985, %v4443
  %v4746 = vadd.f32 %v3986, %v4445
  %v4747 = vadd.f32 %v3987, %v4447
  %v4748 = vadd.f32 %v3988, %v4449
  %v4749 = vadd.f32 %v3989, %v4452
  %v4750 = vadd.f32 %v3990, %v4454
  %v4751 = vadd.f32 %v3991, %v4456
  %v4752 = vadd.f32 %v3992, %v4458
  %v4753 = vadd.f32 %v3993, %v4461
  %v4754 = vadd.f32 %v3994, %v4463
  %v4755 = vadd.f32 %v3995, %v4465
  %v4756 = vadd.f32 %v3996, %v4467
  %v4757 = vadd.f32 %v3997, %v4470
  %v4758 = vadd.f32 %v3998, %v4472
  %v4759 = vadd.f32 %v3999, %v4474
  %v4760 = vadd.f32 %v4000, %v4476
  %v4761 = vadd.f32 %v4001, %v4479
  %v4762 = vadd.f32 %v4002, %v4481
  %v4763 = vadd.f32 %v4003, %v4483
  %v4764 = vadd.f32 %v4004, %v4485
  %v4765 = vadd.f32 %v4005, %v4488
  %v4766 = vadd.f32 %v4006, %v4490
  %v4767 = vadd.f32 %v4007, %v4492
  %v4768 = vadd.f32 %v4008, %v4494
  %v4769 = vadd.f32 %v4009, %v4497
  %v4770 = vadd.f32 %v4010, %v4499
  %v4771 = vadd.f32 %v4011, %v4501
  %v4772 = vadd.f32 %v4012, %v4503
  %v4773 = vadd.f32 %v4013, %v4506
  %v4774 = vadd.f32 %v4014, %v4508
  %v4775 = vadd.f32 %v4015, %v4510
  %v4776 = vadd.f32 %v4016, %v4512
  %v4777 = vadd.f32 %v4017, %v4515
  %v4778 = vadd.f32 %v4018, %v4517
  %v4779 = vadd.f32 %v4019, %v4519
  %v4780 = vadd.f32 %v4020, %v4521
  %v4781 = vadd.f32 %v4021, %v4524
  %v4782 = vadd.f32 %v4022, %v4526
  %v4783 = vadd.f32 %v4023, %v4528
  %v4784 = vadd.f32 %v4024, %v4530
  %v4785 = vadd.f32 %v4025, %v4533
  %v4786 = vadd.f32 %v4026, %v4535
  %v4787 = vadd.f32 %v4027, %v4537
  %v4788 = vadd.f32 %v4028, %v4539
  %v4789 = vadd.f32 %v4029, %v4542
  %v4790 = vadd.f32 %v4030, %v4544
  %v4791 = vadd.f32 %v4031, %v4546
  %v4792 = vadd.f32 %v4032, %v4548
  %v4793 = vadd.f32 %v4033, %v4551
  %v4794 = vadd.f32 %v4034, %v4553
  %v4795 = vadd.f32 %v4035, %v4555
  %v4796 = vadd.f32 %v4036, %v4557
  %v4797 = vadd.f32 %v4037, %v4560
  %v4798 = vadd.f32 %v4038, %v4562
  %v4799 = vadd.f32 %v4039, %v4564
  %v4800 = vadd.f32 %v4040, %v4566
  %v4801 = vadd.f32 %v4041, %v4569
  %v4802 = vadd.f32 %v4042, %v4571
  %v4803 = vadd.f32 %v4043, %v4573
  %v4804 = vadd.f32 %v4044, %v4575
  %v4805 = vadd.f32 %v4045, %v4578
  %v4806 = vadd.f32 %v4046, %v4580
  %v4807 = vadd.f32 %v4047, %v4582
  %v4808 = vadd.f32 %v4048, %v4584
  %v4809 = vlaneseq
  %v4810 = vshrl.u32 %v4809, 7
  %v4811 = vsub.s32 2, %v4810
  %v4812 = vrot.slane %v322, %v4811
  %v4813 = vmul.f32 %v180, %v4812
  %v4814 = vmul.f32 %v181, %v4812
  %v4815 = vmul.f32 %v182, %v4812
  %v4816 = vmul.f32 %v183, %v4812
  %v4817 = vmul.f32 %v184, %v4812
  %v4818 = vmul.f32 %v185, %v4812
  %v4819 = vmul.f32 %v186, %v4812
  %v4820 = vmul.f32 %v187, %v4812
  %v4821 = vmul.f32 %v188, %v4812
  %v4822 = vmul.f32 %v189, %v4812
  %v4823 = vmul.f32 %v190, %v4812
  %v4824 = vmul.f32 %v191, %v4812
  %v4825 = vmul.f32 %v192, %v4812
  %v4826 = vmul.f32 %v193, %v4812
  %v4827 = vmul.f32 %v194, %v4812
  %v4828 = vmul.f32 %v195, %v4812
  %v4829 = vmul.f32 %v196, %v4812
  %v4830 = vmul.f32 %v197, %v4812
  %v4831 = vmul.f32 %v198, %v4812
  %v4832 = vmul.f32 %v199, %v4812
  %v4833 = vmul.f32 %v200, %v4812
  %v4834 = vmul.f32 %v201, %v4812
  %v4835 = vmul.f32 %v202, %v4812
  %v4836 = vmul.f32 %v203, %v4812
  %v4837 = vmul.f32 %v204, %v4812
  %v4838 = vmul.f32 %v205, %v4812
  %v4839 = vmul.f32 %v206, %v4812
  %v4840 = vmul.f32 %v207, %v4812
  %v4841 = vmul.f32 %v208, %v4812
  %v4842 = vmul.f32 %v209, %v4812
  %v4843 = vmul.f32 %v210, %v4812
  %v4844 = vmul.f32 %v211, %v4812
  %v4845 = vmul.f32 %v212, %v4812
  %v4846 = vmul.f32 %v213, %v4812
  %v4847 = vmul.f32 %v214, %v4812
  %v4848 = vmul.f32 %v215, %v4812
  %v4849 = vmul.f32 %v216, %v4812
  %v4850 = vmul.f32 %v217, %v4812
  %v4851 = vmul.f32 %v218, %v4812
  %v4852 = vmul.f32 %v219, %v4812
  %v4853 = vmul.f32 %v220, %v4812
  %v4854 = vmul.f32 %v221, %v4812
  %v4855 = vmul.f32 %v222, %v4812
  %v4856 = vmul.f32 %v223, %v4812
  %v4857 = vmul.f32 %v224, %v4812
  %v4858 = vmul.f32 %v225, %v4812
  %v4859 = vmul.f32 %v226, %v4812
  %v4860 = vmul.f32 %v227, %v4812
  %v4861 = vmul.f32 %v228, %v4812
  %v4862 = vmul.f32 %v229, %v4812
  %v4863 = vmul.f32 %v230, %v4812
  %v4864 = vmul.f32 %v231, %v4812
  %v4865 = vmul.f32 %v232, %v4812
  %v4866 = vmul.f32 %v233, %v4812
  %v4867 = vmul.f32 %v234, %v4812
  %v4868 = vmul.f32 %v235, %v4812
  %v4869 = vmul.f32 %v236, %v4812
  %v4870 = vmul.f32 %v237, %v4812
  %v4871 = vmul.f32 %v238, %v4812
  %v4872 = vmul.f32 %v239, %v4812
  %v4873 = vmul.f32 %v240, %v4812
  %v4874 = vmul.f32 %v241, %v4812
  %v4875 = vmul.f32 %v242, %v4812
  %v4876 = vmul.f32 %v243, %v4812
  %v4877 = vmul.f32 %v244, %v4812
  %v4878 = vmul.f32 %v245, %v4812
  %v4879 = vmul.f32 %v246, %v4812
  %v4880 = vmul.f32 %v247, %v4812
  %v4881 = vmul.f32 %v248, %v4812
  %v4882 = vmul.f32 %v249, %v4812
  %v4883 = vmul.f32 %v250, %v4812
  %v4884 = vmul.f32 %v251, %v4812
  %v4885 = vmul.f32 %v252, %v4812
  %v4886 = vmul.f32 %v253, %v4812
  %v4887 = vmul.f32 %v254, %v4812
  %v4888 = vmul.f32 %v255, %v4812
  %v4889 = vmul.f32 %v256, %v4812
  %v4890 = vmul.f32 %v257, %v4812
  %v4891 = vmul.f32 %v258, %v4812
  %v4892 = vmul.f32 %v259, %v4812
  %v4893 = vmul.f32 %v260, %v4812
  %v4894 = vmul.f32 %v261, %v4812
  %v4895 = vmul.f32 %v262, %v4812
  %v4896 = vmul.f32 %v263, %v4812
  %v4897 = vmul.f32 %v264, %v4812
  %v4898 = vmul.f32 %v265, %v4812
  %v4899 = vmul.f32 %v266, %v4812
  %v4900 = vmul.f32 %v267, %v4812
  %v4901 = vmul.f32 %v268, %v4812
  %v4902 = vmul.f32 %v269, %v4812
  %v4903 = vmul.f32 %v270, %v4812
  %v4904 = vmul.f32 %v271, %v4812
  %v4905 = vmul.f32 %v272, %v4812
  %v4906 = vmul.f32 %v273, %v4812
  %v4907 = vmul.f32 %v274, %v4812
  %v4908 = vmul.f32 %v275, %v4812
  %v4909 = vmul.f32 %v276, %v4812
  %v4910 = vmul.f32 %v277, %v4812
  %v4911 = vmul.f32 %v278, %v4812
  %v4912 = vmul.f32 %v279, %v4812
  %v4913 = vmul.f32 %v280, %v4812
  %v4914 = vmul.f32 %v281, %v4812
  %v4915 = vmul.f32 %v282, %v4812
  %v4916 = vmul.f32 %v283, %v4812
  %v4917 = vmul.f32 %v284, %v4812
  %v4918 = vmul.f32 %v285, %v4812
  %v4919 = vmul.f32 %v286, %v4812
  %v4920 = vmul.f32 %v287, %v4812
  %v4921 = vmul.f32 %v288, %v4812
  %v4922 = vmul.f32 %v289, %v4812
  %v4923 = vmul.f32 %v290, %v4812
  %v4924 = vmul.f32 %v291, %v4812
  %v4925 = vmul.f32 %v292, %v4812
  %v4926 = vmul.f32 %v293, %v4812
  %v4927 = vmul.f32 %v294, %v4812
  %v4928 = vmul.f32 %v295, %v4812
  %v4929 = vmul.f32 %v296, %v4812
  %v4930 = vmul.f32 %v297, %v4812
  %v4931 = vmul.f32 %v298, %v4812
  %v4932 = vmul.f32 %v299, %v4812
  %v4933 = vmul.f32 %v300, %v4812
  %v4934 = vmul.f32 %v301, %v4812
  %v4935 = vmul.f32 %v302, %v4812
  %v4936 = vmul.f32 %v303, %v4812
  %v4937 = vmul.f32 %v304, %v4812
  %v4938 = vmul.f32 %v305, %v4812
  %v4939 = vmul.f32 %v306, %v4812
  %v4940 = vmul.f32 %v307, %v4812
  %v4941 = vmul.f32 %v308, %v4812
  %v4942 = vmul.f32 %v309, %v4812
  %v4943 = vmul.f32 %v310, %v4812
  %v4944 = vmul.f32 %v311, %v4812
  %v4945 = vmul.f32 %v312, %v4812
  %v4946 = vmul.f32 %v313, %v4812
  %v4947 = vmul.f32 %v314, %v4812
  %v4948 = vmul.f32 %v315, %v4812
  %v4949 = vmul.f32 %v316, %v4812
  %v4950 = vmul.f32 %v317, %v4812
  %v4951 = vmul.f32 %v318, %v4812
  %v4952 = vmul.f32 %v319, %v4812
  %v5093 = vrot.slane %v4813, 2
  %v5094 = vrot.slane %v4814, 2
  %v5095 = vsel %vm1596, %v5093, %v5094
  %v5096 = vrot.slane %v4815, 2
  %v5097 = vsel %vm1596, %v5094, %v5096
  %v5098 = vrot.slane %v4816, 2
  %v5099 = vsel %vm1596, %v5096, %v5098
  %v5100 = vrot.slane %v4817, 2
  %v5101 = vsel %vm1596, %v5098, %v5100
  %v5102 = vrot.slane %v4818, 2
  %v5103 = vrot.slane %v4819, 2
  %v5104 = vsel %vm1596, %v5102, %v5103
  %v5105 = vrot.slane %v4820, 2
  %v5106 = vsel %vm1596, %v5103, %v5105
  %v5107 = vrot.slane %v4821, 2
  %v5108 = vsel %vm1596, %v5105, %v5107
  %v5109 = vrot.slane %v4822, 2
  %v5110 = vsel %vm1596, %v5107, %v5109
  %v5111 = vrot.slane %v4823, 2
  %v5112 = vrot.slane %v4824, 2
  %v5113 = vsel %vm1596, %v5111, %v5112
  %v5114 = vrot.slane %v4825, 2
  %v5115 = vsel %vm1596, %v5112, %v5114
  %v5116 = vrot.slane %v4826, 2
  %v5117 = vsel %vm1596, %v5114, %v5116
  %v5118 = vrot.slane %v4827, 2
  %v5119 = vsel %vm1596, %v5116, %v5118
  %v5120 = vrot.slane %v4828, 2
  %v5121 = vrot.slane %v4829, 2
  %v5122 = vsel %vm1596, %v5120, %v5121
  %v5123 = vrot.slane %v4830, 2
  %v5124 = vsel %vm1596, %v5121, %v5123
  %v5125 = vrot.slane %v4831, 2
  %v5126 = vsel %vm1596, %v5123, %v5125
  %v5127 = vrot.slane %v4832, 2
  %v5128 = vsel %vm1596, %v5125, %v5127
  %v5129 = vrot.slane %v4833, 2
  %v5130 = vrot.slane %v4834, 2
  %v5131 = vsel %vm1596, %v5129, %v5130
  %v5132 = vrot.slane %v4835, 2
  %v5133 = vsel %vm1596, %v5130, %v5132
  %v5134 = vrot.slane %v4836, 2
  %v5135 = vsel %vm1596, %v5132, %v5134
  %v5136 = vrot.slane %v4837, 2
  %v5137 = vsel %vm1596, %v5134, %v5136
  %v5138 = vrot.slane %v4838, 2
  %v5139 = vrot.slane %v4839, 2
  %v5140 = vsel %vm1596, %v5138, %v5139
  %v5141 = vrot.slane %v4840, 2
  %v5142 = vsel %vm1596, %v5139, %v5141
  %v5143 = vrot.slane %v4841, 2
  %v5144 = vsel %vm1596, %v5141, %v5143
  %v5145 = vrot.slane %v4842, 2
  %v5146 = vsel %vm1596, %v5143, %v5145
  %v5147 = vrot.slane %v4843, 2
  %v5148 = vrot.slane %v4844, 2
  %v5149 = vsel %vm1596, %v5147, %v5148
  %v5150 = vrot.slane %v4845, 2
  %v5151 = vsel %vm1596, %v5148, %v5150
  %v5152 = vrot.slane %v4846, 2
  %v5153 = vsel %vm1596, %v5150, %v5152
  %v5154 = vrot.slane %v4847, 2
  %v5155 = vsel %vm1596, %v5152, %v5154
  %v5156 = vrot.slane %v4848, 2
  %v5157 = vrot.slane %v4849, 2
  %v5158 = vsel %vm1596, %v5156, %v5157
  %v5159 = vrot.slane %v4850, 2
  %v5160 = vsel %vm1596, %v5157, %v5159
  %v5161 = vrot.slane %v4851, 2
  %v5162 = vsel %vm1596, %v5159, %v5161
  %v5163 = vrot.slane %v4852, 2
  %v5164 = vsel %vm1596, %v5161, %v5163
  %v5165 = vrot.slane %v4853, 2
  %v5166 = vrot.slane %v4854, 2
  %v5167 = vsel %vm1596, %v5165, %v5166
  %v5168 = vrot.slane %v4855, 2
  %v5169 = vsel %vm1596, %v5166, %v5168
  %v5170 = vrot.slane %v4856, 2
  %v5171 = vsel %vm1596, %v5168, %v5170
  %v5172 = vrot.slane %v4857, 2
  %v5173 = vsel %vm1596, %v5170, %v5172
  %v5174 = vrot.slane %v4858, 2
  %v5175 = vrot.slane %v4859, 2
  %v5176 = vsel %vm1596, %v5174, %v5175
  %v5177 = vrot.slane %v4860, 2
  %v5178 = vsel %vm1596, %v5175, %v5177
  %v5179 = vrot.slane %v4861, 2
  %v5180 = vsel %vm1596, %v5177, %v5179
  %v5181 = vrot.slane %v4862, 2
  %v5182 = vsel %vm1596, %v5179, %v5181
  %v5183 = vrot.slane %v4863, 2
  %v5184 = vrot.slane %v4864, 2
  %v5185 = vsel %vm1596, %v5183, %v5184
  %v5186 = vrot.slane %v4865, 2
  %v5187 = vsel %vm1596, %v5184, %v5186
  %v5188 = vrot.slane %v4866, 2
  %v5189 = vsel %vm1596, %v5186, %v5188
  %v5190 = vrot.slane %v4867, 2
  %v5191 = vsel %vm1596, %v5188, %v5190
  %v5192 = vrot.slane %v4868, 2
  %v5193 = vrot.slane %v4869, 2
  %v5194 = vsel %vm1596, %v5192, %v5193
  %v5195 = vrot.slane %v4870, 2
  %v5196 = vsel %vm1596, %v5193, %v5195
  %v5197 = vrot.slane %v4871, 2
  %v5198 = vsel %vm1596, %v5195, %v5197
  %v5199 = vrot.slane %v4872, 2
  %v5200 = vsel %vm1596, %v5197, %v5199
  %v5201 = vrot.slane %v4873, 2
  %v5202 = vrot.slane %v4874, 2
  %v5203 = vsel %vm1596, %v5201, %v5202
  %v5204 = vrot.slane %v4875, 2
  %v5205 = vsel %vm1596, %v5202, %v5204
  %v5206 = vrot.slane %v4876, 2
  %v5207 = vsel %vm1596, %v5204, %v5206
  %v5208 = vrot.slane %v4877, 2
  %v5209 = vsel %vm1596, %v5206, %v5208
  %v5210 = vrot.slane %v4878, 2
  %v5211 = vrot.slane %v4879, 2
  %v5212 = vsel %vm1596, %v5210, %v5211
  %v5213 = vrot.slane %v4880, 2
  %v5214 = vsel %vm1596, %v5211, %v5213
  %v5215 = vrot.slane %v4881, 2
  %v5216 = vsel %vm1596, %v5213, %v5215
  %v5217 = vrot.slane %v4882, 2
  %v5218 = vsel %vm1596, %v5215, %v5217
  %v5219 = vrot.slane %v4883, 2
  %v5220 = vrot.slane %v4884, 2
  %v5221 = vsel %vm1596, %v5219, %v5220
  %v5222 = vrot.slane %v4885, 2
  %v5223 = vsel %vm1596, %v5220, %v5222
  %v5224 = vrot.slane %v4886, 2
  %v5225 = vsel %vm1596, %v5222, %v5224
  %v5226 = vrot.slane %v4887, 2
  %v5227 = vsel %vm1596, %v5224, %v5226
  %v5228 = vrot.slane %v4888, 2
  %v5229 = vrot.slane %v4889, 2
  %v5230 = vsel %vm1596, %v5228, %v5229
  %v5231 = vrot.slane %v4890, 2
  %v5232 = vsel %vm1596, %v5229, %v5231
  %v5233 = vrot.slane %v4891, 2
  %v5234 = vsel %vm1596, %v5231, %v5233
  %v5235 = vrot.slane %v4892, 2
  %v5236 = vsel %vm1596, %v5233, %v5235
  %v5237 = vrot.slane %v4893, 2
  %v5238 = vrot.slane %v4894, 2
  %v5239 = vsel %vm1596, %v5237, %v5238
  %v5240 = vrot.slane %v4895, 2
  %v5241 = vsel %vm1596, %v5238, %v5240
  %v5242 = vrot.slane %v4896, 2
  %v5243 = vsel %vm1596, %v5240, %v5242
  %v5244 = vrot.slane %v4897, 2
  %v5245 = vsel %vm1596, %v5242, %v5244
  %v5246 = vrot.slane %v4898, 2
  %v5247 = vrot.slane %v4899, 2
  %v5248 = vsel %vm1596, %v5246, %v5247
  %v5249 = vrot.slane %v4900, 2
  %v5250 = vsel %vm1596, %v5247, %v5249
  %v5251 = vrot.slane %v4901, 2
  %v5252 = vsel %vm1596, %v5249, %v5251
  %v5253 = vrot.slane %v4902, 2
  %v5254 = vsel %vm1596, %v5251, %v5253
  %v5255 = vrot.slane %v4903, 2
  %v5256 = vrot.slane %v4904, 2
  %v5257 = vsel %vm1596, %v5255, %v5256
  %v5258 = vrot.slane %v4905, 2
  %v5259 = vsel %vm1596, %v5256, %v5258
  %v5260 = vrot.slane %v4906, 2
  %v5261 = vsel %vm1596, %v5258, %v5260
  %v5262 = vrot.slane %v4907, 2
  %v5263 = vsel %vm1596, %v5260, %v5262
  %v5264 = vrot.slane %v4908, 2
  %v5265 = vrot.slane %v4909, 2
  %v5266 = vsel %vm1596, %v5264, %v5265
  %v5267 = vrot.slane %v4910, 2
  %v5268 = vsel %vm1596, %v5265, %v5267
  %v5269 = vrot.slane %v4911, 2
  %v5270 = vsel %vm1596, %v5267, %v5269
  %v5271 = vrot.slane %v4912, 2
  %v5272 = vsel %vm1596, %v5269, %v5271
  %v5273 = vrot.slane %v4913, 2
  %v5274 = vrot.slane %v4914, 2
  %v5275 = vsel %vm1596, %v5273, %v5274
  %v5276 = vrot.slane %v4915, 2
  %v5277 = vsel %vm1596, %v5274, %v5276
  %v5278 = vrot.slane %v4916, 2
  %v5279 = vsel %vm1596, %v5276, %v5278
  %v5280 = vrot.slane %v4917, 2
  %v5281 = vsel %vm1596, %v5278, %v5280
  %v5282 = vrot.slane %v4918, 2
  %v5283 = vrot.slane %v4919, 2
  %v5284 = vsel %vm1596, %v5282, %v5283
  %v5285 = vrot.slane %v4920, 2
  %v5286 = vsel %vm1596, %v5283, %v5285
  %v5287 = vrot.slane %v4921, 2
  %v5288 = vsel %vm1596, %v5285, %v5287
  %v5289 = vrot.slane %v4922, 2
  %v5290 = vsel %vm1596, %v5287, %v5289
  %v5291 = vrot.slane %v4923, 2
  %v5292 = vrot.slane %v4924, 2
  %v5293 = vsel %vm1596, %v5291, %v5292
  %v5294 = vrot.slane %v4925, 2
  %v5295 = vsel %vm1596, %v5292, %v5294
  %v5296 = vrot.slane %v4926, 2
  %v5297 = vsel %vm1596, %v5294, %v5296
  %v5298 = vrot.slane %v4927, 2
  %v5299 = vsel %vm1596, %v5296, %v5298
  %v5300 = vrot.slane %v4928, 2
  %v5301 = vrot.slane %v4929, 2
  %v5302 = vsel %vm1596, %v5300, %v5301
  %v5303 = vrot.slane %v4930, 2
  %v5304 = vsel %vm1596, %v5301, %v5303
  %v5305 = vrot.slane %v4931, 2
  %v5306 = vsel %vm1596, %v5303, %v5305
  %v5307 = vrot.slane %v4932, 2
  %v5308 = vsel %vm1596, %v5305, %v5307
  %v5309 = vrot.slane %v4933, 2
  %v5310 = vrot.slane %v4934, 2
  %v5311 = vsel %vm1596, %v5309, %v5310
  %v5312 = vrot.slane %v4935, 2
  %v5313 = vsel %vm1596, %v5310, %v5312
  %v5314 = vrot.slane %v4936, 2
  %v5315 = vsel %vm1596, %v5312, %v5314
  %v5316 = vrot.slane %v4937, 2
  %v5317 = vsel %vm1596, %v5314, %v5316
  %v5318 = vrot.slane %v4938, 2
  %v5319 = vrot.slane %v4939, 2
  %v5320 = vsel %vm1596, %v5318, %v5319
  %v5321 = vrot.slane %v4940, 2
  %v5322 = vsel %vm1596, %v5319, %v5321
  %v5323 = vrot.slane %v4941, 2
  %v5324 = vsel %vm1596, %v5321, %v5323
  %v5325 = vrot.slane %v4942, 2
  %v5326 = vsel %vm1596, %v5323, %v5325
  %v5327 = vrot.slane %v4943, 2
  %v5328 = vrot.slane %v4944, 2
  %v5329 = vsel %vm1596, %v5327, %v5328
  %v5330 = vrot.slane %v4945, 2
  %v5331 = vsel %vm1596, %v5328, %v5330
  %v5332 = vrot.slane %v4946, 2
  %v5333 = vsel %vm1596, %v5330, %v5332
  %v5334 = vrot.slane %v4947, 2
  %v5335 = vsel %vm1596, %v5332, %v5334
  %v5336 = vrot.slane %v4948, 2
  %v5337 = vrot.slane %v4949, 2
  %v5338 = vsel %vm1596, %v5336, %v5337
  %v5339 = vrot.slane %v4950, 2
  %v5340 = vsel %vm1596, %v5337, %v5339
  %v5341 = vrot.slane %v4951, 2
  %v5342 = vsel %vm1596, %v5339, %v5341
  %v5343 = vrot.slane %v4952, 2
  %v5344 = vsel %vm1596, %v5341, %v5343
  %v5457 = vadd.f32 %v4697, %v5095
  %v5458 = vadd.f32 %v4698, %v5097
  %v5459 = vadd.f32 %v4699, %v5099
  %v5460 = vadd.f32 %v4700, %v5101
  %v5461 = vadd.f32 %v4701, %v5104
  %v5462 = vadd.f32 %v4702, %v5106
  %v5463 = vadd.f32 %v4703, %v5108
  %v5464 = vadd.f32 %v4704, %v5110
  %v5465 = vadd.f32 %v4705, %v5113
  %v5466 = vadd.f32 %v4706, %v5115
  %v5467 = vadd.f32 %v4707, %v5117
  %v5468 = vadd.f32 %v4708, %v5119
  %v5469 = vadd.f32 %v4709, %v5122
  %v5470 = vadd.f32 %v4710, %v5124
  %v5471 = vadd.f32 %v4711, %v5126
  %v5472 = vadd.f32 %v4712, %v5128
  %v5473 = vadd.f32 %v4713, %v5131
  %v5474 = vadd.f32 %v4714, %v5133
  %v5475 = vadd.f32 %v4715, %v5135
  %v5476 = vadd.f32 %v4716, %v5137
  %v5477 = vadd.f32 %v4717, %v5140
  %v5478 = vadd.f32 %v4718, %v5142
  %v5479 = vadd.f32 %v4719, %v5144
  %v5480 = vadd.f32 %v4720, %v5146
  %v5481 = vadd.f32 %v4721, %v5149
  %v5482 = vadd.f32 %v4722, %v5151
  %v5483 = vadd.f32 %v4723, %v5153
  %v5484 = vadd.f32 %v4724, %v5155
  %v5485 = vadd.f32 %v4725, %v5158
  %v5486 = vadd.f32 %v4726, %v5160
  %v5487 = vadd.f32 %v4727, %v5162
  %v5488 = vadd.f32 %v4728, %v5164
  %v5489 = vadd.f32 %v4729, %v5167
  %v5490 = vadd.f32 %v4730, %v5169
  %v5491 = vadd.f32 %v4731, %v5171
  %v5492 = vadd.f32 %v4732, %v5173
  %v5493 = vadd.f32 %v4733, %v5176
  %v5494 = vadd.f32 %v4734, %v5178
  %v5495 = vadd.f32 %v4735, %v5180
  %v5496 = vadd.f32 %v4736, %v5182
  %v5497 = vadd.f32 %v4737, %v5185
  %v5498 = vadd.f32 %v4738, %v5187
  %v5499 = vadd.f32 %v4739, %v5189
  %v5500 = vadd.f32 %v4740, %v5191
  %v5501 = vadd.f32 %v4741, %v5194
  %v5502 = vadd.f32 %v4742, %v5196
  %v5503 = vadd.f32 %v4743, %v5198
  %v5504 = vadd.f32 %v4744, %v5200
  %v5505 = vadd.f32 %v4745, %v5203
  %v5506 = vadd.f32 %v4746, %v5205
  %v5507 = vadd.f32 %v4747, %v5207
  %v5508 = vadd.f32 %v4748, %v5209
  %v5509 = vadd.f32 %v4749, %v5212
  %v5510 = vadd.f32 %v4750, %v5214
  %v5511 = vadd.f32 %v4751, %v5216
  %v5512 = vadd.f32 %v4752, %v5218
  %v5513 = vadd.f32 %v4753, %v5221
  %v5514 = vadd.f32 %v4754, %v5223
  %v5515 = vadd.f32 %v4755, %v5225
  %v5516 = vadd.f32 %v4756, %v5227
  %v5517 = vadd.f32 %v4757, %v5230
  %v5518 = vadd.f32 %v4758, %v5232
  %v5519 = vadd.f32 %v4759, %v5234
  %v5520 = vadd.f32 %v4760, %v5236
  %v5521 = vadd.f32 %v4761, %v5239
  %v5522 = vadd.f32 %v4762, %v5241
  %v5523 = vadd.f32 %v4763, %v5243
  %v5524 = vadd.f32 %v4764, %v5245
  %v5525 = vadd.f32 %v4765, %v5248
  %v5526 = vadd.f32 %v4766, %v5250
  %v5527 = vadd.f32 %v4767, %v5252
  %v5528 = vadd.f32 %v4768, %v5254
  %v5529 = vadd.f32 %v4769, %v5257
  %v5530 = vadd.f32 %v4770, %v5259
  %v5531 = vadd.f32 %v4771, %v5261
  %v5532 = vadd.f32 %v4772, %v5263
  %v5533 = vadd.f32 %v4773, %v5266
  %v5534 = vadd.f32 %v4774, %v5268
  %v5535 = vadd.f32 %v4775, %v5270
  %v5536 = vadd.f32 %v4776, %v5272
  %v5537 = vadd.f32 %v4777, %v5275
  %v5538 = vadd.f32 %v4778, %v5277
  %v5539 = vadd.f32 %v4779, %v5279
  %v5540 = vadd.f32 %v4780, %v5281
  %v5541 = vadd.f32 %v4781, %v5284
  %v5542 = vadd.f32 %v4782, %v5286
  %v5543 = vadd.f32 %v4783, %v5288
  %v5544 = vadd.f32 %v4784, %v5290
  %v5545 = vadd.f32 %v4785, %v5293
  %v5546 = vadd.f32 %v4786, %v5295
  %v5547 = vadd.f32 %v4787, %v5297
  %v5548 = vadd.f32 %v4788, %v5299
  %v5549 = vadd.f32 %v4789, %v5302
  %v5550 = vadd.f32 %v4790, %v5304
  %v5551 = vadd.f32 %v4791, %v5306
  %v5552 = vadd.f32 %v4792, %v5308
  %v5553 = vadd.f32 %v4793, %v5311
  %v5554 = vadd.f32 %v4794, %v5313
  %v5555 = vadd.f32 %v4795, %v5315
  %v5556 = vadd.f32 %v4796, %v5317
  %v5557 = vadd.f32 %v4797, %v5320
  %v5558 = vadd.f32 %v4798, %v5322
  %v5559 = vadd.f32 %v4799, %v5324
  %v5560 = vadd.f32 %v4800, %v5326
  %v5561 = vadd.f32 %v4801, %v5329
  %v5562 = vadd.f32 %v4802, %v5331
  %v5563 = vadd.f32 %v4803, %v5333
  %v5564 = vadd.f32 %v4804, %v5335
  %v5565 = vadd.f32 %v4805, %v5338
  %v5566 = vadd.f32 %v4806, %v5340
  %v5567 = vadd.f32 %v4807, %v5342
  %v5568 = vadd.f32 %v4808, %v5344
  %v5569 = vlaneseq
  %v5570 = vshrl.u32 %v5569, 7
  %v5571 = vadd.s32 %v5570, 8
  %v5572 = vadd.s32 %v5570, 16
  %v5573 = vadd.s32 %v5570, 24
  %vm5574 = vcmp.lt.s32.totalorder %v5570, 28
  %vm5575 = vcmp.lt.s32.totalorder %v5571, 28
  %vm5576 = vcmp.lt.s32.totalorder %v5572, 28
  %vm5577 = vcmp.lt.s32.totalorder %v5573, 28
  %v5578 = vsel %vm5574, 1.0, 0.0
  %v5579 = vsel %vm5575, 1.0, 0.0
  %v5580 = vsel %vm5576, 1.0, 0.0
  %v5581 = vsel %vm5577, 1.0, 0.0
  %v5582 = vmul.f32 %v5457, %v5578
  %v5583 = vmul.f32 %v5458, %v5579
  %v5584 = vmul.f32 %v5459, %v5580
  %v5585 = vmul.f32 %v5460, %v5581
  %v5586 = vmul.f32 %v5461, %v5578
  %v5587 = vmul.f32 %v5462, %v5579
  %v5588 = vmul.f32 %v5463, %v5580
  %v5589 = vmul.f32 %v5464, %v5581
  %v5590 = vmul.f32 %v5465, %v5578
  %v5591 = vmul.f32 %v5466, %v5579
  %v5592 = vmul.f32 %v5467, %v5580
  %v5593 = vmul.f32 %v5468, %v5581
  %v5594 = vmul.f32 %v5469, %v5578
  %v5595 = vmul.f32 %v5470, %v5579
  %v5596 = vmul.f32 %v5471, %v5580
  %v5597 = vmul.f32 %v5472, %v5581
  %v5598 = vmul.f32 %v5473, %v5578
  %v5599 = vmul.f32 %v5474, %v5579
  %v5600 = vmul.f32 %v5475, %v5580
  %v5601 = vmul.f32 %v5476, %v5581
  %v5602 = vmul.f32 %v5477, %v5578
  %v5603 = vmul.f32 %v5478, %v5579
  %v5604 = vmul.f32 %v5479, %v5580
  %v5605 = vmul.f32 %v5480, %v5581
  %v5606 = vmul.f32 %v5481, %v5578
  %v5607 = vmul.f32 %v5482, %v5579
  %v5608 = vmul.f32 %v5483, %v5580
  %v5609 = vmul.f32 %v5484, %v5581
  %v5610 = vmul.f32 %v5485, %v5578
  %v5611 = vmul.f32 %v5486, %v5579
  %v5612 = vmul.f32 %v5487, %v5580
  %v5613 = vmul.f32 %v5488, %v5581
  %v5614 = vmul.f32 %v5489, %v5578
  %v5615 = vmul.f32 %v5490, %v5579
  %v5616 = vmul.f32 %v5491, %v5580
  %v5617 = vmul.f32 %v5492, %v5581
  %v5618 = vmul.f32 %v5493, %v5578
  %v5619 = vmul.f32 %v5494, %v5579
  %v5620 = vmul.f32 %v5495, %v5580
  %v5621 = vmul.f32 %v5496, %v5581
  %v5622 = vmul.f32 %v5497, %v5578
  %v5623 = vmul.f32 %v5498, %v5579
  %v5624 = vmul.f32 %v5499, %v5580
  %v5625 = vmul.f32 %v5500, %v5581
  %v5626 = vmul.f32 %v5501, %v5578
  %v5627 = vmul.f32 %v5502, %v5579
  %v5628 = vmul.f32 %v5503, %v5580
  %v5629 = vmul.f32 %v5504, %v5581
  %v5630 = vmul.f32 %v5505, %v5578
  %v5631 = vmul.f32 %v5506, %v5579
  %v5632 = vmul.f32 %v5507, %v5580
  %v5633 = vmul.f32 %v5508, %v5581
  %v5634 = vmul.f32 %v5509, %v5578
  %v5635 = vmul.f32 %v5510, %v5579
  %v5636 = vmul.f32 %v5511, %v5580
  %v5637 = vmul.f32 %v5512, %v5581
  %v5638 = vmul.f32 %v5513, %v5578
  %v5639 = vmul.f32 %v5514, %v5579
  %v5640 = vmul.f32 %v5515, %v5580
  %v5641 = vmul.f32 %v5516, %v5581
  %v5642 = vmul.f32 %v5517, %v5578
  %v5643 = vmul.f32 %v5518, %v5579
  %v5644 = vmul.f32 %v5519, %v5580
  %v5645 = vmul.f32 %v5520, %v5581
  %v5646 = vmul.f32 %v5521, %v5578
  %v5647 = vmul.f32 %v5522, %v5579
  %v5648 = vmul.f32 %v5523, %v5580
  %v5649 = vmul.f32 %v5524, %v5581
  %v5650 = vmul.f32 %v5525, %v5578
  %v5651 = vmul.f32 %v5526, %v5579
  %v5652 = vmul.f32 %v5527, %v5580
  %v5653 = vmul.f32 %v5528, %v5581
  %v5654 = vmul.f32 %v5529, %v5578
  %v5655 = vmul.f32 %v5530, %v5579
  %v5656 = vmul.f32 %v5531, %v5580
  %v5657 = vmul.f32 %v5532, %v5581
  %v5658 = vmul.f32 %v5533, %v5578
  %v5659 = vmul.f32 %v5534, %v5579
  %v5660 = vmul.f32 %v5535, %v5580
  %v5661 = vmul.f32 %v5536, %v5581
  %v5662 = vmul.f32 %v5537, %v5578
  %v5663 = vmul.f32 %v5538, %v5579
  %v5664 = vmul.f32 %v5539, %v5580
  %v5665 = vmul.f32 %v5540, %v5581
  %v5666 = vmul.f32 %v5541, %v5578
  %v5667 = vmul.f32 %v5542, %v5579
  %v5668 = vmul.f32 %v5543, %v5580
  %v5669 = vmul.f32 %v5544, %v5581
  %v5670 = vmul.f32 %v5545, %v5578
  %v5671 = vmul.f32 %v5546, %v5579
  %v5672 = vmul.f32 %v5547, %v5580
  %v5673 = vmul.f32 %v5548, %v5581
  %v5674 = vmul.f32 %v5549, %v5578
  %v5675 = vmul.f32 %v5550, %v5579
  %v5676 = vmul.f32 %v5551, %v5580
  %v5677 = vmul.f32 %v5552, %v5581
  %v5678 = vmul.f32 %v5553, %v5578
  %v5679 = vmul.f32 %v5554, %v5579
  %v5680 = vmul.f32 %v5555, %v5580
  %v5681 = vmul.f32 %v5556, %v5581
  %v5682 = vmul.f32 %v5557, %v5578
  %v5683 = vmul.f32 %v5558, %v5579
  %v5684 = vmul.f32 %v5559, %v5580
  %v5685 = vmul.f32 %v5560, %v5581
  %v5686 = vmul.f32 %v5561, %v5578
  %v5687 = vmul.f32 %v5562, %v5579
  %v5688 = vmul.f32 %v5563, %v5580
  %v5689 = vmul.f32 %v5564, %v5581
  %v5690 = vmul.f32 %v5565, %v5578
  %v5691 = vmul.f32 %v5566, %v5579
  %v5692 = vmul.f32 %v5567, %v5580
  %v5693 = vmul.f32 %v5568, %v5581
  %v5694 = vadd.f32 %v5582, %v5583
  %v5695 = vadd.f32 %v5694, %v5584
  %v5696 = vadd.f32 %v5695, %v5585
  %v5697 = vadd.f32 %v5696, %v5586
  %v5698 = vadd.f32 %v5697, %v5587
  %v5699 = vadd.f32 %v5698, %v5588
  %v5700 = vadd.f32 %v5699, %v5589
  %v5701 = vadd.f32 %v5700, %v5590
  %v5702 = vadd.f32 %v5701, %v5591
  %v5703 = vadd.f32 %v5702, %v5592
  %v5704 = vadd.f32 %v5703, %v5593
  %v5705 = vadd.f32 %v5704, %v5594
  %v5706 = vadd.f32 %v5705, %v5595
  %v5707 = vadd.f32 %v5706, %v5596
  %v5708 = vadd.f32 %v5707, %v5597
  %v5709 = vadd.f32 %v5708, %v5598
  %v5710 = vadd.f32 %v5709, %v5599
  %v5711 = vadd.f32 %v5710, %v5600
  %v5712 = vadd.f32 %v5711, %v5601
  %v5713 = vadd.f32 %v5712, %v5602
  %v5714 = vadd.f32 %v5713, %v5603
  %v5715 = vadd.f32 %v5714, %v5604
  %v5716 = vadd.f32 %v5715, %v5605
  %v5717 = vadd.f32 %v5716, %v5606
  %v5718 = vadd.f32 %v5717, %v5607
  %v5719 = vadd.f32 %v5718, %v5608
  %v5720 = vadd.f32 %v5719, %v5609
  %v5721 = vadd.f32 %v5720, %v5610
  %v5722 = vadd.f32 %v5721, %v5611
  %v5723 = vadd.f32 %v5722, %v5612
  %v5724 = vadd.f32 %v5723, %v5613
  %v5725 = vadd.f32 %v5724, %v5614
  %v5726 = vadd.f32 %v5725, %v5615
  %v5727 = vadd.f32 %v5726, %v5616
  %v5728 = vadd.f32 %v5727, %v5617
  %v5729 = vadd.f32 %v5728, %v5618
  %v5730 = vadd.f32 %v5729, %v5619
  %v5731 = vadd.f32 %v5730, %v5620
  %v5732 = vadd.f32 %v5731, %v5621
  %v5733 = vadd.f32 %v5732, %v5622
  %v5734 = vadd.f32 %v5733, %v5623
  %v5735 = vadd.f32 %v5734, %v5624
  %v5736 = vadd.f32 %v5735, %v5625
  %v5737 = vadd.f32 %v5736, %v5626
  %v5738 = vadd.f32 %v5737, %v5627
  %v5739 = vadd.f32 %v5738, %v5628
  %v5740 = vadd.f32 %v5739, %v5629
  %v5741 = vadd.f32 %v5740, %v5630
  %v5742 = vadd.f32 %v5741, %v5631
  %v5743 = vadd.f32 %v5742, %v5632
  %v5744 = vadd.f32 %v5743, %v5633
  %v5745 = vadd.f32 %v5744, %v5634
  %v5746 = vadd.f32 %v5745, %v5635
  %v5747 = vadd.f32 %v5746, %v5636
  %v5748 = vadd.f32 %v5747, %v5637
  %v5749 = vadd.f32 %v5748, %v5638
  %v5750 = vadd.f32 %v5749, %v5639
  %v5751 = vadd.f32 %v5750, %v5640
  %v5752 = vadd.f32 %v5751, %v5641
  %v5753 = vadd.f32 %v5752, %v5642
  %v5754 = vadd.f32 %v5753, %v5643
  %v5755 = vadd.f32 %v5754, %v5644
  %v5756 = vadd.f32 %v5755, %v5645
  %v5757 = vadd.f32 %v5756, %v5646
  %v5758 = vadd.f32 %v5757, %v5647
  %v5759 = vadd.f32 %v5758, %v5648
  %v5760 = vadd.f32 %v5759, %v5649
  %v5761 = vadd.f32 %v5760, %v5650
  %v5762 = vadd.f32 %v5761, %v5651
  %v5763 = vadd.f32 %v5762, %v5652
  %v5764 = vadd.f32 %v5763, %v5653
  %v5765 = vadd.f32 %v5764, %v5654
  %v5766 = vadd.f32 %v5765, %v5655
  %v5767 = vadd.f32 %v5766, %v5656
  %v5768 = vadd.f32 %v5767, %v5657
  %v5769 = vadd.f32 %v5768, %v5658
  %v5770 = vadd.f32 %v5769, %v5659
  %v5771 = vadd.f32 %v5770, %v5660
  %v5772 = vadd.f32 %v5771, %v5661
  %v5773 = vadd.f32 %v5772, %v5662
  %v5774 = vadd.f32 %v5773, %v5663
  %v5775 = vadd.f32 %v5774, %v5664
  %v5776 = vadd.f32 %v5775, %v5665
  %v5777 = vadd.f32 %v5776, %v5666
  %v5778 = vadd.f32 %v5777, %v5667
  %v5779 = vadd.f32 %v5778, %v5668
  %v5780 = vadd.f32 %v5779, %v5669
  %v5781 = vadd.f32 %v5780, %v5670
  %v5782 = vadd.f32 %v5781, %v5671
  %v5783 = vadd.f32 %v5782, %v5672
  %v5784 = vadd.f32 %v5783, %v5673
  %v5785 = vadd.f32 %v5784, %v5674
  %v5786 = vadd.f32 %v5785, %v5675
  %v5787 = vadd.f32 %v5786, %v5676
  %v5788 = vadd.f32 %v5787, %v5677
  %v5789 = vadd.f32 %v5788, %v5678
  %v5790 = vadd.f32 %v5789, %v5679
  %v5791 = vadd.f32 %v5790, %v5680
  %v5792 = vadd.f32 %v5791, %v5681
  %v5793 = vadd.f32 %v5792, %v5682
  %v5794 = vadd.f32 %v5793, %v5683
  %v5795 = vadd.f32 %v5794, %v5684
  %v5796 = vadd.f32 %v5795, %v5685
  %v5797 = vadd.f32 %v5796, %v5686
  %v5798 = vadd.f32 %v5797, %v5687
  %v5799 = vadd.f32 %v5798, %v5688
  %v5800 = vadd.f32 %v5799, %v5689
  %v5801 = vadd.f32 %v5800, %v5690
  %v5802 = vadd.f32 %v5801, %v5691
  %v5803 = vadd.f32 %v5802, %v5692
  %v5804 = vadd.f32 %v5803, %v5693
  %v5805 = vrot.slane %v5804, 4
  %v5806 = vadd.f32 %v5804, %v5805
  %v5807 = vrot.slane %v5806, 2
  %v5808 = vadd.f32 %v5806, %v5807
  %v5809 = vrot.slane %v5808, 1
  %v5810 = vadd.f32 %v5808, %v5809
  %v5811 = vmul.f32 %v5582, %v5457
  %v5812 = vmul.f32 %v5583, %v5458
  %v5813 = vmul.f32 %v5584, %v5459
  %v5814 = vmul.f32 %v5585, %v5460
  %v5815 = vmul.f32 %v5586, %v5461
  %v5816 = vmul.f32 %v5587, %v5462
  %v5817 = vmul.f32 %v5588, %v5463
  %v5818 = vmul.f32 %v5589, %v5464
  %v5819 = vmul.f32 %v5590, %v5465
  %v5820 = vmul.f32 %v5591, %v5466
  %v5821 = vmul.f32 %v5592, %v5467
  %v5822 = vmul.f32 %v5593, %v5468
  %v5823 = vmul.f32 %v5594, %v5469
  %v5824 = vmul.f32 %v5595, %v5470
  %v5825 = vmul.f32 %v5596, %v5471
  %v5826 = vmul.f32 %v5597, %v5472
  %v5827 = vmul.f32 %v5598, %v5473
  %v5828 = vmul.f32 %v5599, %v5474
  %v5829 = vmul.f32 %v5600, %v5475
  %v5830 = vmul.f32 %v5601, %v5476
  %v5831 = vmul.f32 %v5602, %v5477
  %v5832 = vmul.f32 %v5603, %v5478
  %v5833 = vmul.f32 %v5604, %v5479
  %v5834 = vmul.f32 %v5605, %v5480
  %v5835 = vmul.f32 %v5606, %v5481
  %v5836 = vmul.f32 %v5607, %v5482
  %v5837 = vmul.f32 %v5608, %v5483
  %v5838 = vmul.f32 %v5609, %v5484
  %v5839 = vmul.f32 %v5610, %v5485
  %v5840 = vmul.f32 %v5611, %v5486
  %v5841 = vmul.f32 %v5612, %v5487
  %v5842 = vmul.f32 %v5613, %v5488
  %v5843 = vmul.f32 %v5614, %v5489
  %v5844 = vmul.f32 %v5615, %v5490
  %v5845 = vmul.f32 %v5616, %v5491
  %v5846 = vmul.f32 %v5617, %v5492
  %v5847 = vmul.f32 %v5618, %v5493
  %v5848 = vmul.f32 %v5619, %v5494
  %v5849 = vmul.f32 %v5620, %v5495
  %v5850 = vmul.f32 %v5621, %v5496
  %v5851 = vmul.f32 %v5622, %v5497
  %v5852 = vmul.f32 %v5623, %v5498
  %v5853 = vmul.f32 %v5624, %v5499
  %v5854 = vmul.f32 %v5625, %v5500
  %v5855 = vmul.f32 %v5626, %v5501
  %v5856 = vmul.f32 %v5627, %v5502
  %v5857 = vmul.f32 %v5628, %v5503
  %v5858 = vmul.f32 %v5629, %v5504
  %v5859 = vmul.f32 %v5630, %v5505
  %v5860 = vmul.f32 %v5631, %v5506
  %v5861 = vmul.f32 %v5632, %v5507
  %v5862 = vmul.f32 %v5633, %v5508
  %v5863 = vmul.f32 %v5634, %v5509
  %v5864 = vmul.f32 %v5635, %v5510
  %v5865 = vmul.f32 %v5636, %v5511
  %v5866 = vmul.f32 %v5637, %v5512
  %v5867 = vmul.f32 %v5638, %v5513
  %v5868 = vmul.f32 %v5639, %v5514
  %v5869 = vmul.f32 %v5640, %v5515
  %v5870 = vmul.f32 %v5641, %v5516
  %v5871 = vmul.f32 %v5642, %v5517
  %v5872 = vmul.f32 %v5643, %v5518
  %v5873 = vmul.f32 %v5644, %v5519
  %v5874 = vmul.f32 %v5645, %v5520
  %v5875 = vmul.f32 %v5646, %v5521
  %v5876 = vmul.f32 %v5647, %v5522
  %v5877 = vmul.f32 %v5648, %v5523
  %v5878 = vmul.f32 %v5649, %v5524
  %v5879 = vmul.f32 %v5650, %v5525
  %v5880 = vmul.f32 %v5651, %v5526
  %v5881 = vmul.f32 %v5652, %v5527
  %v5882 = vmul.f32 %v5653, %v5528
  %v5883 = vmul.f32 %v5654, %v5529
  %v5884 = vmul.f32 %v5655, %v5530
  %v5885 = vmul.f32 %v5656, %v5531
  %v5886 = vmul.f32 %v5657, %v5532
  %v5887 = vmul.f32 %v5658, %v5533
  %v5888 = vmul.f32 %v5659, %v5534
  %v5889 = vmul.f32 %v5660, %v5535
  %v5890 = vmul.f32 %v5661, %v5536
  %v5891 = vmul.f32 %v5662, %v5537
  %v5892 = vmul.f32 %v5663, %v5538
  %v5893 = vmul.f32 %v5664, %v5539
  %v5894 = vmul.f32 %v5665, %v5540
  %v5895 = vmul.f32 %v5666, %v5541
  %v5896 = vmul.f32 %v5667, %v5542
  %v5897 = vmul.f32 %v5668, %v5543
  %v5898 = vmul.f32 %v5669, %v5544
  %v5899 = vmul.f32 %v5670, %v5545
  %v5900 = vmul.f32 %v5671, %v5546
  %v5901 = vmul.f32 %v5672, %v5547
  %v5902 = vmul.f32 %v5673, %v5548
  %v5903 = vmul.f32 %v5674, %v5549
  %v5904 = vmul.f32 %v5675, %v5550
  %v5905 = vmul.f32 %v5676, %v5551
  %v5906 = vmul.f32 %v5677, %v5552
  %v5907 = vmul.f32 %v5678, %v5553
  %v5908 = vmul.f32 %v5679, %v5554
  %v5909 = vmul.f32 %v5680, %v5555
  %v5910 = vmul.f32 %v5681, %v5556
  %v5911 = vmul.f32 %v5682, %v5557
  %v5912 = vmul.f32 %v5683, %v5558
  %v5913 = vmul.f32 %v5684, %v5559
  %v5914 = vmul.f32 %v5685, %v5560
  %v5915 = vmul.f32 %v5686, %v5561
  %v5916 = vmul.f32 %v5687, %v5562
  %v5917 = vmul.f32 %v5688, %v5563
  %v5918 = vmul.f32 %v5689, %v5564
  %v5919 = vmul.f32 %v5690, %v5565
  %v5920 = vmul.f32 %v5691, %v5566
  %v5921 = vmul.f32 %v5692, %v5567
  %v5922 = vmul.f32 %v5693, %v5568
  %v5923 = vadd.f32 %v5811, %v5812
  %v5924 = vadd.f32 %v5923, %v5813
  %v5925 = vadd.f32 %v5924, %v5814
  %v5926 = vadd.f32 %v5925, %v5815
  %v5927 = vadd.f32 %v5926, %v5816
  %v5928 = vadd.f32 %v5927, %v5817
  %v5929 = vadd.f32 %v5928, %v5818
  %v5930 = vadd.f32 %v5929, %v5819
  %v5931 = vadd.f32 %v5930, %v5820
  %v5932 = vadd.f32 %v5931, %v5821
  %v5933 = vadd.f32 %v5932, %v5822
  %v5934 = vadd.f32 %v5933, %v5823
  %v5935 = vadd.f32 %v5934, %v5824
  %v5936 = vadd.f32 %v5935, %v5825
  %v5937 = vadd.f32 %v5936, %v5826
  %v5938 = vadd.f32 %v5937, %v5827
  %v5939 = vadd.f32 %v5938, %v5828
  %v5940 = vadd.f32 %v5939, %v5829
  %v5941 = vadd.f32 %v5940, %v5830
  %v5942 = vadd.f32 %v5941, %v5831
  %v5943 = vadd.f32 %v5942, %v5832
  %v5944 = vadd.f32 %v5943, %v5833
  %v5945 = vadd.f32 %v5944, %v5834
  %v5946 = vadd.f32 %v5945, %v5835
  %v5947 = vadd.f32 %v5946, %v5836
  %v5948 = vadd.f32 %v5947, %v5837
  %v5949 = vadd.f32 %v5948, %v5838
  %v5950 = vadd.f32 %v5949, %v5839
  %v5951 = vadd.f32 %v5950, %v5840
  %v5952 = vadd.f32 %v5951, %v5841
  %v5953 = vadd.f32 %v5952, %v5842
  %v5954 = vadd.f32 %v5953, %v5843
  %v5955 = vadd.f32 %v5954, %v5844
  %v5956 = vadd.f32 %v5955, %v5845
  %v5957 = vadd.f32 %v5956, %v5846
  %v5958 = vadd.f32 %v5957, %v5847
  %v5959 = vadd.f32 %v5958, %v5848
  %v5960 = vadd.f32 %v5959, %v5849
  %v5961 = vadd.f32 %v5960, %v5850
  %v5962 = vadd.f32 %v5961, %v5851
  %v5963 = vadd.f32 %v5962, %v5852
  %v5964 = vadd.f32 %v5963, %v5853
  %v5965 = vadd.f32 %v5964, %v5854
  %v5966 = vadd.f32 %v5965, %v5855
  %v5967 = vadd.f32 %v5966, %v5856
  %v5968 = vadd.f32 %v5967, %v5857
  %v5969 = vadd.f32 %v5968, %v5858
  %v5970 = vadd.f32 %v5969, %v5859
  %v5971 = vadd.f32 %v5970, %v5860
  %v5972 = vadd.f32 %v5971, %v5861
  %v5973 = vadd.f32 %v5972, %v5862
  %v5974 = vadd.f32 %v5973, %v5863
  %v5975 = vadd.f32 %v5974, %v5864
  %v5976 = vadd.f32 %v5975, %v5865
  %v5977 = vadd.f32 %v5976, %v5866
  %v5978 = vadd.f32 %v5977, %v5867
  %v5979 = vadd.f32 %v5978, %v5868
  %v5980 = vadd.f32 %v5979, %v5869
  %v5981 = vadd.f32 %v5980, %v5870
  %v5982 = vadd.f32 %v5981, %v5871
  %v5983 = vadd.f32 %v5982, %v5872
  %v5984 = vadd.f32 %v5983, %v5873
  %v5985 = vadd.f32 %v5984, %v5874
  %v5986 = vadd.f32 %v5985, %v5875
  %v5987 = vadd.f32 %v5986, %v5876
  %v5988 = vadd.f32 %v5987, %v5877
  %v5989 = vadd.f32 %v5988, %v5878
  %v5990 = vadd.f32 %v5989, %v5879
  %v5991 = vadd.f32 %v5990, %v5880
  %v5992 = vadd.f32 %v5991, %v5881
  %v5993 = vadd.f32 %v5992, %v5882
  %v5994 = vadd.f32 %v5993, %v5883
  %v5995 = vadd.f32 %v5994, %v5884
  %v5996 = vadd.f32 %v5995, %v5885
  %v5997 = vadd.f32 %v5996, %v5886
  %v5998 = vadd.f32 %v5997, %v5887
  %v5999 = vadd.f32 %v5998, %v5888
  %v6000 = vadd.f32 %v5999, %v5889
  %v6001 = vadd.f32 %v6000, %v5890
  %v6002 = vadd.f32 %v6001, %v5891
  %v6003 = vadd.f32 %v6002, %v5892
  %v6004 = vadd.f32 %v6003, %v5893
  %v6005 = vadd.f32 %v6004, %v5894
  %v6006 = vadd.f32 %v6005, %v5895
  %v6007 = vadd.f32 %v6006, %v5896
  %v6008 = vadd.f32 %v6007, %v5897
  %v6009 = vadd.f32 %v6008, %v5898
  %v6010 = vadd.f32 %v6009, %v5899
  %v6011 = vadd.f32 %v6010, %v5900
  %v6012 = vadd.f32 %v6011, %v5901
  %v6013 = vadd.f32 %v6012, %v5902
  %v6014 = vadd.f32 %v6013, %v5903
  %v6015 = vadd.f32 %v6014, %v5904
  %v6016 = vadd.f32 %v6015, %v5905
  %v6017 = vadd.f32 %v6016, %v5906
  %v6018 = vadd.f32 %v6017, %v5907
  %v6019 = vadd.f32 %v6018, %v5908
  %v6020 = vadd.f32 %v6019, %v5909
  %v6021 = vadd.f32 %v6020, %v5910
  %v6022 = vadd.f32 %v6021, %v5911
  %v6023 = vadd.f32 %v6022, %v5912
  %v6024 = vadd.f32 %v6023, %v5913
  %v6025 = vadd.f32 %v6024, %v5914
  %v6026 = vadd.f32 %v6025, %v5915
  %v6027 = vadd.f32 %v6026, %v5916
  %v6028 = vadd.f32 %v6027, %v5917
  %v6029 = vadd.f32 %v6028, %v5918
  %v6030 = vadd.f32 %v6029, %v5919
  %v6031 = vadd.f32 %v6030, %v5920
  %v6032 = vadd.f32 %v6031, %v5921
  %v6033 = vadd.f32 %v6032, %v5922
  %v6034 = vrot.slane %v6033, 4
  %v6035 = vadd.f32 %v6033, %v6034
  %v6036 = vrot.slane %v6035, 2
  %v6037 = vadd.f32 %v6035, %v6036
  %v6038 = vrot.slane %v6037, 1
  %v6039 = vadd.f32 %v6037, %v6038
  %v6040 = vmul.f32 %v5810, 0.0012755102
  %v6041 = vmul.f32 %v6039, 0.0012755102
  %v6042 = vmul.f32 %v6040, %v6040
  %v6043 = vsub.f32 %v6041, %v6042
  %v6044 = vld [vmem:[%s2] sm:$0x1]
  %v6045 = vadd.f32 %v6043, 1e-05
  %v6046 = vrsqrt.pop %v6045
  %v6047 = vmul.f32 %v6044, %v6046
  %v6048 = vld [vmem:[%s3] sm:$0x1]
  %v6049 = vmul.f32 %v6040, %v6047
  %v6050 = vsub.f32 %v6048, %v6049
  %v6052 = vlaneseq
  %v6053 = vshrl.u32 %v6052, 7
  %v6054 = vsub.s32 0, %v6053
  %v6055 = vrot.slane %v6047, %v6054
  %v6057 = vmul.f32 %v5582, %v6055
  %v6058 = vmul.f32 %v5583, %v6055
  %v6059 = vmul.f32 %v5584, %v6055
  %v6060 = vmul.f32 %v5585, %v6055
  %v6061 = vmul.f32 %v5586, %v6055
  %v6062 = vmul.f32 %v5587, %v6055
  %v6063 = vmul.f32 %v5588, %v6055
  %v6064 = vmul.f32 %v5589, %v6055
  %v6065 = vmul.f32 %v5590, %v6055
  %v6066 = vmul.f32 %v5591, %v6055
  %v6067 = vmul.f32 %v5592, %v6055
  %v6068 = vmul.f32 %v5593, %v6055
  %v6069 = vmul.f32 %v5594, %v6055
  %v6070 = vmul.f32 %v5595, %v6055
  %v6071 = vmul.f32 %v5596, %v6055
  %v6072 = vmul.f32 %v5597, %v6055
  %v6073 = vmul.f32 %v5598, %v6055
  %v6074 = vmul.f32 %v5599, %v6055
  %v6075 = vmul.f32 %v5600, %v6055
  %v6076 = vmul.f32 %v5601, %v6055
  %v6077 = vmul.f32 %v5602, %v6055
  %v6078 = vmul.f32 %v5603, %v6055
  %v6079 = vmul.f32 %v5604, %v6055
  %v6080 = vmul.f32 %v5605, %v6055
  %v6081 = vmul.f32 %v5606, %v6055
  %v6082 = vmul.f32 %v5607, %v6055
  %v6083 = vmul.f32 %v5608, %v6055
  %v6084 = vmul.f32 %v5609, %v6055
  %v6085 = vmul.f32 %v5610, %v6055
  %v6086 = vmul.f32 %v5611, %v6055
  %v6087 = vmul.f32 %v5612, %v6055
  %v6088 = vmul.f32 %v5613, %v6055
  %v6089 = vmul.f32 %v5614, %v6055
  %v6090 = vmul.f32 %v5615, %v6055
  %v6091 = vmul.f32 %v5616, %v6055
  %v6092 = vmul.f32 %v5617, %v6055
  %v6093 = vmul.f32 %v5618, %v6055
  %v6094 = vmul.f32 %v5619, %v6055
  %v6095 = vmul.f32 %v5620, %v6055
  %v6096 = vmul.f32 %v5621, %v6055
  %v6097 = vmul.f32 %v5622, %v6055
  %v6098 = vmul.f32 %v5623, %v6055
  %v6099 = vmul.f32 %v5624, %v6055
  %v6100 = vmul.f32 %v5625, %v6055
  %v6101 = vmul.f32 %v5626, %v6055
  %v6102 = vmul.f32 %v5627, %v6055
  %v6103 = vmul.f32 %v5628, %v6055
  %v6104 = vmul.f32 %v5629, %v6055
  %v6105 = vmul.f32 %v5630, %v6055
  %v6106 = vmul.f32 %v5631, %v6055
  %v6107 = vmul.f32 %v5632, %v6055
  %v6108 = vmul.f32 %v5633, %v6055
  %v6109 = vmul.f32 %v5634, %v6055
  %v6110 = vmul.f32 %v5635, %v6055
  %v6111 = vmul.f32 %v5636, %v6055
  %v6112 = vmul.f32 %v5637, %v6055
  %v6113 = vmul.f32 %v5638, %v6055
  %v6114 = vmul.f32 %v5639, %v6055
  %v6115 = vmul.f32 %v5640, %v6055
  %v6116 = vmul.f32 %v5641, %v6055
  %v6117 = vmul.f32 %v5642, %v6055
  %v6118 = vmul.f32 %v5643, %v6055
  %v6119 = vmul.f32 %v5644, %v6055
  %v6120 = vmul.f32 %v5645, %v6055
  %v6121 = vmul.f32 %v5646, %v6055
  %v6122 = vmul.f32 %v5647, %v6055
  %v6123 = vmul.f32 %v5648, %v6055
  %v6124 = vmul.f32 %v5649, %v6055
  %v6125 = vmul.f32 %v5650, %v6055
  %v6126 = vmul.f32 %v5651, %v6055
  %v6127 = vmul.f32 %v5652, %v6055
  %v6128 = vmul.f32 %v5653, %v6055
  %v6129 = vmul.f32 %v5654, %v6055
  %v6130 = vmul.f32 %v5655, %v6055
  %v6131 = vmul.f32 %v5656, %v6055
  %v6132 = vmul.f32 %v5657, %v6055
  %v6133 = vmul.f32 %v5658, %v6055
  %v6134 = vmul.f32 %v5659, %v6055
  %v6135 = vmul.f32 %v5660, %v6055
  %v6136 = vmul.f32 %v5661, %v6055
  %v6137 = vmul.f32 %v5662, %v6055
  %v6138 = vmul.f32 %v5663, %v6055
  %v6139 = vmul.f32 %v5664, %v6055
  %v6140 = vmul.f32 %v5665, %v6055
  %v6141 = vmul.f32 %v5666, %v6055
  %v6142 = vmul.f32 %v5667, %v6055
  %v6143 = vmul.f32 %v5668, %v6055
  %v6144 = vmul.f32 %v5669, %v6055
  %v6145 = vmul.f32 %v5670, %v6055
  %v6146 = vmul.f32 %v5671, %v6055
  %v6147 = vmul.f32 %v5672, %v6055
  %v6148 = vmul.f32 %v5673, %v6055
  %v6149 = vmul.f32 %v5674, %v6055
  %v6150 = vmul.f32 %v5675, %v6055
  %v6151 = vmul.f32 %v5676, %v6055
  %v6152 = vmul.f32 %v5677, %v6055
  %v6153 = vmul.f32 %v5678, %v6055
  %v6154 = vmul.f32 %v5679, %v6055
  %v6155 = vmul.f32 %v5680, %v6055
  %v6156 = vmul.f32 %v5681, %v6055
  %v6157 = vmul.f32 %v5682, %v6055
  %v6158 = vmul.f32 %v5683, %v6055
  %v6159 = vmul.f32 %v5684, %v6055
  %v6160 = vmul.f32 %v5685, %v6055
  %v6161 = vmul.f32 %v5686, %v6055
  %v6162 = vmul.f32 %v5687, %v6055
  %v6163 = vmul.f32 %v5688, %v6055
  %v6164 = vmul.f32 %v5689, %v6055
  %v6165 = vmul.f32 %v5690, %v6055
  %v6166 = vmul.f32 %v5691, %v6055
  %v6167 = vmul.f32 %v5692, %v6055
  %v6168 = vmul.f32 %v5693, %v6055
  %v6170 = vlaneseq
  %v6171 = vshrl.u32 %v6170, 7
  %v6172 = vsub.s32 0, %v6171
  %v6173 = vrot.slane %v6050, %v6172
  %v6175 = vadd.f32 %v6057, %v6173
  %v6176 = vadd.f32 %v6058, %v6173
  %v6177 = vadd.f32 %v6059, %v6173
  %v6178 = vadd.f32 %v6060, %v6173
  %v6179 = vadd.f32 %v6061, %v6173
  %v6180 = vadd.f32 %v6062, %v6173
  %v6181 = vadd.f32 %v6063, %v6173
  %v6182 = vadd.f32 %v6064, %v6173
  %v6183 = vadd.f32 %v6065, %v6173
  %v6184 = vadd.f32 %v6066, %v6173
  %v6185 = vadd.f32 %v6067, %v6173
  %v6186 = vadd.f32 %v6068, %v6173
  %v6187 = vadd.f32 %v6069, %v6173
  %v6188 = vadd.f32 %v6070, %v6173
  %v6189 = vadd.f32 %v6071, %v6173
  %v6190 = vadd.f32 %v6072, %v6173
  %v6191 = vadd.f32 %v6073, %v6173
  %v6192 = vadd.f32 %v6074, %v6173
  %v6193 = vadd.f32 %v6075, %v6173
  %v6194 = vadd.f32 %v6076, %v6173
  %v6195 = vadd.f32 %v6077, %v6173
  %v6196 = vadd.f32 %v6078, %v6173
  %v6197 = vadd.f32 %v6079, %v6173
  %v6198 = vadd.f32 %v6080, %v6173
  %v6199 = vadd.f32 %v6081, %v6173
  %v6200 = vadd.f32 %v6082, %v6173
  %v6201 = vadd.f32 %v6083, %v6173
  %v6202 = vadd.f32 %v6084, %v6173
  %v6203 = vadd.f32 %v6085, %v6173
  %v6204 = vadd.f32 %v6086, %v6173
  %v6205 = vadd.f32 %v6087, %v6173
  %v6206 = vadd.f32 %v6088, %v6173
  %v6207 = vadd.f32 %v6089, %v6173
  %v6208 = vadd.f32 %v6090, %v6173
  %v6209 = vadd.f32 %v6091, %v6173
  %v6210 = vadd.f32 %v6092, %v6173
  %v6211 = vadd.f32 %v6093, %v6173
  %v6212 = vadd.f32 %v6094, %v6173
  %v6213 = vadd.f32 %v6095, %v6173
  %v6214 = vadd.f32 %v6096, %v6173
  %v6215 = vadd.f32 %v6097, %v6173
  %v6216 = vadd.f32 %v6098, %v6173
  %v6217 = vadd.f32 %v6099, %v6173
  %v6218 = vadd.f32 %v6100, %v6173
  %v6219 = vadd.f32 %v6101, %v6173
  %v6220 = vadd.f32 %v6102, %v6173
  %v6221 = vadd.f32 %v6103, %v6173
  %v6222 = vadd.f32 %v6104, %v6173
  %v6223 = vadd.f32 %v6105, %v6173
  %v6224 = vadd.f32 %v6106, %v6173
  %v6225 = vadd.f32 %v6107, %v6173
  %v6226 = vadd.f32 %v6108, %v6173
  %v6227 = vadd.f32 %v6109, %v6173
  %v6228 = vadd.f32 %v6110, %v6173
  %v6229 = vadd.f32 %v6111, %v6173
  %v6230 = vadd.f32 %v6112, %v6173
  %v6231 = vadd.f32 %v6113, %v6173
  %v6232 = vadd.f32 %v6114, %v6173
  %v6233 = vadd.f32 %v6115, %v6173
  %v6234 = vadd.f32 %v6116, %v6173
  %v6235 = vadd.f32 %v6117, %v6173
  %v6236 = vadd.f32 %v6118, %v6173
  %v6237 = vadd.f32 %v6119, %v6173
  %v6238 = vadd.f32 %v6120, %v6173
  %v6239 = vadd.f32 %v6121, %v6173
  %v6240 = vadd.f32 %v6122, %v6173
  %v6241 = vadd.f32 %v6123, %v6173
  %v6242 = vadd.f32 %v6124, %v6173
  %v6243 = vadd.f32 %v6125, %v6173
  %v6244 = vadd.f32 %v6126, %v6173
  %v6245 = vadd.f32 %v6127, %v6173
  %v6246 = vadd.f32 %v6128, %v6173
  %v6247 = vadd.f32 %v6129, %v6173
  %v6248 = vadd.f32 %v6130, %v6173
  %v6249 = vadd.f32 %v6131, %v6173
  %v6250 = vadd.f32 %v6132, %v6173
  %v6251 = vadd.f32 %v6133, %v6173
  %v6252 = vadd.f32 %v6134, %v6173
  %v6253 = vadd.f32 %v6135, %v6173
  %v6254 = vadd.f32 %v6136, %v6173
  %v6255 = vadd.f32 %v6137, %v6173
  %v6256 = vadd.f32 %v6138, %v6173
  %v6257 = vadd.f32 %v6139, %v6173
  %v6258 = vadd.f32 %v6140, %v6173
  %v6259 = vadd.f32 %v6141, %v6173
  %v6260 = vadd.f32 %v6142, %v6173
  %v6261 = vadd.f32 %v6143, %v6173
  %v6262 = vadd.f32 %v6144, %v6173
  %v6263 = vadd.f32 %v6145, %v6173
  %v6264 = vadd.f32 %v6146, %v6173
  %v6265 = vadd.f32 %v6147, %v6173
  %v6266 = vadd.f32 %v6148, %v6173
  %v6267 = vadd.f32 %v6149, %v6173
  %v6268 = vadd.f32 %v6150, %v6173
  %v6269 = vadd.f32 %v6151, %v6173
  %v6270 = vadd.f32 %v6152, %v6173
  %v6271 = vadd.f32 %v6153, %v6173
  %v6272 = vadd.f32 %v6154, %v6173
  %v6273 = vadd.f32 %v6155, %v6173
  %v6274 = vadd.f32 %v6156, %v6173
  %v6275 = vadd.f32 %v6157, %v6173
  %v6276 = vadd.f32 %v6158, %v6173
  %v6277 = vadd.f32 %v6159, %v6173
  %v6278 = vadd.f32 %v6160, %v6173
  %v6279 = vadd.f32 %v6161, %v6173
  %v6280 = vadd.f32 %v6162, %v6173
  %v6281 = vadd.f32 %v6163, %v6173
  %v6282 = vadd.f32 %v6164, %v6173
  %v6283 = vadd.f32 %v6165, %v6173
  %v6284 = vadd.f32 %v6166, %v6173
  %v6285 = vadd.f32 %v6167, %v6173
  %v6286 = vadd.f32 %v6168, %v6173
  %v6287 = vld [vmem:[%s4] sm:$0xff]
  %v6288 = vld [vmem:[%s4 + $0x8] sm:$0xff]
  %v6289 = vld [vmem:[%s4 + $0x10] sm:$0xff]
  %v6290 = vld [vmem:[%s4 + $0x18] sm:$0xff]
  %v6291 = vld [vmem:[%s4 + $0x20] sm:$0xff]
  %v6292 = vld [vmem:[%s4 + $0x28] sm:$0xff]
  %v6293 = vld [vmem:[%s4 + $0x30] sm:$0xff]
  %v6294 = vld [vmem:[%s4 + $0x38] sm:$0xff]
  %v6295 = vld [vmem:[%s4 + $0x40] sm:$0xff]
  %v6296 = vld [vmem:[%s4 + $0x48] sm:$0xff]
  %v6297 = vld [vmem:[%s4 + $0x50] sm:$0xff]
  %v6298 = vld [vmem:[%s4 + $0x58] sm:$0xff]
  %v6299 = vld [vmem:[%s4 + $0x60] sm:$0xff]
  %v6300 = vld [vmem:[%s4 + $0x68] sm:$0xff]
  %v6301 = vld [vmem:[%s4 + $0x70] sm:$0xff]
  %v6302 = vld [vmem:[%s4 + $0x78] sm:$0xff]
  %6303 = vmatprep.subr.mxu0 0.0
  %6304 = vmatpush1.msra.mxu0 %v6302
  %6305 = vmatprep.subr.mxu0 0.0
  %6306 = vmatpush1.msra.mxu0 %v6301
  %6307 = vmatprep.subr.mxu0 0.0
  %6308 = vmatpush1.msra.mxu0 %v6300
  %6309 = vmatprep.subr.mxu0 0.0
  %6310 = vmatpush1.msra.mxu0 %v6299
  %6311 = vmatprep.subr.mxu0 0.0
  %6312 = vmatpush1.msra.mxu0 %v6298
  %6313 = vmatprep.subr.mxu0 0.0
  %6314 = vmatpush1.msra.mxu0 %v6297
  %6315 = vmatprep.subr.mxu0 0.0
  %6316 = vmatpush1.msra.mxu0 %v6296
  %6317 = vmatprep.subr.mxu0 0.0
  %6318 = vmatpush1.msra.mxu0 %v6295
  %6319 = vmatprep.subr.mxu0 0.0
  %6320 = vmatpush1.msra.mxu0 %v6294
  %6321 = vmatprep.subr.mxu0 0.0
  %6322 = vmatpush1.msra.mxu0 %v6293
  %6323 = vmatprep.subr.mxu0 0.0
  %6324 = vmatpush1.msra.mxu0 %v6292
  %6325 = vmatprep.subr.mxu0 0.0
  %6326 = vmatpush1.msra.mxu0 %v6291
  %6327 = vmatprep.subr.mxu0 0.0
  %6328 = vmatpush1.msra.mxu0 %v6290
  %6329 = vmatprep.subr.mxu0 0.0
  %6330 = vmatpush1.msra.mxu0 %v6289
  %6331 = vmatprep.subr.mxu0 0.0
  %6332 = vmatpush1.msra.mxu0 %v6288
  %6333 = vmatprep.subr.mxu0 0.0
  %6334 = vmatpush1.msra.mxu0 %v6287
  %6335 = vmatprep.subr.mxu0 0.0
  %6336 = vmatpush2.msra.mxu0 0.0
  %6337 = vmatprep.subr.mxu0 0.0
  %6338 = vmatpush2.msra.mxu0 0.0
  %6339 = vmatprep.subr.mxu0 0.0
  %6340 = vmatpush2.msra.mxu0 0.0
  %6341 = vmatprep.subr.mxu0 0.0
  %6342 = vmatpush2.msra.mxu0 0.0
  %6343 = vmatprep.subr.mxu0 0.0
  %6344 = vmatpush2.msra.mxu0 0.0
  %6345 = vmatprep.subr.mxu0 0.0
  %6346 = vmatpush2.msra.mxu0 0.0
  %6347 = vmatprep.subr.mxu0 0.0
  %6348 = vmatpush2.msra.mxu0 0.0
  %6349 = vmatprep.subr.mxu0 0.0
  %6350 = vmatpush2.msra.mxu0 0.0
  %6351 = vmatprep.subr.mxu0 0.0
  %6352 = vmatpush2.msra.mxu0 0.0
  %6353 = vmatprep.subr.mxu0 0.0
  %6354 = vmatpush2.msra.mxu0 0.0
  %6355 = vmatprep.subr.mxu0 0.0
  %6356 = vmatpush2.msra.mxu0 0.0
  %6357 = vmatprep.subr.mxu0 0.0
  %6358 = vmatpush2.msra.mxu0 0.0
  %6359 = vmatprep.subr.mxu0 0.0
  %6360 = vmatpush2.msra.mxu0 0.0
  %6361 = vmatprep.subr.mxu0 0.0
  %6362 = vmatpush2.msra.mxu0 0.0
  %6363 = vmatprep.subr.mxu0 0.0
  %6364 = vmatpush2.msra.mxu0 0.0
  %6365 = vmatprep.subr.mxu0 0.0
  %6366 = vmatpush2.msra.mxu0 0.0
  %6367 = vmatprep.mubr.f32.mxu0 0.0
  %6368 = vmatmul.mubr.f32.gmra.mxu0 %v6175
  %v6369 = vpop.f32.mrf.mxu0
  %v6370 = vadd.f32 0.0, %v6369
  %v6371 = vpop.f32.mrf.mxu0
  %6372 = vmatprep.mubr.f32.mxu0 0.0
  %6373 = vmatmul.mubr.f32.gmra.mxu0 %v6176
  %v6374 = vpop.f32.mrf.mxu0
  %v6375 = vadd.f32 0.0, %v6374
  %v6376 = vpop.f32.mrf.mxu0
  %6377 = vmatprep.mubr.f32.mxu0 0.0
  %6378 = vmatmul.mubr.f32.gmra.mxu0 %v6177
  %v6379 = vpop.f32.mrf.mxu0
  %v6380 = vadd.f32 0.0, %v6379
  %v6381 = vpop.f32.mrf.mxu0
  %6382 = vmatprep.mubr.f32.mxu0 0.0
  %6383 = vmatmul.mubr.f32.gmra.mxu0 %v6178
  %v6384 = vpop.f32.mrf.mxu0
  %v6385 = vadd.f32 0.0, %v6384
  %v6386 = vpop.f32.mrf.mxu0
  %6387 = vmatprep.mubr.f32.mxu0 0.0
  %6388 = vmatmul.mubr.f32.gmra.mxu0 %v6179
  %v6389 = vpop.f32.mrf.mxu0
  %v6390 = vadd.f32 0.0, %v6389
  %v6391 = vpop.f32.mrf.mxu0
  %6392 = vmatprep.mubr.f32.mxu0 0.0
  %6393 = vmatmul.mubr.f32.gmra.mxu0 %v6180
  %v6394 = vpop.f32.mrf.mxu0
  %v6395 = vadd.f32 0.0, %v6394
  %v6396 = vpop.f32.mrf.mxu0
  %6397 = vmatprep.mubr.f32.mxu0 0.0
  %6398 = vmatmul.mubr.f32.gmra.mxu0 %v6181
  %v6399 = vpop.f32.mrf.mxu0
  %v6400 = vadd.f32 0.0, %v6399
  %v6401 = vpop.f32.mrf.mxu0
  %6402 = vmatprep.mubr.f32.mxu0 0.0
  %6403 = vmatmul.mubr.f32.gmra.mxu0 %v6182
  %v6404 = vpop.f32.mrf.mxu0
  %v6405 = vadd.f32 0.0, %v6404
  %v6406 = vpop.f32.mrf.mxu0
  %6407 = vmatprep.mubr.f32.mxu0 0.0
  %6408 = vmatmul.mubr.f32.gmra.mxu0 %v6183
  %v6409 = vpop.f32.mrf.mxu0
  %v6410 = vadd.f32 0.0, %v6409
  %v6411 = vpop.f32.mrf.mxu0
  %6412 = vmatprep.mubr.f32.mxu0 0.0
  %6413 = vmatmul.mubr.f32.gmra.mxu0 %v6184
  %v6414 = vpop.f32.mrf.mxu0
  %v6415 = vadd.f32 0.0, %v6414
  %v6416 = vpop.f32.mrf.mxu0
  %6417 = vmatprep.mubr.f32.mxu0 0.0
  %6418 = vmatmul.mubr.f32.gmra.mxu0 %v6185
  %v6419 = vpop.f32.mrf.mxu0
  %v6420 = vadd.f32 0.0, %v6419
  %v6421 = vpop.f32.mrf.mxu0
  %6422 = vmatprep.mubr.f32.mxu0 0.0
  %6423 = vmatmul.mubr.f32.gmra.mxu0 %v6186
  %v6424 = vpop.f32.mrf.mxu0
  %v6425 = vadd.f32 0.0, %v6424
  %v6426 = vpop.f32.mrf.mxu0
  %6427 = vmatprep.mubr.f32.mxu0 0.0
  %6428 = vmatmul.mubr.f32.gmra.mxu0 %v6187
  %v6429 = vpop.f32.mrf.mxu0
  %v6430 = vadd.f32 0.0, %v6429
  %v6431 = vpop.f32.mrf.mxu0
  %6432 = vmatprep.mubr.f32.mxu0 0.0
  %6433 = vmatmul.mubr.f32.gmra.mxu0 %v6188
  %v6434 = vpop.f32.mrf.mxu0
  %v6435 = vadd.f32 0.0, %v6434
  %v6436 = vpop.f32.mrf.mxu0
  %6437 = vmatprep.mubr.f32.mxu0 0.0
  %6438 = vmatmul.mubr.f32.gmra.mxu0 %v6189
  %v6439 = vpop.f32.mrf.mxu0
  %v6440 = vadd.f32 0.0, %v6439
  %v6441 = vpop.f32.mrf.mxu0
  %6442 = vmatprep.mubr.f32.mxu0 0.0
  %6443 = vmatmul.mubr.f32.gmra.mxu0 %v6190
  %v6444 = vpop.f32.mrf.mxu0
  %v6445 = vadd.f32 0.0, %v6444
  %v6446 = vpop.f32.mrf.mxu0
  %6447 = vmatprep.mubr.f32.mxu0 0.0
  %6448 = vmatmul.mubr.f32.gmra.mxu0 %v6191
  %v6449 = vpop.f32.mrf.mxu0
  %v6450 = vadd.f32 0.0, %v6449
  %v6451 = vpop.f32.mrf.mxu0
  %6452 = vmatprep.mubr.f32.mxu0 0.0
  %6453 = vmatmul.mubr.f32.gmra.mxu0 %v6192
  %v6454 = vpop.f32.mrf.mxu0
  %v6455 = vadd.f32 0.0, %v6454
  %v6456 = vpop.f32.mrf.mxu0
  %6457 = vmatprep.mubr.f32.mxu0 0.0
  %6458 = vmatmul.mubr.f32.gmra.mxu0 %v6193
  %v6459 = vpop.f32.mrf.mxu0
  %v6460 = vadd.f32 0.0, %v6459
  %v6461 = vpop.f32.mrf.mxu0
  %6462 = vmatprep.mubr.f32.mxu0 0.0
  %6463 = vmatmul.mubr.f32.gmra.mxu0 %v6194
  %v6464 = vpop.f32.mrf.mxu0
  %v6465 = vadd.f32 0.0, %v6464
  %v6466 = vpop.f32.mrf.mxu0
  %6467 = vmatprep.mubr.f32.mxu0 0.0
  %6468 = vmatmul.mubr.f32.gmra.mxu0 %v6195
  %v6469 = vpop.f32.mrf.mxu0
  %v6470 = vadd.f32 0.0, %v6469
  %v6471 = vpop.f32.mrf.mxu0
  %6472 = vmatprep.mubr.f32.mxu0 0.0
  %6473 = vmatmul.mubr.f32.gmra.mxu0 %v6196
  %v6474 = vpop.f32.mrf.mxu0
  %v6475 = vadd.f32 0.0, %v6474
  %v6476 = vpop.f32.mrf.mxu0
  %6477 = vmatprep.mubr.f32.mxu0 0.0
  %6478 = vmatmul.mubr.f32.gmra.mxu0 %v6197
  %v6479 = vpop.f32.mrf.mxu0
  %v6480 = vadd.f32 0.0, %v6479
  %v6481 = vpop.f32.mrf.mxu0
  %6482 = vmatprep.mubr.f32.mxu0 0.0
  %6483 = vmatmul.mubr.f32.gmra.mxu0 %v6198
  %v6484 = vpop.f32.mrf.mxu0
  %v6485 = vadd.f32 0.0, %v6484
  %v6486 = vpop.f32.mrf.mxu0
  %6487 = vmatprep.mubr.f32.mxu0 0.0
  %6488 = vmatmul.mubr.f32.gmra.mxu0 %v6199
  %v6489 = vpop.f32.mrf.mxu0
  %v6490 = vadd.f32 0.0, %v6489
  %v6491 = vpop.f32.mrf.mxu0
  %6492 = vmatprep.mubr.f32.mxu0 0.0
  %6493 = vmatmul.mubr.f32.gmra.mxu0 %v6200
  %v6494 = vpop.f32.mrf.mxu0
  %v6495 = vadd.f32 0.0, %v6494
  %v6496 = vpop.f32.mrf.mxu0
  %6497 = vmatprep.mubr.f32.mxu0 0.0
  %6498 = vmatmul.mubr.f32.gmra.mxu0 %v6201
  %v6499 = vpop.f32.mrf.mxu0
  %v6500 = vadd.f32 0.0, %v6499
  %v6501 = vpop.f32.mrf.mxu0
  %6502 = vmatprep.mubr.f32.mxu0 0.0
  %6503 = vmatmul.mubr.f32.gmra.mxu0 %v6202
  %v6504 = vpop.f32.mrf.mxu0
  %v6505 = vadd.f32 0.0, %v6504
  %v6506 = vpop.f32.mrf.mxu0
  %6507 = vmatprep.mubr.f32.mxu0 0.0
  %6508 = vmatmul.mubr.f32.gmra.mxu0 %v6203
  %v6509 = vpop.f32.mrf.mxu0
  %v6510 = vadd.f32 0.0, %v6509
  %v6511 = vpop.f32.mrf.mxu0
  %6512 = vmatprep.mubr.f32.mxu0 0.0
  %6513 = vmatmul.mubr.f32.gmra.mxu0 %v6204
  %v6514 = vpop.f32.mrf.mxu0
  %v6515 = vadd.f32 0.0, %v6514
  %v6516 = vpop.f32.mrf.mxu0
  %6517 = vmatprep.mubr.f32.mxu0 0.0
  %6518 = vmatmul.mubr.f32.gmra.mxu0 %v6205
  %v6519 = vpop.f32.mrf.mxu0
  %v6520 = vadd.f32 0.0, %v6519
  %v6521 = vpop.f32.mrf.mxu0
  %6522 = vmatprep.mubr.f32.mxu0 0.0
  %6523 = vmatmul.mubr.f32.gmra.mxu0 %v6206
  %v6524 = vpop.f32.mrf.mxu0
  %v6525 = vadd.f32 0.0, %v6524
  %v6526 = vpop.f32.mrf.mxu0
  %6527 = vmatprep.mubr.f32.mxu0 0.0
  %6528 = vmatmul.mubr.f32.gmra.mxu0 %v6207
  %v6529 = vpop.f32.mrf.mxu0
  %v6530 = vadd.f32 0.0, %v6529
  %v6531 = vpop.f32.mrf.mxu0
  %6532 = vmatprep.mubr.f32.mxu0 0.0
  %6533 = vmatmul.mubr.f32.gmra.mxu0 %v6208
  %v6534 = vpop.f32.mrf.mxu0
  %v6535 = vadd.f32 0.0, %v6534
  %v6536 = vpop.f32.mrf.mxu0
  %6537 = vmatprep.mubr.f32.mxu0 0.0
  %6538 = vmatmul.mubr.f32.gmra.mxu0 %v6209
  %v6539 = vpop.f32.mrf.mxu0
  %v6540 = vadd.f32 0.0, %v6539
  %v6541 = vpop.f32.mrf.mxu0
  %6542 = vmatprep.mubr.f32.mxu0 0.0
  %6543 = vmatmul.mubr.f32.gmra.mxu0 %v6210
  %v6544 = vpop.f32.mrf.mxu0
  %v6545 = vadd.f32 0.0, %v6544
  %v6546 = vpop.f32.mrf.mxu0
  %6547 = vmatprep.mubr.f32.mxu0 0.0
  %6548 = vmatmul.mubr.f32.gmra.mxu0 %v6211
  %v6549 = vpop.f32.mrf.mxu0
  %v6550 = vadd.f32 0.0, %v6549
  %v6551 = vpop.f32.mrf.mxu0
  %6552 = vmatprep.mubr.f32.mxu0 0.0
  %6553 = vmatmul.mubr.f32.gmra.mxu0 %v6212
  %v6554 = vpop.f32.mrf.mxu0
  %v6555 = vadd.f32 0.0, %v6554
  %v6556 = vpop.f32.mrf.mxu0
  %6557 = vmatprep.mubr.f32.mxu0 0.0
  %6558 = vmatmul.mubr.f32.gmra.mxu0 %v6213
  %v6559 = vpop.f32.mrf.mxu0
  %v6560 = vadd.f32 0.0, %v6559
  %v6561 = vpop.f32.mrf.mxu0
  %6562 = vmatprep.mubr.f32.mxu0 0.0
  %6563 = vmatmul.mubr.f32.gmra.mxu0 %v6214
  %v6564 = vpop.f32.mrf.mxu0
  %v6565 = vadd.f32 0.0, %v6564
  %v6566 = vpop.f32.mrf.mxu0
  %6567 = vmatprep.mubr.f32.mxu0 0.0
  %6568 = vmatmul.mubr.f32.gmra.mxu0 %v6215
  %v6569 = vpop.f32.mrf.mxu0
  %v6570 = vadd.f32 0.0, %v6569
  %v6571 = vpop.f32.mrf.mxu0
  %6572 = vmatprep.mubr.f32.mxu0 0.0
  %6573 = vmatmul.mubr.f32.gmra.mxu0 %v6216
  %v6574 = vpop.f32.mrf.mxu0
  %v6575 = vadd.f32 0.0, %v6574
  %v6576 = vpop.f32.mrf.mxu0
  %6577 = vmatprep.mubr.f32.mxu0 0.0
  %6578 = vmatmul.mubr.f32.gmra.mxu0 %v6217
  %v6579 = vpop.f32.mrf.mxu0
  %v6580 = vadd.f32 0.0, %v6579
  %v6581 = vpop.f32.mrf.mxu0
  %6582 = vmatprep.mubr.f32.mxu0 0.0
  %6583 = vmatmul.mubr.f32.gmra.mxu0 %v6218
  %v6584 = vpop.f32.mrf.mxu0
  %v6585 = vadd.f32 0.0, %v6584
  %v6586 = vpop.f32.mrf.mxu0
  %6587 = vmatprep.mubr.f32.mxu0 0.0
  %6588 = vmatmul.mubr.f32.gmra.mxu0 %v6219
  %v6589 = vpop.f32.mrf.mxu0
  %v6590 = vadd.f32 0.0, %v6589
  %v6591 = vpop.f32.mrf.mxu0
  %6592 = vmatprep.mubr.f32.mxu0 0.0
  %6593 = vmatmul.mubr.f32.gmra.mxu0 %v6220
  %v6594 = vpop.f32.mrf.mxu0
  %v6595 = vadd.f32 0.0, %v6594
  %v6596 = vpop.f32.mrf.mxu0
  %6597 = vmatprep.mubr.f32.mxu0 0.0
  %6598 = vmatmul.mubr.f32.gmra.mxu0 %v6221
  %v6599 = vpop.f32.mrf.mxu0
  %v6600 = vadd.f32 0.0, %v6599
  %v6601 = vpop.f32.mrf.mxu0
  %6602 = vmatprep.mubr.f32.mxu0 0.0
  %6603 = vmatmul.mubr.f32.gmra.mxu0 %v6222
  %v6604 = vpop.f32.mrf.mxu0
  %v6605 = vadd.f32 0.0, %v6604
  %v6606 = vpop.f32.mrf.mxu0
  %6607 = vmatprep.mubr.f32.mxu0 0.0
  %6608 = vmatmul.mubr.f32.gmra.mxu0 %v6223
  %v6609 = vpop.f32.mrf.mxu0
  %v6610 = vadd.f32 0.0, %v6609
  %v6611 = vpop.f32.mrf.mxu0
  %6612 = vmatprep.mubr.f32.mxu0 0.0
  %6613 = vmatmul.mubr.f32.gmra.mxu0 %v6224
  %v6614 = vpop.f32.mrf.mxu0
  %v6615 = vadd.f32 0.0, %v6614
  %v6616 = vpop.f32.mrf.mxu0
  %6617 = vmatprep.mubr.f32.mxu0 0.0
  %6618 = vmatmul.mubr.f32.gmra.mxu0 %v6225
  %v6619 = vpop.f32.mrf.mxu0
  %v6620 = vadd.f32 0.0, %v6619
  %v6621 = vpop.f32.mrf.mxu0
  %6622 = vmatprep.mubr.f32.mxu0 0.0
  %6623 = vmatmul.mubr.f32.gmra.mxu0 %v6226
  %v6624 = vpop.f32.mrf.mxu0
  %v6625 = vadd.f32 0.0, %v6624
  %v6626 = vpop.f32.mrf.mxu0
  %6627 = vmatprep.mubr.f32.mxu0 0.0
  %6628 = vmatmul.mubr.f32.gmra.mxu0 %v6227
  %v6629 = vpop.f32.mrf.mxu0
  %v6630 = vadd.f32 0.0, %v6629
  %v6631 = vpop.f32.mrf.mxu0
  %6632 = vmatprep.mubr.f32.mxu0 0.0
  %6633 = vmatmul.mubr.f32.gmra.mxu0 %v6228
  %v6634 = vpop.f32.mrf.mxu0
  %v6635 = vadd.f32 0.0, %v6634
  %v6636 = vpop.f32.mrf.mxu0
  %6637 = vmatprep.mubr.f32.mxu0 0.0
  %6638 = vmatmul.mubr.f32.gmra.mxu0 %v6229
  %v6639 = vpop.f32.mrf.mxu0
  %v6640 = vadd.f32 0.0, %v6639
  %v6641 = vpop.f32.mrf.mxu0
  %6642 = vmatprep.mubr.f32.mxu0 0.0
  %6643 = vmatmul.mubr.f32.gmra.mxu0 %v6230
  %v6644 = vpop.f32.mrf.mxu0
  %v6645 = vadd.f32 0.0, %v6644
  %v6646 = vpop.f32.mrf.mxu0
  %6647 = vmatprep.mubr.f32.mxu0 0.0
  %6648 = vmatmul.mubr.f32.gmra.mxu0 %v6231
  %v6649 = vpop.f32.mrf.mxu0
  %v6650 = vadd.f32 0.0, %v6649
  %v6651 = vpop.f32.mrf.mxu0
  %6652 = vmatprep.mubr.f32.mxu0 0.0
  %6653 = vmatmul.mubr.f32.gmra.mxu0 %v6232
  %v6654 = vpop.f32.mrf.mxu0
  %v6655 = vadd.f32 0.0, %v6654
  %v6656 = vpop.f32.mrf.mxu0
  %6657 = vmatprep.mubr.f32.mxu0 0.0
  %6658 = vmatmul.mubr.f32.gmra.mxu0 %v6233
  %v6659 = vpop.f32.mrf.mxu0
  %v6660 = vadd.f32 0.0, %v6659
  %v6661 = vpop.f32.mrf.mxu0
  %6662 = vmatprep.mubr.f32.mxu0 0.0
  %6663 = vmatmul.mubr.f32.gmra.mxu0 %v6234
  %v6664 = vpop.f32.mrf.mxu0
  %v6665 = vadd.f32 0.0, %v6664
  %v6666 = vpop.f32.mrf.mxu0
  %6667 = vmatprep.mubr.f32.mxu0 0.0
  %6668 = vmatmul.mubr.f32.gmra.mxu0 %v6235
  %v6669 = vpop.f32.mrf.mxu0
  %v6670 = vadd.f32 0.0, %v6669
  %v6671 = vpop.f32.mrf.mxu0
  %6672 = vmatprep.mubr.f32.mxu0 0.0
  %6673 = vmatmul.mubr.f32.gmra.mxu0 %v6236
  %v6674 = vpop.f32.mrf.mxu0
  %v6675 = vadd.f32 0.0, %v6674
  %v6676 = vpop.f32.mrf.mxu0
  %6677 = vmatprep.mubr.f32.mxu0 0.0
  %6678 = vmatmul.mubr.f32.gmra.mxu0 %v6237
  %v6679 = vpop.f32.mrf.mxu0
  %v6680 = vadd.f32 0.0, %v6679
  %v6681 = vpop.f32.mrf.mxu0
  %6682 = vmatprep.mubr.f32.mxu0 0.0
  %6683 = vmatmul.mubr.f32.gmra.mxu0 %v6238
  %v6684 = vpop.f32.mrf.mxu0
  %v6685 = vadd.f32 0.0, %v6684
  %v6686 = vpop.f32.mrf.mxu0
  %6687 = vmatprep.mubr.f32.mxu0 0.0
  %6688 = vmatmul.mubr.f32.gmra.mxu0 %v6239
  %v6689 = vpop.f32.mrf.mxu0
  %v6690 = vadd.f32 0.0, %v6689
  %v6691 = vpop.f32.mrf.mxu0
  %6692 = vmatprep.mubr.f32.mxu0 0.0
  %6693 = vmatmul.mubr.f32.gmra.mxu0 %v6240
  %v6694 = vpop.f32.mrf.mxu0
  %v6695 = vadd.f32 0.0, %v6694
  %v6696 = vpop.f32.mrf.mxu0
  %6697 = vmatprep.mubr.f32.mxu0 0.0
  %6698 = vmatmul.mubr.f32.gmra.mxu0 %v6241
  %v6699 = vpop.f32.mrf.mxu0
  %v6700 = vadd.f32 0.0, %v6699
  %v6701 = vpop.f32.mrf.mxu0
  %6702 = vmatprep.mubr.f32.mxu0 0.0
  %6703 = vmatmul.mubr.f32.gmra.mxu0 %v6242
  %v6704 = vpop.f32.mrf.mxu0
  %v6705 = vadd.f32 0.0, %v6704
  %v6706 = vpop.f32.mrf.mxu0
  %6707 = vmatprep.mubr.f32.mxu0 0.0
  %6708 = vmatmul.mubr.f32.gmra.mxu0 %v6243
  %v6709 = vpop.f32.mrf.mxu0
  %v6710 = vadd.f32 0.0, %v6709
  %v6711 = vpop.f32.mrf.mxu0
  %6712 = vmatprep.mubr.f32.mxu0 0.0
  %6713 = vmatmul.mubr.f32.gmra.mxu0 %v6244
  %v6714 = vpop.f32.mrf.mxu0
  %v6715 = vadd.f32 0.0, %v6714
  %v6716 = vpop.f32.mrf.mxu0
  %6717 = vmatprep.mubr.f32.mxu0 0.0
  %6718 = vmatmul.mubr.f32.gmra.mxu0 %v6245
  %v6719 = vpop.f32.mrf.mxu0
  %v6720 = vadd.f32 0.0, %v6719
  %v6721 = vpop.f32.mrf.mxu0
  %6722 = vmatprep.mubr.f32.mxu0 0.0
  %6723 = vmatmul.mubr.f32.gmra.mxu0 %v6246
  %v6724 = vpop.f32.mrf.mxu0
  %v6725 = vadd.f32 0.0, %v6724
  %v6726 = vpop.f32.mrf.mxu0
  %6727 = vmatprep.mubr.f32.mxu0 0.0
  %6728 = vmatmul.mubr.f32.gmra.mxu0 %v6247
  %v6729 = vpop.f32.mrf.mxu0
  %v6730 = vadd.f32 0.0, %v6729
  %v6731 = vpop.f32.mrf.mxu0
  %6732 = vmatprep.mubr.f32.mxu0 0.0
  %6733 = vmatmul.mubr.f32.gmra.mxu0 %v6248
  %v6734 = vpop.f32.mrf.mxu0
  %v6735 = vadd.f32 0.0, %v6734
  %v6736 = vpop.f32.mrf.mxu0
  %6737 = vmatprep.mubr.f32.mxu0 0.0
  %6738 = vmatmul.mubr.f32.gmra.mxu0 %v6249
  %v6739 = vpop.f32.mrf.mxu0
  %v6740 = vadd.f32 0.0, %v6739
  %v6741 = vpop.f32.mrf.mxu0
  %6742 = vmatprep.mubr.f32.mxu0 0.0
  %6743 = vmatmul.mubr.f32.gmra.mxu0 %v6250
  %v6744 = vpop.f32.mrf.mxu0
  %v6745 = vadd.f32 0.0, %v6744
  %v6746 = vpop.f32.mrf.mxu0
  %6747 = vmatprep.mubr.f32.mxu0 0.0
  %6748 = vmatmul.mubr.f32.gmra.mxu0 %v6251
  %v6749 = vpop.f32.mrf.mxu0
  %v6750 = vadd.f32 0.0, %v6749
  %v6751 = vpop.f32.mrf.mxu0
  %6752 = vmatprep.mubr.f32.mxu0 0.0
  %6753 = vmatmul.mubr.f32.gmra.mxu0 %v6252
  %v6754 = vpop.f32.mrf.mxu0
  %v6755 = vadd.f32 0.0, %v6754
  %v6756 = vpop.f32.mrf.mxu0
  %6757 = vmatprep.mubr.f32.mxu0 0.0
  %6758 = vmatmul.mubr.f32.gmra.mxu0 %v6253
  %v6759 = vpop.f32.mrf.mxu0
  %v6760 = vadd.f32 0.0, %v6759
  %v6761 = vpop.f32.mrf.mxu0
  %6762 = vmatprep.mubr.f32.mxu0 0.0
  %6763 = vmatmul.mubr.f32.gmra.mxu0 %v6254
  %v6764 = vpop.f32.mrf.mxu0
  %v6765 = vadd.f32 0.0, %v6764
  %v6766 = vpop.f32.mrf.mxu0
  %6767 = vmatprep.mubr.f32.mxu0 0.0
  %6768 = vmatmul.mubr.f32.gmra.mxu0 %v6255
  %v6769 = vpop.f32.mrf.mxu0
  %v6770 = vadd.f32 0.0, %v6769
  %v6771 = vpop.f32.mrf.mxu0
  %6772 = vmatprep.mubr.f32.mxu0 0.0
  %6773 = vmatmul.mubr.f32.gmra.mxu0 %v6256
  %v6774 = vpop.f32.mrf.mxu0
  %v6775 = vadd.f32 0.0, %v6774
  %v6776 = vpop.f32.mrf.mxu0
  %6777 = vmatprep.mubr.f32.mxu0 0.0
  %6778 = vmatmul.mubr.f32.gmra.mxu0 %v6257
  %v6779 = vpop.f32.mrf.mxu0
  %v6780 = vadd.f32 0.0, %v6779
  %v6781 = vpop.f32.mrf.mxu0
  %6782 = vmatprep.mubr.f32.mxu0 0.0
  %6783 = vmatmul.mubr.f32.gmra.mxu0 %v6258
  %v6784 = vpop.f32.mrf.mxu0
  %v6785 = vadd.f32 0.0, %v6784
  %v6786 = vpop.f32.mrf.mxu0
  %6787 = vmatprep.mubr.f32.mxu0 0.0
  %6788 = vmatmul.mubr.f32.gmra.mxu0 %v6259
  %v6789 = vpop.f32.mrf.mxu0
  %v6790 = vadd.f32 0.0, %v6789
  %v6791 = vpop.f32.mrf.mxu0
  %6792 = vmatprep.mubr.f32.mxu0 0.0
  %6793 = vmatmul.mubr.f32.gmra.mxu0 %v6260
  %v6794 = vpop.f32.mrf.mxu0
  %v6795 = vadd.f32 0.0, %v6794
  %v6796 = vpop.f32.mrf.mxu0
  %6797 = vmatprep.mubr.f32.mxu0 0.0
  %6798 = vmatmul.mubr.f32.gmra.mxu0 %v6261
  %v6799 = vpop.f32.mrf.mxu0
  %v6800 = vadd.f32 0.0, %v6799
  %v6801 = vpop.f32.mrf.mxu0
  %6802 = vmatprep.mubr.f32.mxu0 0.0
  %6803 = vmatmul.mubr.f32.gmra.mxu0 %v6262
  %v6804 = vpop.f32.mrf.mxu0
  %v6805 = vadd.f32 0.0, %v6804
  %v6806 = vpop.f32.mrf.mxu0
  %6807 = vmatprep.mubr.f32.mxu0 0.0
  %6808 = vmatmul.mubr.f32.gmra.mxu0 %v6263
  %v6809 = vpop.f32.mrf.mxu0
  %v6810 = vadd.f32 0.0, %v6809
  %v6811 = vpop.f32.mrf.mxu0
  %6812 = vmatprep.mubr.f32.mxu0 0.0
  %6813 = vmatmul.mubr.f32.gmra.mxu0 %v6264
  %v6814 = vpop.f32.mrf.mxu0
  %v6815 = vadd.f32 0.0, %v6814
  %v6816 = vpop.f32.mrf.mxu0
  %6817 = vmatprep.mubr.f32.mxu0 0.0
  %6818 = vmatmul.mubr.f32.gmra.mxu0 %v6265
  %v6819 = vpop.f32.mrf.mxu0
  %v6820 = vadd.f32 0.0, %v6819
  %v6821 = vpop.f32.mrf.mxu0
  %6822 = vmatprep.mubr.f32.mxu0 0.0
  %6823 = vmatmul.mubr.f32.gmra.mxu0 %v6266
  %v6824 = vpop.f32.mrf.mxu0
  %v6825 = vadd.f32 0.0, %v6824
  %v6826 = vpop.f32.mrf.mxu0
  %6827 = vmatprep.mubr.f32.mxu0 0.0
  %6828 = vmatmul.mubr.f32.gmra.mxu0 %v6267
  %v6829 = vpop.f32.mrf.mxu0
  %v6830 = vadd.f32 0.0, %v6829
  %v6831 = vpop.f32.mrf.mxu0
  %6832 = vmatprep.mubr.f32.mxu0 0.0
  %6833 = vmatmul.mubr.f32.gmra.mxu0 %v6268
  %v6834 = vpop.f32.mrf.mxu0
  %v6835 = vadd.f32 0.0, %v6834
  %v6836 = vpop.f32.mrf.mxu0
  %6837 = vmatprep.mubr.f32.mxu0 0.0
  %6838 = vmatmul.mubr.f32.gmra.mxu0 %v6269
  %v6839 = vpop.f32.mrf.mxu0
  %v6840 = vadd.f32 0.0, %v6839
  %v6841 = vpop.f32.mrf.mxu0
  %6842 = vmatprep.mubr.f32.mxu0 0.0
  %6843 = vmatmul.mubr.f32.gmra.mxu0 %v6270
  %v6844 = vpop.f32.mrf.mxu0
  %v6845 = vadd.f32 0.0, %v6844
  %v6846 = vpop.f32.mrf.mxu0
  %6847 = vmatprep.mubr.f32.mxu0 0.0
  %6848 = vmatmul.mubr.f32.gmra.mxu0 %v6271
  %v6849 = vpop.f32.mrf.mxu0
  %v6850 = vadd.f32 0.0, %v6849
  %v6851 = vpop.f32.mrf.mxu0
  %6852 = vmatprep.mubr.f32.mxu0 0.0
  %6853 = vmatmul.mubr.f32.gmra.mxu0 %v6272
  %v6854 = vpop.f32.mrf.mxu0
  %v6855 = vadd.f32 0.0, %v6854
  %v6856 = vpop.f32.mrf.mxu0
  %6857 = vmatprep.mubr.f32.mxu0 0.0
  %6858 = vmatmul.mubr.f32.gmra.mxu0 %v6273
  %v6859 = vpop.f32.mrf.mxu0
  %v6860 = vadd.f32 0.0, %v6859
  %v6861 = vpop.f32.mrf.mxu0
  %6862 = vmatprep.mubr.f32.mxu0 0.0
  %6863 = vmatmul.mubr.f32.gmra.mxu0 %v6274
  %v6864 = vpop.f32.mrf.mxu0
  %v6865 = vadd.f32 0.0, %v6864
  %v6866 = vpop.f32.mrf.mxu0
  %6867 = vmatprep.mubr.f32.mxu0 0.0
  %6868 = vmatmul.mubr.f32.gmra.mxu0 %v6275
  %v6869 = vpop.f32.mrf.mxu0
  %v6870 = vadd.f32 0.0, %v6869
  %v6871 = vpop.f32.mrf.mxu0
  %6872 = vmatprep.mubr.f32.mxu0 0.0
  %6873 = vmatmul.mubr.f32.gmra.mxu0 %v6276
  %v6874 = vpop.f32.mrf.mxu0
  %v6875 = vadd.f32 0.0, %v6874
  %v6876 = vpop.f32.mrf.mxu0
  %6877 = vmatprep.mubr.f32.mxu0 0.0
  %6878 = vmatmul.mubr.f32.gmra.mxu0 %v6277
  %v6879 = vpop.f32.mrf.mxu0
  %v6880 = vadd.f32 0.0, %v6879
  %v6881 = vpop.f32.mrf.mxu0
  %6882 = vmatprep.mubr.f32.mxu0 0.0
  %6883 = vmatmul.mubr.f32.gmra.mxu0 %v6278
  %v6884 = vpop.f32.mrf.mxu0
  %v6885 = vadd.f32 0.0, %v6884
  %v6886 = vpop.f32.mrf.mxu0
  %6887 = vmatprep.mubr.f32.mxu0 0.0
  %6888 = vmatmul.mubr.f32.gmra.mxu0 %v6279
  %v6889 = vpop.f32.mrf.mxu0
  %v6890 = vadd.f32 0.0, %v6889
  %v6891 = vpop.f32.mrf.mxu0
  %6892 = vmatprep.mubr.f32.mxu0 0.0
  %6893 = vmatmul.mubr.f32.gmra.mxu0 %v6280
  %v6894 = vpop.f32.mrf.mxu0
  %v6895 = vadd.f32 0.0, %v6894
  %v6896 = vpop.f32.mrf.mxu0
  %6897 = vmatprep.mubr.f32.mxu0 0.0
  %6898 = vmatmul.mubr.f32.gmra.mxu0 %v6281
  %v6899 = vpop.f32.mrf.mxu0
  %v6900 = vadd.f32 0.0, %v6899
  %v6901 = vpop.f32.mrf.mxu0
  %6902 = vmatprep.mubr.f32.mxu0 0.0
  %6903 = vmatmul.mubr.f32.gmra.mxu0 %v6282
  %v6904 = vpop.f32.mrf.mxu0
  %v6905 = vadd.f32 0.0, %v6904
  %v6906 = vpop.f32.mrf.mxu0
  %6907 = vmatprep.mubr.f32.mxu0 0.0
  %6908 = vmatmul.mubr.f32.gmra.mxu0 %v6283
  %v6909 = vpop.f32.mrf.mxu0
  %v6910 = vadd.f32 0.0, %v6909
  %v6911 = vpop.f32.mrf.mxu0
  %6912 = vmatprep.mubr.f32.mxu0 0.0
  %6913 = vmatmul.mubr.f32.gmra.mxu0 %v6284
  %v6914 = vpop.f32.mrf.mxu0
  %v6915 = vadd.f32 0.0, %v6914
  %v6916 = vpop.f32.mrf.mxu0
  %6917 = vmatprep.mubr.f32.mxu0 0.0
  %6918 = vmatmul.mubr.f32.gmra.mxu0 %v6285
  %v6919 = vpop.f32.mrf.mxu0
  %v6920 = vadd.f32 0.0, %v6919
  %v6921 = vpop.f32.mrf.mxu0
  %6922 = vmatprep.mubr.f32.mxu0 0.0
  %6923 = vmatmul.mubr.f32.gmra.mxu0 %v6286
  %v6924 = vpop.f32.mrf.mxu0
  %v6925 = vadd.f32 0.0, %v6924
  %v6926 = vpop.f32.mrf.mxu0
  %6927 = vdwg.mxu0
  %6928 = vst [vmem:[%s5] sm:$0xff] %v6370
  %6929 = vst [vmem:[%s5 + $0x8] sm:$0xff] %v6375
  %6930 = vst [vmem:[%s5 + $0x10] sm:$0xff] %v6380
  %6931 = vst [vmem:[%s5 + $0x18] sm:$0xff] %v6385
  %6932 = vst [vmem:[%s5 + $0x20] sm:$0xff] %v6390
  %6933 = vst [vmem:[%s5 + $0x28] sm:$0xff] %v6395
  %6934 = vst [vmem:[%s5 + $0x30] sm:$0xff] %v6400
  %6935 = vst [vmem:[%s5 + $0x38] sm:$0xff] %v6405
  %6936 = vst [vmem:[%s5 + $0x40] sm:$0xff] %v6410
  %6937 = vst [vmem:[%s5 + $0x48] sm:$0xff] %v6415
  %6938 = vst [vmem:[%s5 + $0x50] sm:$0xff] %v6420
  %6939 = vst [vmem:[%s5 + $0x58] sm:$0xff] %v6425
  %6940 = vst [vmem:[%s5 + $0x60] sm:$0xff] %v6430
  %6941 = vst [vmem:[%s5 + $0x68] sm:$0xff] %v6435
  %6942 = vst [vmem:[%s5 + $0x70] sm:$0xff] %v6440
  %6943 = vst [vmem:[%s5 + $0x78] sm:$0xff] %v6445
  %6944 = vst [vmem:[%s5 + $0x80] sm:$0xff] %v6450
  %6945 = vst [vmem:[%s5 + $0x88] sm:$0xff] %v6455
  %6946 = vst [vmem:[%s5 + $0x90] sm:$0xff] %v6460
  %6947 = vst [vmem:[%s5 + $0x98] sm:$0xff] %v6465
  %6948 = vst [vmem:[%s5 + $0xa0] sm:$0xff] %v6470
  %6949 = vst [vmem:[%s5 + $0xa8] sm:$0xff] %v6475
  %6950 = vst [vmem:[%s5 + $0xb0] sm:$0xff] %v6480
  %6951 = vst [vmem:[%s5 + $0xb8] sm:$0xff] %v6485
  %6952 = vst [vmem:[%s5 + $0xc0] sm:$0xff] %v6490
  %6953 = vst [vmem:[%s5 + $0xc8] sm:$0xff] %v6495
  %6954 = vst [vmem:[%s5 + $0xd0] sm:$0xff] %v6500
  %6955 = vst [vmem:[%s5 + $0xd8] sm:$0xff] %v6505
  %6956 = vst [vmem:[%s5 + $0xe0] sm:$0xff] %v6510
  %6957 = vst [vmem:[%s5 + $0xe8] sm:$0xff] %v6515
  %6958 = vst [vmem:[%s5 + $0xf0] sm:$0xff] %v6520
  %6959 = vst [vmem:[%s5 + $0xf8] sm:$0xff] %v6525
  %6960 = vst [vmem:[%s5 + $0x100] sm:$0xff] %v6530
  %6961 = vst [vmem:[%s5 + $0x108] sm:$0xff] %v6535
  %6962 = vst [vmem:[%s5 + $0x110] sm:$0xff] %v6540
  %6963 = vst [vmem:[%s5 + $0x118] sm:$0xff] %v6545
  %6964 = vst [vmem:[%s5 + $0x120] sm:$0xff] %v6550
  %6965 = vst [vmem:[%s5 + $0x128] sm:$0xff] %v6555
  %6966 = vst [vmem:[%s5 + $0x130] sm:$0xff] %v6560
  %6967 = vst [vmem:[%s5 + $0x138] sm:$0xff] %v6565
  %6968 = vst [vmem:[%s5 + $0x140] sm:$0xff] %v6570
  %6969 = vst [vmem:[%s5 + $0x148] sm:$0xff] %v6575
  %6970 = vst [vmem:[%s5 + $0x150] sm:$0xff] %v6580
  %6971 = vst [vmem:[%s5 + $0x158] sm:$0xff] %v6585
  %6972 = vst [vmem:[%s5 + $0x160] sm:$0xff] %v6590
  %6973 = vst [vmem:[%s5 + $0x168] sm:$0xff] %v6595
  %6974 = vst [vmem:[%s5 + $0x170] sm:$0xff] %v6600
  %6975 = vst [vmem:[%s5 + $0x178] sm:$0xff] %v6605
  %6976 = vst [vmem:[%s5 + $0x180] sm:$0xff] %v6610
  %6977 = vst [vmem:[%s5 + $0x188] sm:$0xff] %v6615
  %6978 = vst [vmem:[%s5 + $0x190] sm:$0xff] %v6620
  %6979 = vst [vmem:[%s5 + $0x198] sm:$0xff] %v6625
  %6980 = vst [vmem:[%s5 + $0x1a0] sm:$0xff] %v6630
  %6981 = vst [vmem:[%s5 + $0x1a8] sm:$0xff] %v6635
  %6982 = vst [vmem:[%s5 + $0x1b0] sm:$0xff] %v6640
  %6983 = vst [vmem:[%s5 + $0x1b8] sm:$0xff] %v6645
  %6984 = vst [vmem:[%s5 + $0x1c0] sm:$0xff] %v6650
  %6985 = vst [vmem:[%s5 + $0x1c8] sm:$0xff] %v6655
  %6986 = vst [vmem:[%s5 + $0x1d0] sm:$0xff] %v6660
  %6987 = vst [vmem:[%s5 + $0x1d8] sm:$0xff] %v6665
  %6988 = vst [vmem:[%s5 + $0x1e0] sm:$0xff] %v6670
  %6989 = vst [vmem:[%s5 + $0x1e8] sm:$0xff] %v6675
  %6990 = vst [vmem:[%s5 + $0x1f0] sm:$0xff] %v6680
  %6991 = vst [vmem:[%s5 + $0x1f8] sm:$0xff] %v6685
  %6992 = vst [vmem:[%s5 + $0x200] sm:$0xff] %v6690
  %6993 = vst [vmem:[%s5 + $0x208] sm:$0xff] %v6695
  %6994 = vst [vmem:[%s5 + $0x210] sm:$0xff] %v6700
  %6995 = vst [vmem:[%s5 + $0x218] sm:$0xff] %v6705
  %6996 = vst [vmem:[%s5 + $0x220] sm:$0xff] %v6710
  %6997 = vst [vmem:[%s5 + $0x228] sm:$0xff] %v6715
  %6998 = vst [vmem:[%s5 + $0x230] sm:$0xff] %v6720
  %6999 = vst [vmem:[%s5 + $0x238] sm:$0xff] %v6725
  %7000 = vst [vmem:[%s5 + $0x240] sm:$0xff] %v6730
  %7001 = vst [vmem:[%s5 + $0x248] sm:$0xff] %v6735
  %7002 = vst [vmem:[%s5 + $0x250] sm:$0xff] %v6740
  %7003 = vst [vmem:[%s5 + $0x258] sm:$0xff] %v6745
  %7004 = vst [vmem:[%s5 + $0x260] sm:$0xff] %v6750
  %7005 = vst [vmem:[%s5 + $0x268] sm:$0xff] %v6755
  %7006 = vst [vmem:[%s5 + $0x270] sm:$0xff] %v6760
  %7007 = vst [vmem:[%s5 + $0x278] sm:$0xff] %v6765
  %7008 = vst [vmem:[%s5 + $0x280] sm:$0xff] %v6770
  %7009 = vst [vmem:[%s5 + $0x288] sm:$0xff] %v6775
  %7010 = vst [vmem:[%s5 + $0x290] sm:$0xff] %v6780
  %7011 = vst [vmem:[%s5 + $0x298] sm:$0xff] %v6785
  %7012 = vst [vmem:[%s5 + $0x2a0] sm:$0xff] %v6790
  %7013 = vst [vmem:[%s5 + $0x2a8] sm:$0xff] %v6795
  %7014 = vst [vmem:[%s5 + $0x2b0] sm:$0xff] %v6800
  %7015 = vst [vmem:[%s5 + $0x2b8] sm:$0xff] %v6805
  %7016 = vst [vmem:[%s5 + $0x2c0] sm:$0xff] %v6810
  %7017 = vst [vmem:[%s5 + $0x2c8] sm:$0xff] %v6815
  %7018 = vst [vmem:[%s5 + $0x2d0] sm:$0xff] %v6820
  %7019 = vst [vmem:[%s5 + $0x2d8] sm:$0xff] %v6825
  %7020 = vst [vmem:[%s5 + $0x2e0] sm:$0xff] %v6830
  %7021 = vst [vmem:[%s5 + $0x2e8] sm:$0xff] %v6835
  %7022 = vst [vmem:[%s5 + $0x2f0] sm:$0xff] %v6840
  %7023 = vst [vmem:[%s5 + $0x2f8] sm:$0xff] %v6845
  %7024 = vst [vmem:[%s5 + $0x300] sm:$0xff] %v6850
  %7025 = vst [vmem:[%s5 + $0x308] sm:$0xff] %v6855
  %7026 = vst [vmem:[%s5 + $0x310] sm:$0xff] %v6860
  %7027 = vst [vmem:[%s5 + $0x318] sm:$0xff] %v6865
  %7028 = vst [vmem:[%s5 + $0x320] sm:$0xff] %v6870
  %7029 = vst [vmem:[%s5 + $0x328] sm:$0xff] %v6875
  %7030 = vst [vmem:[%s5 + $0x330] sm:$0xff] %v6880
  %7031 = vst [vmem:[%s5 + $0x338] sm:$0xff] %v6885
  %7032 = vst [vmem:[%s5 + $0x340] sm:$0xff] %v6890
  %7033 = vst [vmem:[%s5 + $0x348] sm:$0xff] %v6895
  %7034 = vst [vmem:[%s5 + $0x350] sm:$0xff] %v6900
  %7035 = vst [vmem:[%s5 + $0x358] sm:$0xff] %v6905
  %7036 = vst [vmem:[%s5 + $0x360] sm:$0xff] %v6910
  %7037 = vst [vmem:[%s5 + $0x368] sm:$0xff] %v6915
  %7038 = vst [vmem:[%s5 + $0x370] sm:$0xff] %v6920
  %7039 = vst [vmem:[%s5 + $0x378] sm:$0xff] %v6925
  // Predicated region
  $region22: #{forward.1} parent=0 // pred_check
    _
  $region23: #{forward.1} parent=0 // pred_check_branch
    %7041 = sbr.rel (0) target = $region25
  $region24: #{forward.1} parent=0 // pred_region
    _
  $region25: #{forward.1} parent=0 // pred_fallthru
    _
  // Predicated region
  $region26: #{forward.1} parent=0 // pred_check
    _
  $region27: #{forward.1} parent=0 // pred_check_branch
    %7043 = sbr.rel (0) target = $region29
  $region28: #{forward.1} parent=0 // pred_region
    _
  $region29: #{forward.1} parent=0 // pred_fallthru
    _

</llo_original>
